<compile_context>
chip_gen: v7x
topology: tpu7x:2x2x1
jax: 0.10.0
libtpu: 0.0.40
codegen_flags: <defaults>
</compile_context>

<pallas_src>
import jax
import jax.numpy as jnp
import numpy as np
from jax.experimental import pallas as pl
from jax.experimental.pallas import tpu as pltpu

K = 5                      # conv kernel size
DILS = (1, 2, 4, 8)        # dilations of conv1..conv4
HALF = (K - 1) // 2        # 2
PADOFF = HALF * max(DILS)  # 16 : halo of the shared activation buffer
XHALO = 16                 # halo of the broadcast-input buffer (>= HALF, vreg aligned)


def temporal_encoder_kernel(x_ref, e_ref, w1_ref, b1_ref, w2_ref, b2_ref,
                            w3_ref, b3_ref, w4_ref, b4_ref,
                            out_ref, xb_ref, pad_ref, im_ref):
    T = x_ref.shape[1]
    L = pad_ref.shape[1]                       # G * hid  (128 for hid=32)

    # (Re)zero only the halo rows each grid step; valid rows are overwritten below.
    pad_ref[pl.ds(0, PADOFF), :] = jnp.zeros((PADOFF, L), jnp.bfloat16)
    pad_ref[pl.ds(PADOFF + T, PADOFF), :] = jnp.zeros((PADOFF, L), jnp.bfloat16)
    xb_ref[pl.ds(0, XHALO), :] = jnp.zeros((XHALO, L), jnp.bfloat16)
    xb_ref[pl.ds(XHALO + T, XHALO), :] = jnp.zeros((XHALO, L), jnp.bfloat16)

    # ---- lane-broadcast the raw (T, G) input once into (T, G*hid) with a single
    # exact 0/1-expansion matmul, stored bf16 into a small halo'd scratch. ----
    xg = x_ref[0].astype(jnp.bfloat16)                                     # (T, G)
    xb = jnp.dot(xg, e_ref[...], preferred_element_type=jnp.float32)       # (T, L)
    xb_ref[pl.ds(XHALO, T), :] = xb.astype(jnp.bfloat16)

    # ---- conv1 (Cin=1 -> hid, dilation 1): K VPU MACs on row-offset tap reads ----
    acc = jnp.zeros((T, L), jnp.float32)
    for j in range(K):
        tap = xb_ref[pl.ds(XHALO + j - HALF, T), :]                        # (T, L) bf16
        acc = acc + tap.astype(jnp.float32) * w1_ref[j]                    # * (1, L)
    h = jnp.maximum(acc + b1_ref[...], 0.0)
    pad_ref[pl.ds(PADOFF, T), :] = h.astype(jnp.bfloat16)

    # ---- conv2..conv4 (dil 2/4/8): store-staged bf16 im2col + one MXU matmul ----
    def dilated_conv(w_ref, b_ref, dil):
        for j in range(K):                     # K dense 128-lane-aligned stores
            im_ref[:, j * L:(j + 1) * L] = pad_ref[pl.ds(PADOFF + (j - HALF) * dil, T), :]
        a = jnp.dot(im_ref[...], w_ref[...], preferred_element_type=jnp.float32)
        return jnp.maximum(a + b_ref[...], 0.0)

    for w_ref, b_ref, dil in ((w2_ref, b2_ref, 2), (w3_ref, b3_ref, 4)):
        h = dilated_conv(w_ref, b_ref, dil)                                # (T, L)
        pad_ref[pl.ds(PADOFF, T), :] = h.astype(jnp.bfloat16)

    h = dilated_conv(w4_ref, b4_ref, 8)                                    # (T, G*out_dim)

    # ---- global max pool over time (== F.max_pool1d(x, T).squeeze(-1)) ----
    out_ref[0] = jnp.max(h, axis=0, keepdims=True)                         # (1, G*out_dim)


def temporal_encoder(x, params):
    """x: (B, 1, T) float32 (PyTorch NCL). Returns (B, out_dim) float32."""
    w1, b1, w2, b2, w3, b3, w4, b4 = params
    B, _, T = x.shape
    hid = w1.shape[0]
    out_dim = w4.shape[0]

    G = max(1, 128 // hid)            # batch elements packed along the lane axis
    L = G * hid
    Lout = G * out_dim
    n_groups = pl.cdiv(B, G)
    Bp = n_groups * G

    # (B,1,T) -> (n_groups, T, G), zero-padding the batch to a multiple of G.
    x2 = x[:, 0, :].astype(jnp.float32)                                     # (B, T)
    if Bp != B:
        x2 = jnp.concatenate([x2, jnp.zeros((Bp - B, T), jnp.float32)], axis=0)
    x_g = jnp.transpose(x2.reshape(n_groups, G, T), (0, 2, 1))              # (n_groups, T, G)

    # 0/1 lane-expansion matrix: E[b, b*hid + c] = 1.
    expand = jnp.kron(jnp.eye(G, dtype=jnp.float32),
                      jnp.ones((1, hid), jnp.float32)).astype(jnp.bfloat16)  # (G, L)

    def block_diag(w):
        # (Cout, Cin, K) -> (K*G*Cin, G*Cout), block-diagonal over the G lane groups,
        # matching activation lane layout lane = b*Cin + ci / output b*Cout + co.
        cout, cin, kk = w.shape
        wt = jnp.transpose(w, (2, 1, 0)).astype(jnp.float32)                 # (K, Cin, Cout)
        eye = jnp.eye(G, dtype=jnp.float32)
        full = jnp.einsum('jic,bd->jbidc', wt, eye)                          # (K,G,Cin,G,Cout)
        return full.reshape(kk * G * cin, G * cout).astype(jnp.bfloat16)

    def tile_bias(b):
        return jnp.tile(b.reshape(1, -1).astype(jnp.float32), (1, G))        # (1, G*Cout)

    # conv1 taps kept f32 (VPU path), lane-tiled across the G groups.
    w1r = jnp.tile(jnp.transpose(w1, (2, 1, 0)).astype(jnp.float32), (1, 1, G))  # (K, 1, L)
    w2k, w3k, w4k = block_diag(w2), block_diag(w3), block_diag(w4)
    b1r, b2r, b3r, b4r = tile_bias(b1), tile_bias(b2), tile_bias(b3), tile_bias(b4)

    out = pl.pallas_call(
        temporal_encoder_kernel,
        out_shape=jax.ShapeDtypeStruct((n_groups, 1, Lout), jnp.float32),
        grid_spec=pltpu.PrefetchScalarGridSpec(
            num_scalar_prefetch=0,
            grid=(n_groups,),
            in_specs=[
                pl.BlockSpec((1, T, G), lambda i: (i, 0, 0)),     # lane-packed input
                pl.BlockSpec((G, L), lambda i: (0, 0)),           # expansion matrix
                pl.BlockSpec((K, 1, L), lambda i: (0, 0, 0)),     # conv1 taps (f32)
                pl.BlockSpec((1, L), lambda i: (0, 0)),           # b1
                pl.BlockSpec((K * L, L), lambda i: (0, 0)),       # conv2 block-diag (bf16)
                pl.BlockSpec((1, L), lambda i: (0, 0)),           # b2
                pl.BlockSpec((K * L, L), lambda i: (0, 0)),       # conv3 block-diag (bf16)
                pl.BlockSpec((1, L), lambda i: (0, 0)),           # b3
                pl.BlockSpec((K * L, Lout), lambda i: (0, 0)),    # conv4 block-diag (bf16)
                pl.BlockSpec((1, Lout), lambda i: (0, 0)),        # b4
            ],
            out_specs=pl.BlockSpec((1, 1, Lout), lambda i: (i, 0, 0)),
            scratch_shapes=[
                pltpu.VMEM((T + 2 * XHALO, L), jnp.bfloat16),     # broadcast input + halo
                pltpu.VMEM((T + 2 * PADOFF, L), jnp.bfloat16),    # shared activations + halo
                pltpu.VMEM((T, K * L), jnp.bfloat16),             # staged im2col
            ],
        ),
        compiler_params=pltpu.CompilerParams(dimension_semantics=("parallel",)),
    )(x_g, expand, w1r, b1r, w2k, b2r, w3k, b3r, w4k, b4r)

    out = out[:, 0, :].reshape(Bp, out_dim)                        # lane layout b*out_dim+co
    return out[:B]


def init_params(key, hid=32, out_dim=64, k=K):
    """Deterministic PyTorch-style uniform(-1/sqrt(Cin*k), +1/sqrt(Cin*k)) init."""
    convs = [(1, hid), (hid, hid), (hid, hid), (hid, out_dim)]
    keys = jax.random.split(key, 2 * len(convs))
    params = []
    for n, (cin, cout) in enumerate(convs):
        bound = 1.0 / np.sqrt(cin * k)
        params.append(jax.random.uniform(keys[2 * n], (cout, cin, k), jnp.float32, -bound, bound))
        params.append(jax.random.uniform(keys[2 * n + 1], (cout,), jnp.float32, -bound, bound))
    return params


def reference_forward(x, params):
    """Pure-JAX reference matching torch semantics (NCL, OIK weights)."""
    w1, b1, w2, b2, w3, b3, w4, b4 = params
    h = x.astype(jnp.float32)
    for w, b, d in ((w1, b1, 1), (w2, b2, 2), (w3, b3, 4), (w4, b4, 8)):
        p = HALF * d
        h = jax.lax.conv_general_dilated(
            h, w.astype(jnp.float32), window_strides=(1,), padding=[(p, p)],
            rhs_dilation=(d,), dimension_numbers=("NCH", "OIH", "NCH"),
            precision=jax.lax.Precision.HIGHEST)
        h = jnp.maximum(h + b[None, :, None], 0.0)
    return jnp.max(h, axis=-1)


if __name__ == "__main__":
    B, T, hid, out_dim = 6, 256, 32, 64   # small T for the demo (production T=2000)
    key = jax.random.PRNGKey(0)
    kx, kp = jax.random.split(key)
    x = jax.random.normal(kx, (B, 1, T), jnp.float32)        # PyTorch NCL input
    params = init_params(kp, hid=hid, out_dim=out_dim)

    z = temporal_encoder(x, params)       # B=6 -> 2 lane-packed groups -> grid of 2
    jax.block_until_ready(z)

    z_ref = reference_forward(x, params)
    assert z.shape == (B, out_dim), z.shape
    # Kernel uses bf16 activations / MXU operands with f32 accumulation; compare
    # against the f32 HIGHEST reference with a correspondingly loose tolerance.
    np.testing.assert_allclose(np.asarray(z), np.asarray(z_ref), atol=5e-2, rtol=5e-2)
    print("KERNEL_OK")
</pallas_src>

<mosaic_0001>
module attributes {stable_mosaic.version = 11 : i64} {
  func.func @temporal_encoder_kernel(%arg0: i32, %arg1: memref<1x256x4xf32, #tpu.memory_space<vmem>>, %arg2: memref<4x128xbf16, #tpu.memory_space<vmem>>, %arg3: memref<5x1x128xf32, #tpu.memory_space<vmem>>, %arg4: memref<1x128xf32, #tpu.memory_space<vmem>>, %arg5: memref<640x128xbf16, #tpu.memory_space<vmem>>, %arg6: memref<1x128xf32, #tpu.memory_space<vmem>>, %arg7: memref<640x128xbf16, #tpu.memory_space<vmem>>, %arg8: memref<1x128xf32, #tpu.memory_space<vmem>>, %arg9: memref<640x256xbf16, #tpu.memory_space<vmem>>, %arg10: memref<1x256xf32, #tpu.memory_space<vmem>>, %arg11: memref<1x1x256xf32, #tpu.memory_space<vmem>>, %arg12: memref<288x128xbf16, #tpu.memory_space<vmem>>, %arg13: memref<288x128xbf16, #tpu.memory_space<vmem>>, %arg14: memref<256x640xbf16, #tpu.memory_space<vmem>>) attributes {dimension_semantics = [#tpu.dimension_semantics<parallel>], iteration_bounds = array<i64: 2>, scalar_prefetch = 0 : i64, scratch_operands = 3 : i64, tpu.core_type = #tpu.core_type<tc>, window_params = [{transform_indices = @transform_0, window_bounds = array<i64: 1, 256, 4>}, {pipeline_mode = #tpu.pipeline_mode<synchronous>, transform_indices = @transform_1, window_bounds = array<i64: 4, 128>}, {pipeline_mode = #tpu.pipeline_mode<synchronous>, transform_indices = @transform_2, window_bounds = array<i64: 5, 1, 128>}, {pipeline_mode = #tpu.pipeline_mode<synchronous>, transform_indices = @transform_3, window_bounds = array<i64: 1, 128>}, {pipeline_mode = #tpu.pipeline_mode<synchronous>, transform_indices = @transform_4, window_bounds = array<i64: 640, 128>}, {pipeline_mode = #tpu.pipeline_mode<synchronous>, transform_indices = @transform_5, window_bounds = array<i64: 1, 128>}, {pipeline_mode = #tpu.pipeline_mode<synchronous>, transform_indices = @transform_6, window_bounds = array<i64: 640, 128>}, {pipeline_mode = #tpu.pipeline_mode<synchronous>, transform_indices = @transform_7, window_bounds = array<i64: 1, 128>}, {pipeline_mode = #tpu.pipeline_mode<synchronous>, transform_indices = @transform_8, window_bounds = array<i64: 640, 256>}, {pipeline_mode = #tpu.pipeline_mode<synchronous>, transform_indices = @transform_9, window_bounds = array<i64: 1, 256>}, {transform_indices = @transform_10, window_bounds = array<i64: 1, 1, 256>}]} {
    %cst = arith.constant 0.000000e+00 : bf16
    %0 = vector.broadcast %cst : bf16 to vector<16x128xbf16>
    %c0 = arith.constant 0 : index
    %c0_0 = arith.constant 0 : index
    %1 = vector.load %arg13[%c0, %c0_0] : memref<288x128xbf16, #tpu.memory_space<vmem>>, vector<16x128xbf16>
    tpu.vector_store %arg13[%c0, %c0_0], %0 {strides = array<i32>} : memref<288x128xbf16, #tpu.memory_space<vmem>>, vector<16x128xbf16>,
    %cst_1 = arith.constant 0.000000e+00 : bf16
    %2 = vector.broadcast %cst_1 : bf16 to vector<16x128xbf16>
    %c272 = arith.constant 272 : index
    %c0_2 = arith.constant 0 : index
    %3 = vector.load %arg13[%c272, %c0_2] : memref<288x128xbf16, #tpu.memory_space<vmem>>, vector<16x128xbf16>
    tpu.vector_store %arg13[%c272, %c0_2], %2 {strides = array<i32>} : memref<288x128xbf16, #tpu.memory_space<vmem>>, vector<16x128xbf16>,
    %cst_3 = arith.constant 0.000000e+00 : bf16
    %4 = vector.broadcast %cst_3 : bf16 to vector<16x128xbf16>
    %c0_4 = arith.constant 0 : index
    %c0_5 = arith.constant 0 : index
    %5 = vector.load %arg12[%c0_4, %c0_5] : memref<288x128xbf16, #tpu.memory_space<vmem>>, vector<16x128xbf16>
    tpu.vector_store %arg12[%c0_4, %c0_5], %4 {strides = array<i32>} : memref<288x128xbf16, #tpu.memory_space<vmem>>, vector<16x128xbf16>,
    %cst_6 = arith.constant 0.000000e+00 : bf16
    %6 = vector.broadcast %cst_6 : bf16 to vector<16x128xbf16>
    %c272_7 = arith.constant 272 : index
    %c0_8 = arith.constant 0 : index
    %7 = vector.load %arg12[%c272_7, %c0_8] : memref<288x128xbf16, #tpu.memory_space<vmem>>, vector<16x128xbf16>
    tpu.vector_store %arg12[%c272_7, %c0_8], %6 {strides = array<i32>} : memref<288x128xbf16, #tpu.memory_space<vmem>>, vector<16x128xbf16>,
    %c0_9 = arith.constant 0 : index
    %c0_10 = arith.constant 0 : index
    %c0_11 = arith.constant 0 : index
    %8 = vector.load %arg1[%c0_9, %c0_10, %c0_11] : memref<1x256x4xf32, #tpu.memory_space<vmem>>, vector<1x256x4xf32>
    %9 = vector.shape_cast %8 : vector<1x256x4xf32> to vector<256x4xf32>
    %10 = arith.truncf %9 : vector<256x4xf32> to vector<256x4xbf16>
    %c0_12 = arith.constant 0 : index
    %c0_13 = arith.constant 0 : index
    %11 = vector.load %arg2[%c0_12, %c0_13] : memref<4x128xbf16, #tpu.memory_space<vmem>>, vector<4x128xbf16>
    %cst_14 = arith.constant dense<0.000000e+00> : vector<256x128xf32>
    %12 = tpu.matmul %10, %11, %cst_14 {dimension_numbers = #tpu.dot_dimension_numbers<[1], [0], [0], [1], [0, 0, 1, 1], [], []>} : vector<256x4xbf16>, vector<4x128xbf16>, vector<256x128xf32> -> vector<256x128xf32>
    %13 = arith.truncf %12 : vector<256x128xf32> to vector<256x128xbf16>
    %c16 = arith.constant 16 : index
    %c0_15 = arith.constant 0 : index
    %14 = vector.load %arg12[%c16, %c0_15] : memref<288x128xbf16, #tpu.memory_space<vmem>>, vector<256x128xbf16>
    tpu.vector_store %arg12[%c16, %c0_15], %13 {strides = array<i32>} : memref<288x128xbf16, #tpu.memory_space<vmem>>, vector<256x128xbf16>,
    %cst_16 = arith.constant 0.000000e+00 : f32
    %15 = vector.broadcast %cst_16 : f32 to vector<256x128xf32>
    %c14 = arith.constant 14 : index
    %c0_17 = arith.constant 0 : index
    %16 = vector.load %arg12[%c14, %c0_17] : memref<288x128xbf16, #tpu.memory_space<vmem>>, vector<256x128xbf16>
    %17 = arith.extf %16 : vector<256x128xbf16> to vector<256x128xf32>
    %c0_18 = arith.constant 0 : index
    %c0_19 = arith.constant 0 : index
    %c0_20 = arith.constant 0 : index
    %18 = vector.load %arg3[%c0_18, %c0_19, %c0_20] : memref<5x1x128xf32, #tpu.memory_space<vmem>>, vector<1x1x128xf32>
    %19 = vector.shape_cast %18 : vector<1x1x128xf32> to vector<1x128xf32>
    %20 = vector.broadcast %19 : vector<1x128xf32> to vector<256x128xf32>
    %21 = arith.mulf %17, %20 : vector<256x128xf32>
    %22 = arith.addf %15, %21 : vector<256x128xf32>
    %c15 = arith.constant 15 : index
    %c0_21 = arith.constant 0 : index
    %23 = vector.load %arg12[%c15, %c0_21] : memref<288x128xbf16, #tpu.memory_space<vmem>>, vector<256x128xbf16>
    %24 = arith.extf %23 : vector<256x128xbf16> to vector<256x128xf32>
    %c1 = arith.constant 1 : index
    %c0_22 = arith.constant 0 : index
    %c0_23 = arith.constant 0 : index
    %25 = vector.load %arg3[%c1, %c0_22, %c0_23] : memref<5x1x128xf32, #tpu.memory_space<vmem>>, vector<1x1x128xf32>
    %26 = vector.shape_cast %25 : vector<1x1x128xf32> to vector<1x128xf32>
    %27 = vector.broadcast %26 : vector<1x128xf32> to vector<256x128xf32>
    %28 = arith.mulf %24, %27 : vector<256x128xf32>
    %29 = arith.addf %22, %28 : vector<256x128xf32>
    %c16_24 = arith.constant 16 : index
    %c0_25 = arith.constant 0 : index
    %30 = vector.load %arg12[%c16_24, %c0_25] : memref<288x128xbf16, #tpu.memory_space<vmem>>, vector<256x128xbf16>
    %31 = arith.extf %30 : vector<256x128xbf16> to vector<256x128xf32>
    %c2 = arith.constant 2 : index
    %c0_26 = arith.constant 0 : index
    %c0_27 = arith.constant 0 : index
    %32 = vector.load %arg3[%c2, %c0_26, %c0_27] : memref<5x1x128xf32, #tpu.memory_space<vmem>>, vector<1x1x128xf32>
    %33 = vector.shape_cast %32 : vector<1x1x128xf32> to vector<1x128xf32>
    %34 = vector.broadcast %33 : vector<1x128xf32> to vector<256x128xf32>
    %35 = arith.mulf %31, %34 : vector<256x128xf32>
    %36 = arith.addf %29, %35 : vector<256x128xf32>
    %c17 = arith.constant 17 : index
    %c0_28 = arith.constant 0 : index
    %37 = vector.load %arg12[%c17, %c0_28] : memref<288x128xbf16, #tpu.memory_space<vmem>>, vector<256x128xbf16>
    %38 = arith.extf %37 : vector<256x128xbf16> to vector<256x128xf32>
    %c3 = arith.constant 3 : index
    %c0_29 = arith.constant 0 : index
    %c0_30 = arith.constant 0 : index
    %39 = vector.load %arg3[%c3, %c0_29, %c0_30] : memref<5x1x128xf32, #tpu.memory_space<vmem>>, vector<1x1x128xf32>
    %40 = vector.shape_cast %39 : vector<1x1x128xf32> to vector<1x128xf32>
    %41 = vector.broadcast %40 : vector<1x128xf32> to vector<256x128xf32>
    %42 = arith.mulf %38, %41 : vector<256x128xf32>
    %43 = arith.addf %36, %42 : vector<256x128xf32>
    %c18 = arith.constant 18 : index
    %c0_31 = arith.constant 0 : index
    %44 = vector.load %arg12[%c18, %c0_31] : memref<288x128xbf16, #tpu.memory_space<vmem>>, vector<256x128xbf16>
    %45 = arith.extf %44 : vector<256x128xbf16> to vector<256x128xf32>
    %c4 = arith.constant 4 : index
    %c0_32 = arith.constant 0 : index
    %c0_33 = arith.constant 0 : index
    %46 = vector.load %arg3[%c4, %c0_32, %c0_33] : memref<5x1x128xf32, #tpu.memory_space<vmem>>, vector<1x1x128xf32>
    %47 = vector.shape_cast %46 : vector<1x1x128xf32> to vector<1x128xf32>
    %48 = vector.broadcast %47 : vector<1x128xf32> to vector<256x128xf32>
    %49 = arith.mulf %45, %48 : vector<256x128xf32>
    %50 = arith.addf %43, %49 : vector<256x128xf32>
    %c0_34 = arith.constant 0 : index
    %c0_35 = arith.constant 0 : index
    %51 = vector.load %arg4[%c0_34, %c0_35] : memref<1x128xf32, #tpu.memory_space<vmem>>, vector<1x128xf32>
    %52 = vector.broadcast %51 : vector<1x128xf32> to vector<256x128xf32>
    %53 = arith.addf %50, %52 : vector<256x128xf32>
    %cst_36 = arith.constant 0.000000e+00 : f32
    %54 = vector.broadcast %cst_36 : f32 to vector<256x128xf32>
    %55 = arith.maximumf %53, %54 : vector<256x128xf32>
    %56 = arith.truncf %55 : vector<256x128xf32> to vector<256x128xbf16>
    %c16_37 = arith.constant 16 : index
    %c0_38 = arith.constant 0 : index
    %57 = vector.load %arg13[%c16_37, %c0_38] : memref<288x128xbf16, #tpu.memory_space<vmem>>, vector<256x128xbf16>
    tpu.vector_store %arg13[%c16_37, %c0_38], %56 {strides = array<i32>} : memref<288x128xbf16, #tpu.memory_space<vmem>>, vector<256x128xbf16>,
    %c12 = arith.constant 12 : index
    %c0_39 = arith.constant 0 : index
    %58 = vector.load %arg13[%c12, %c0_39] : memref<288x128xbf16, #tpu.memory_space<vmem>>, vector<256x128xbf16>
    %c0_40 = arith.constant 0 : index
    %c0_41 = arith.constant 0 : index
    %59 = vector.load %arg14[%c0_40, %c0_41] : memref<256x640xbf16, #tpu.memory_space<vmem>>, vector<256x128xbf16>
    tpu.vector_store %arg14[%c0_40, %c0_41], %58 {strides = array<i32>} : memref<256x640xbf16, #tpu.memory_space<vmem>>, vector<256x128xbf16>,
    %c14_42 = arith.constant 14 : index
    %c0_43 = arith.constant 0 : index
    %60 = vector.load %arg13[%c14_42, %c0_43] : memref<288x128xbf16, #tpu.memory_space<vmem>>, vector<256x128xbf16>
    %c0_44 = arith.constant 0 : index
    %c128 = arith.constant 128 : index
    %61 = vector.load %arg14[%c0_44, %c128] : memref<256x640xbf16, #tpu.memory_space<vmem>>, vector<256x128xbf16>
    tpu.vector_store %arg14[%c0_44, %c128], %60 {strides = array<i32>} : memref<256x640xbf16, #tpu.memory_space<vmem>>, vector<256x128xbf16>,
    %c16_45 = arith.constant 16 : index
    %c0_46 = arith.constant 0 : index
    %62 = vector.load %arg13[%c16_45, %c0_46] : memref<288x128xbf16, #tpu.memory_space<vmem>>, vector<256x128xbf16>
    %c0_47 = arith.constant 0 : index
    %c256 = arith.constant 256 : index
    %63 = vector.load %arg14[%c0_47, %c256] : memref<256x640xbf16, #tpu.memory_space<vmem>>, vector<256x128xbf16>
    tpu.vector_store %arg14[%c0_47, %c256], %62 {strides = array<i32>} : memref<256x640xbf16, #tpu.memory_space<vmem>>, vector<256x128xbf16>,
    %c18_48 = arith.constant 18 : index
    %c0_49 = arith.constant 0 : index
    %64 = vector.load %arg13[%c18_48, %c0_49] : memref<288x128xbf16, #tpu.memory_space<vmem>>, vector<256x128xbf16>
    %c0_50 = arith.constant 0 : index
    %c384 = arith.constant 384 : index
    %65 = vector.load %arg14[%c0_50, %c384] : memref<256x640xbf16, #tpu.memory_space<vmem>>, vector<256x128xbf16>
    tpu.vector_store %arg14[%c0_50, %c384], %64 {strides = array<i32>} : memref<256x640xbf16, #tpu.memory_space<vmem>>, vector<256x128xbf16>,
    %c20 = arith.constant 20 : index
    %c0_51 = arith.constant 0 : index
    %66 = vector.load %arg13[%c20, %c0_51] : memref<288x128xbf16, #tpu.memory_space<vmem>>, vector<256x128xbf16>
    %c0_52 = arith.constant 0 : index
    %c512 = arith.constant 512 : index
    %67 = vector.load %arg14[%c0_52, %c512] : memref<256x640xbf16, #tpu.memory_space<vmem>>, vector<256x128xbf16>
    tpu.vector_store %arg14[%c0_52, %c512], %66 {strides = array<i32>} : memref<256x640xbf16, #tpu.memory_space<vmem>>, vector<256x128xbf16>,
    %c0_53 = arith.constant 0 : index
    %c0_54 = arith.constant 0 : index
    %68 = vector.load %arg14[%c0_53, %c0_54] : memref<256x640xbf16, #tpu.memory_space<vmem>>, vector<256x640xbf16>
    %c0_55 = arith.constant 0 : index
    %c0_56 = arith.constant 0 : index
    %69 = vector.load %arg5[%c0_55, %c0_56] : memref<640x128xbf16, #tpu.memory_space<vmem>>, vector<640x128xbf16>
    %cst_57 = arith.constant dense<0.000000e+00> : vector<256x128xf32>
    %70 = tpu.matmul %68, %69, %cst_57 {dimension_numbers = #tpu.dot_dimension_numbers<[1], [0], [0], [1], [0, 0, 1, 1], [], []>} : vector<256x640xbf16>, vector<640x128xbf16>, vector<256x128xf32> -> vector<256x128xf32>
    %c0_58 = arith.constant 0 : index
    %c0_59 = arith.constant 0 : index
    %71 = vector.load %arg6[%c0_58, %c0_59] : memref<1x128xf32, #tpu.memory_space<vmem>>, vector<1x128xf32>
    %72 = vector.broadcast %71 : vector<1x128xf32> to vector<256x128xf32>
    %73 = arith.addf %70, %72 : vector<256x128xf32>
    %cst_60 = arith.constant 0.000000e+00 : f32
    %74 = vector.broadcast %cst_60 : f32 to vector<256x128xf32>
    %75 = arith.maximumf %73, %74 : vector<256x128xf32>
    %76 = arith.truncf %75 : vector<256x128xf32> to vector<256x128xbf16>
    %c16_61 = arith.constant 16 : index
    %c0_62 = arith.constant 0 : index
    %77 = vector.load %arg13[%c16_61, %c0_62] : memref<288x128xbf16, #tpu.memory_space<vmem>>, vector<256x128xbf16>
    tpu.vector_store %arg13[%c16_61, %c0_62], %76 {strides = array<i32>} : memref<288x128xbf16, #tpu.memory_space<vmem>>, vector<256x128xbf16>,
    %c8 = arith.constant 8 : index
    %c0_63 = arith.constant 0 : index
    %78 = vector.load %arg13[%c8, %c0_63] : memref<288x128xbf16, #tpu.memory_space<vmem>>, vector<256x128xbf16>
    %c0_64 = arith.constant 0 : index
    %c0_65 = arith.constant 0 : index
    %79 = vector.load %arg14[%c0_64, %c0_65] : memref<256x640xbf16, #tpu.memory_space<vmem>>, vector<256x128xbf16>
    tpu.vector_store %arg14[%c0_64, %c0_65], %78 {strides = array<i32>} : memref<256x640xbf16, #tpu.memory_space<vmem>>, vector<256x128xbf16>,
    %c12_66 = arith.constant 12 : index
    %c0_67 = arith.constant 0 : index
    %80 = vector.load %arg13[%c12_66, %c0_67] : memref<288x128xbf16, #tpu.memory_space<vmem>>, vector<256x128xbf16>
    %c0_68 = arith.constant 0 : index
    %c128_69 = arith.constant 128 : index
    %81 = vector.load %arg14[%c0_68, %c128_69] : memref<256x640xbf16, #tpu.memory_space<vmem>>, vector<256x128xbf16>
    tpu.vector_store %arg14[%c0_68, %c128_69], %80 {strides = array<i32>} : memref<256x640xbf16, #tpu.memory_space<vmem>>, vector<256x128xbf16>,
    %c16_70 = arith.constant 16 : index
    %c0_71 = arith.constant 0 : index
    %82 = vector.load %arg13[%c16_70, %c0_71] : memref<288x128xbf16, #tpu.memory_space<vmem>>, vector<256x128xbf16>
    %c0_72 = arith.constant 0 : index
    %c256_73 = arith.constant 256 : index
    %83 = vector.load %arg14[%c0_72, %c256_73] : memref<256x640xbf16, #tpu.memory_space<vmem>>, vector<256x128xbf16>
    tpu.vector_store %arg14[%c0_72, %c256_73], %82 {strides = array<i32>} : memref<256x640xbf16, #tpu.memory_space<vmem>>, vector<256x128xbf16>,
    %c20_74 = arith.constant 20 : index
    %c0_75 = arith.constant 0 : index
    %84 = vector.load %arg13[%c20_74, %c0_75] : memref<288x128xbf16, #tpu.memory_space<vmem>>, vector<256x128xbf16>
    %c0_76 = arith.constant 0 : index
    %c384_77 = arith.constant 384 : index
    %85 = vector.load %arg14[%c0_76, %c384_77] : memref<256x640xbf16, #tpu.memory_space<vmem>>, vector<256x128xbf16>
    tpu.vector_store %arg14[%c0_76, %c384_77], %84 {strides = array<i32>} : memref<256x640xbf16, #tpu.memory_space<vmem>>, vector<256x128xbf16>,
    %c24 = arith.constant 24 : index
    %c0_78 = arith.constant 0 : index
    %86 = vector.load %arg13[%c24, %c0_78] : memref<288x128xbf16, #tpu.memory_space<vmem>>, vector<256x128xbf16>
    %c0_79 = arith.constant 0 : index
    %c512_80 = arith.constant 512 : index
    %87 = vector.load %arg14[%c0_79, %c512_80] : memref<256x640xbf16, #tpu.memory_space<vmem>>, vector<256x128xbf16>
    tpu.vector_store %arg14[%c0_79, %c512_80], %86 {strides = array<i32>} : memref<256x640xbf16, #tpu.memory_space<vmem>>, vector<256x128xbf16>,
    %c0_81 = arith.constant 0 : index
    %c0_82 = arith.constant 0 : index
    %88 = vector.load %arg14[%c0_81, %c0_82] : memref<256x640xbf16, #tpu.memory_space<vmem>>, vector<256x640xbf16>
    %c0_83 = arith.constant 0 : index
    %c0_84 = arith.constant 0 : index
    %89 = vector.load %arg7[%c0_83, %c0_84] : memref<640x128xbf16, #tpu.memory_space<vmem>>, vector<640x128xbf16>
    %cst_85 = arith.constant dense<0.000000e+00> : vector<256x128xf32>
    %90 = tpu.matmul %88, %89, %cst_85 {dimension_numbers = #tpu.dot_dimension_numbers<[1], [0], [0], [1], [0, 0, 1, 1], [], []>} : vector<256x640xbf16>, vector<640x128xbf16>, vector<256x128xf32> -> vector<256x128xf32>
    %c0_86 = arith.constant 0 : index
    %c0_87 = arith.constant 0 : index
    %91 = vector.load %arg8[%c0_86, %c0_87] : memref<1x128xf32, #tpu.memory_space<vmem>>, vector<1x128xf32>
    %92 = vector.broadcast %91 : vector<1x128xf32> to vector<256x128xf32>
    %93 = arith.addf %90, %92 : vector<256x128xf32>
    %cst_88 = arith.constant 0.000000e+00 : f32
    %94 = vector.broadcast %cst_88 : f32 to vector<256x128xf32>
    %95 = arith.maximumf %93, %94 : vector<256x128xf32>
    %96 = arith.truncf %95 : vector<256x128xf32> to vector<256x128xbf16>
    %c16_89 = arith.constant 16 : index
    %c0_90 = arith.constant 0 : index
    %97 = vector.load %arg13[%c16_89, %c0_90] : memref<288x128xbf16, #tpu.memory_space<vmem>>, vector<256x128xbf16>
    tpu.vector_store %arg13[%c16_89, %c0_90], %96 {strides = array<i32>} : memref<288x128xbf16, #tpu.memory_space<vmem>>, vector<256x128xbf16>,
    %c0_91 = arith.constant 0 : index
    %c0_92 = arith.constant 0 : index
    %98 = vector.load %arg13[%c0_91, %c0_92] : memref<288x128xbf16, #tpu.memory_space<vmem>>, vector<256x128xbf16>
    %c0_93 = arith.constant 0 : index
    %c0_94 = arith.constant 0 : index
    %99 = vector.load %arg14[%c0_93, %c0_94] : memref<256x640xbf16, #tpu.memory_space<vmem>>, vector<256x128xbf16>
    tpu.vector_store %arg14[%c0_93, %c0_94], %98 {strides = array<i32>} : memref<256x640xbf16, #tpu.memory_space<vmem>>, vector<256x128xbf16>,
    %c8_95 = arith.constant 8 : index
    %c0_96 = arith.constant 0 : index
    %100 = vector.load %arg13[%c8_95, %c0_96] : memref<288x128xbf16, #tpu.memory_space<vmem>>, vector<256x128xbf16>
    %c0_97 = arith.constant 0 : index
    %c128_98 = arith.constant 128 : index
    %101 = vector.load %arg14[%c0_97, %c128_98] : memref<256x640xbf16, #tpu.memory_space<vmem>>, vector<256x128xbf16>
    tpu.vector_store %arg14[%c0_97, %c128_98], %100 {strides = array<i32>} : memref<256x640xbf16, #tpu.memory_space<vmem>>, vector<256x128xbf16>,
    %c16_99 = arith.constant 16 : index
    %c0_100 = arith.constant 0 : index
    %102 = vector.load %arg13[%c16_99, %c0_100] : memref<288x128xbf16, #tpu.memory_space<vmem>>, vector<256x128xbf16>
    %c0_101 = arith.constant 0 : index
    %c256_102 = arith.constant 256 : index
    %103 = vector.load %arg14[%c0_101, %c256_102] : memref<256x640xbf16, #tpu.memory_space<vmem>>, vector<256x128xbf16>
    tpu.vector_store %arg14[%c0_101, %c256_102], %102 {strides = array<i32>} : memref<256x640xbf16, #tpu.memory_space<vmem>>, vector<256x128xbf16>,
    %c24_103 = arith.constant 24 : index
    %c0_104 = arith.constant 0 : index
    %104 = vector.load %arg13[%c24_103, %c0_104] : memref<288x128xbf16, #tpu.memory_space<vmem>>, vector<256x128xbf16>
    %c0_105 = arith.constant 0 : index
    %c384_106 = arith.constant 384 : index
    %105 = vector.load %arg14[%c0_105, %c384_106] : memref<256x640xbf16, #tpu.memory_space<vmem>>, vector<256x128xbf16>
    tpu.vector_store %arg14[%c0_105, %c384_106], %104 {strides = array<i32>} : memref<256x640xbf16, #tpu.memory_space<vmem>>, vector<256x128xbf16>,
    %c32 = arith.constant 32 : index
    %c0_107 = arith.constant 0 : index
    %106 = vector.load %arg13[%c32, %c0_107] : memref<288x128xbf16, #tpu.memory_space<vmem>>, vector<256x128xbf16>
    %c0_108 = arith.constant 0 : index
    %c512_109 = arith.constant 512 : index
    %107 = vector.load %arg14[%c0_108, %c512_109] : memref<256x640xbf16, #tpu.memory_space<vmem>>, vector<256x128xbf16>
    tpu.vector_store %arg14[%c0_108, %c512_109], %106 {strides = array<i32>} : memref<256x640xbf16, #tpu.memory_space<vmem>>, vector<256x128xbf16>,
    %c0_110 = arith.constant 0 : index
    %c0_111 = arith.constant 0 : index
    %108 = vector.load %arg14[%c0_110, %c0_111] : memref<256x640xbf16, #tpu.memory_space<vmem>>, vector<256x640xbf16>
    %c0_112 = arith.constant 0 : index
    %c0_113 = arith.constant 0 : index
    %109 = vector.load %arg9[%c0_112, %c0_113] : memref<640x256xbf16, #tpu.memory_space<vmem>>, vector<640x256xbf16>
    %cst_114 = arith.constant dense<0.000000e+00> : vector<256x256xf32>
    %110 = tpu.matmul %108, %109, %cst_114 {dimension_numbers = #tpu.dot_dimension_numbers<[1], [0], [0], [1], [0, 0, 1, 1], [], []>} : vector<256x640xbf16>, vector<640x256xbf16>, vector<256x256xf32> -> vector<256x256xf32>
    %c0_115 = arith.constant 0 : index
    %c0_116 = arith.constant 0 : index
    %111 = vector.load %arg10[%c0_115, %c0_116] : memref<1x256xf32, #tpu.memory_space<vmem>>, vector<1x256xf32>
    %112 = vector.broadcast %111 : vector<1x256xf32> to vector<256x256xf32>
    %113 = arith.addf %110, %112 : vector<256x256xf32>
    %cst_117 = arith.constant 0.000000e+00 : f32
    %114 = vector.broadcast %cst_117 : f32 to vector<256x256xf32>
    %115 = arith.maximumf %113, %114 : vector<256x256xf32>
    %cst_118 = arith.constant dense<0xFF800000> : vector<256xf32>
    %116 = vector.multi_reduction <maximumf>, %115, %cst_118 [0] : vector<256x256xf32> to vector<256xf32>
    %117 = vector.shape_cast %116 : vector<256xf32> to vector<1x256xf32>
    %c0_119 = arith.constant 0 : index
    %c0_120 = arith.constant 0 : index
    %c0_121 = arith.constant 0 : index
    %118 = vector.load %arg11[%c0_119, %c0_120, %c0_121] : memref<1x1x256xf32, #tpu.memory_space<vmem>>, vector<1x1x256xf32>
    %119 = vector.shape_cast %118 : vector<1x1x256xf32> to vector<1x256xf32>
    %120 = vector.shape_cast %117 : vector<1x256xf32> to vector<1x1x256xf32>
    tpu.vector_store %arg11[%c0_119, %c0_120, %c0_121], %120 {strides = array<i32>} : memref<1x1x256xf32, #tpu.memory_space<vmem>>, vector<1x1x256xf32>,
    return
  }
  func.func @transform_0(%arg0: i32) -> (i32, i32, i32) {
    %c0_i32 = arith.constant 0 : i32
    %c0_i32_0 = arith.constant 0 : i32
    %c0_i32_1 = arith.constant 0 : i32
    return %arg0, %c0_i32, %c0_i32_0 : i32, i32, i32
  }
  func.func @transform_1(%arg0: i32) -> (i32, i32) {
    %c0_i32 = arith.constant 0 : i32
    %c0_i32_0 = arith.constant 0 : i32
    %c0_i32_1 = arith.constant 0 : i32
    return %c0_i32, %c0_i32_0 : i32, i32
  }
  func.func @transform_2(%arg0: i32) -> (i32, i32, i32) {
    %c0_i32 = arith.constant 0 : i32
    %c0_i32_0 = arith.constant 0 : i32
    %c0_i32_1 = arith.constant 0 : i32
    %c0_i32_2 = arith.constant 0 : i32
    return %c0_i32, %c0_i32_0, %c0_i32_1 : i32, i32, i32
  }
  func.func @transform_3(%arg0: i32) -> (i32, i32) {
    %c0_i32 = arith.constant 0 : i32
    %c0_i32_0 = arith.constant 0 : i32
    %c0_i32_1 = arith.constant 0 : i32
    return %c0_i32, %c0_i32_0 : i32, i32
  }
  func.func @transform_4(%arg0: i32) -> (i32, i32) {
    %c0_i32 = arith.constant 0 : i32
    %c0_i32_0 = arith.constant 0 : i32
    %c0_i32_1 = arith.constant 0 : i32
    return %c0_i32, %c0_i32_0 : i32, i32
  }
  func.func @transform_5(%arg0: i32) -> (i32, i32) {
    %c0_i32 = arith.constant 0 : i32
    %c0_i32_0 = arith.constant 0 : i32
    %c0_i32_1 = arith.constant 0 : i32
    return %c0_i32, %c0_i32_0 : i32, i32
  }
  func.func @transform_6(%arg0: i32) -> (i32, i32) {
    %c0_i32 = arith.constant 0 : i32
    %c0_i32_0 = arith.constant 0 : i32
    %c0_i32_1 = arith.constant 0 : i32
    return %c0_i32, %c0_i32_0 : i32, i32
  }
  func.func @transform_7(%arg0: i32) -> (i32, i32) {
    %c0_i32 = arith.constant 0 : i32
    %c0_i32_0 = arith.constant 0 : i32
    %c0_i32_1 = arith.constant 0 : i32
    return %c0_i32, %c0_i32_0 : i32, i32
  }
  func.func @transform_8(%arg0: i32) -> (i32, i32) {
    %c0_i32 = arith.constant 0 : i32
    %c0_i32_0 = arith.constant 0 : i32
    %c0_i32_1 = arith.constant 0 : i32
    return %c0_i32, %c0_i32_0 : i32, i32
  }
  func.func @transform_9(%arg0: i32) -> (i32, i32) {
    %c0_i32 = arith.constant 0 : i32
    %c0_i32_0 = arith.constant 0 : i32
    %c0_i32_1 = arith.constant 0 : i32
    return %c0_i32, %c0_i32_0 : i32, i32
  }
  func.func @transform_10(%arg0: i32) -> (i32, i32, i32) {
    %c0_i32 = arith.constant 0 : i32
    %c0_i32_0 = arith.constant 0 : i32
    %c0_i32_1 = arith.constant 0 : i32
    return %arg0, %c0_i32, %c0_i32_0 : i32, i32, i32
  }
}

</mosaic_0001>

<llo_original>
// kernel: tpu_custom_call.1
$region0: #{tpu_custom_call.1}
  #allocation0 [shape = 'u32[]', space=smem, size = 0x4, offset = 0x4, fixed_abs, tag = 'smem constant byte address 0x4 - core index']
  #allocation1 [shape = 'u32[144,128]{1,0:T(1,128)}', space=vmem, size = 0x12000, scoped, tag = 'internal scratch']
  #allocation2 [shape = 'bf16[288,128]{1,0:T(16,128)(2,1)}', space=vmem, size = 0x12000, scoped, tag = 'scratch operand']
  #allocation3 [shape = 'bf16[288,128]{1,0:T(16,128)(2,1)}', space=vmem, size = 0x12000, scoped, tag = 'scratch operand']
  #allocation4 [shape = 'bf16[256,640]{1,0:T(16,128)(2,1)}', space=vmem, size = 0x50000, scoped, tag = 'scratch operand']
  %s0 = inlined_call_operand.vmem [shape: f32[2,256,4], index: 0, kind: input, shape index: {}]
  %s1 = inlined_call_operand.vmem [shape: bf16[4,128], index: 1, kind: input, shape index: {}]
  %s2 = inlined_call_operand.vmem [shape: f32[5,1,128], index: 2, kind: input, shape index: {}]
  %s3 = inlined_call_operand.vmem [shape: f32[1,128], index: 3, kind: input, shape index: {}]
  %s4 = inlined_call_operand.vmem [shape: bf16[640,128], index: 4, kind: input, shape index: {}]
  %s5 = inlined_call_operand.vmem [shape: f32[1,128], index: 5, kind: input, shape index: {}]
  %s6 = inlined_call_operand.hbm [shape: bf16[640,128], index: 6, kind: input, shape index: {}]
  %s7 = inlined_call_operand.vmem [shape: f32[1,128], index: 7, kind: input, shape index: {}]
  %s8 = inlined_call_operand.hbm [shape: bf16[640,256], index: 8, kind: input, shape index: {}]
  %s9 = inlined_call_operand.vmem [shape: f32[1,256], index: 9, kind: input, shape index: {}]
  %s10 = inlined_call_operand.hbm [shape: f32[2,1,256], index: 10, kind: output, shape index: {}]
  %s11 = sld [smem:[#allocation0]]
  $region81: #{tpu_custom_call.1} parent=0
    _
  %s13 = ssub.s32 1, %s11
  %s14 = scalar_select 0, %s13, %s11
  $region1: #{tpu_custom_call.1} parent=0
    #allocation5 [shape = 'u8[163840]{0}', space=vmem, size = 0x28000, scoped, tag = 'input window, operand 6, single buffered']
    #allocation6 [shape = 's32[2]{0}', space=sflag, size = 0x8, scoped, tag = 'scoped memory for tpu_custom_call.1']
    #allocation7 [shape = 's32[2]{0}', space=sflag, size = 0x8, scoped, tag = 'scoped memory for tpu_custom_call.1']
    #allocation8 [shape = 'u8[327680]{0}', space=vmem, size = 0x50000, scoped, tag = 'input window, operand 8, single buffered']
    #allocation9 [shape = 's32[1]{0}', space=sflag, size = 0x4, scoped, tag = 'scoped memory for tpu_custom_call.1']
    #allocation10 [shape = 'u8[2048]{0}', space=vmem, size = 0x800, scoped, tag = 'output window, operand 0']
    %15 = vsyncpa [#allocation6], 0
    %16 = vsyncpa [#allocation9], 0
    %17 = vsyncpa [#allocation7], 0
    %s18 = scalar_lea.sflag [#allocation7], 1
    %19 = vsyncpa %s18, 0
    loop: start=0, step=1, limit=4
    $region2: #{tpu_custom_call.1} parent=1 // loop_pre_header
      _
    $region3: #{tpu_custom_call.1} parent=1 // loop_header
      %s21 = sphi 0, %s25
      %p22 = scmp.ge.s32.totalorder %s21, 4
      %s31 = sphi 0, %s33
      %s34 = sphi 0, %s31
      %s35 = sphi 0, %s34
      %s51 = sphi 0, %s35
      %s55 = sphi 0, %s55
      %s57 = sphi 0, %s55
      %s58 = sphi 0, %s57
      %s72 = sphi 0, %s58
      %s76 = sphi 0, %s76
      %s78 = sphi 0, %s76
      %s79 = sphi 0, %s78
      %s93 = sphi 0, %s79
      %s97 = sphi 0, %s97
      %s99 = sphi 0, %s97
      %s100 = sphi 0, %s99
      %s114 = sphi 0, %s100
      %s118 = sphi 0, %s118
      %s120 = sphi 0, %s118
      %s121 = sphi 0, %s120
      %s135 = sphi 0, %s121
      %s139 = sphi 0, %s139
      %s141 = sphi 0, %s139
      %s142 = sphi 0, %s141
      %s156 = sphi 0, %s142
      %s160 = sphi 0, %s160
      %s162 = sphi 0, %s160
      %s163 = sphi 0, %s162
      %s177 = sphi 0, %s163
      %s181 = sphi 0, %s181
      %s183 = sphi 0, %s181
      %s184 = sphi 0, %s183
      %s198 = sphi 0, %s184
      %s202 = sphi 0, %s202
      %s204 = sphi 0, %s202
      %s205 = sphi 0, %s204
      %s219 = sphi 0, %s205
      %s223 = sphi 0, %s223
      %s225 = sphi 0, %s223
      %s226 = sphi 0, %s225
      %s240 = sphi 0, %s226
      %s246 = sphi 0, %s248
      %s249 = sphi 0, %s246
      %s250 = sphi 0, %s249
      %s266 = sphi 0, %s250
    $region4: #{tpu_custom_call.1} parent=1 // loop_header_branch
      %24 = sbr.rel (%p22) target = $region8
    $region5: #{tpu_custom_call.1} parent=1 // loop_body
      %s26 = ssub.s32 %s21, 1
      %s27 = ssub.s32 %s21, 2
      %s28 = sadd.s32 %s21, 1
      %s29 = ssub.s32 %s21, %s28
      %p30 = scmp.eq.s32.totalorder %s29, 0
      %s32 = sadd.s32 %s31, 1
      %s33 = scalar_select %p30, %s31, %s32
      %p36 = pneg %p30
      %p37 = scmp.eq.s32.totalorder %s21, 1
      %p38 = por %p36, %p37
      %p39 = scmp.ne.s32.totalorder %s31, %s34
      %p40 = scmp.eq.s32.totalorder %s21, 0
      %p41 = por %p39, %p40
      %p42 = scmp.ne.s32.totalorder %s31, %s34
      %p43 = scmp.eq.s32.totalorder %s26, 1
      %p44 = por %p42, %p43
      %p45 = scmp.ne.s32.totalorder %s34, %s35
      %p46 = scmp.eq.s32.totalorder %s26, 0
      %p47 = por %p45, %p46
      %p48 = scmp.ne.s32.totalorder %s34, %s35
      %p49 = scmp.eq.s32.totalorder %s27, 1
      %p50 = por %p48, %p49
      %p52 = scmp.ne.s32.totalorder %s35, %s51
      %p53 = scmp.eq.s32.totalorder %s27, 0
      %p54 = por %p52, %p53
      %s56 = sadd.s32 %s55, 1
      %p59 = scmp.eq.s32.totalorder %s21, 1
      %p60 = scmp.ne.s32.totalorder %s55, %s57
      %p61 = scmp.eq.s32.totalorder %s21, 0
      %p62 = por %p60, %p61
      %p63 = scmp.ne.s32.totalorder %s55, %s57
      %p64 = scmp.eq.s32.totalorder %s26, 1
      %p65 = por %p63, %p64
      %p66 = scmp.ne.s32.totalorder %s57, %s58
      %p67 = scmp.eq.s32.totalorder %s26, 0
      %p68 = por %p66, %p67
      %p69 = scmp.ne.s32.totalorder %s57, %s58
      %p70 = scmp.eq.s32.totalorder %s27, 1
      %p71 = por %p69, %p70
      %p73 = scmp.ne.s32.totalorder %s58, %s72
      %p74 = scmp.eq.s32.totalorder %s27, 0
      %p75 = por %p73, %p74
      %s77 = sadd.s32 %s76, 1
      %p80 = scmp.eq.s32.totalorder %s21, 1
      %p81 = scmp.ne.s32.totalorder %s76, %s78
      %p82 = scmp.eq.s32.totalorder %s21, 0
      %p83 = por %p81, %p82
      %p84 = scmp.ne.s32.totalorder %s76, %s78
      %p85 = scmp.eq.s32.totalorder %s26, 1
      %p86 = por %p84, %p85
      %p87 = scmp.ne.s32.totalorder %s78, %s79
      %p88 = scmp.eq.s32.totalorder %s26, 0
      %p89 = por %p87, %p88
      %p90 = scmp.ne.s32.totalorder %s78, %s79
      %p91 = scmp.eq.s32.totalorder %s27, 1
      %p92 = por %p90, %p91
      %p94 = scmp.ne.s32.totalorder %s79, %s93
      %p95 = scmp.eq.s32.totalorder %s27, 0
      %p96 = por %p94, %p95
      %s98 = sadd.s32 %s97, 1
      %p101 = scmp.eq.s32.totalorder %s21, 1
      %p102 = scmp.ne.s32.totalorder %s97, %s99
      %p103 = scmp.eq.s32.totalorder %s21, 0
      %p104 = por %p102, %p103
      %p105 = scmp.ne.s32.totalorder %s97, %s99
      %p106 = scmp.eq.s32.totalorder %s26, 1
      %p107 = por %p105, %p106
      %p108 = scmp.ne.s32.totalorder %s99, %s100
      %p109 = scmp.eq.s32.totalorder %s26, 0
      %p110 = por %p108, %p109
      %p111 = scmp.ne.s32.totalorder %s99, %s100
      %p112 = scmp.eq.s32.totalorder %s27, 1
      %p113 = por %p111, %p112
      %p115 = scmp.ne.s32.totalorder %s100, %s114
      %p116 = scmp.eq.s32.totalorder %s27, 0
      %p117 = por %p115, %p116
      %s119 = sadd.s32 %s118, 1
      %p122 = scmp.eq.s32.totalorder %s21, 1
      %p123 = scmp.ne.s32.totalorder %s118, %s120
      %p124 = scmp.eq.s32.totalorder %s21, 0
      %p125 = por %p123, %p124
      %p126 = scmp.ne.s32.totalorder %s118, %s120
      %p127 = scmp.eq.s32.totalorder %s26, 1
      %p128 = por %p126, %p127
      %p129 = scmp.ne.s32.totalorder %s120, %s121
      %p130 = scmp.eq.s32.totalorder %s26, 0
      %p131 = por %p129, %p130
      %p132 = scmp.ne.s32.totalorder %s120, %s121
      %p133 = scmp.eq.s32.totalorder %s27, 1
      %p134 = por %p132, %p133
      %p136 = scmp.ne.s32.totalorder %s121, %s135
      %p137 = scmp.eq.s32.totalorder %s27, 0
      %p138 = por %p136, %p137
      %s140 = sadd.s32 %s139, 1
      %p143 = scmp.eq.s32.totalorder %s21, 1
      %p144 = scmp.ne.s32.totalorder %s139, %s141
      %p145 = scmp.eq.s32.totalorder %s21, 0
      %p146 = por %p144, %p145
      %p147 = scmp.ne.s32.totalorder %s139, %s141
      %p148 = scmp.eq.s32.totalorder %s26, 1
      %p149 = por %p147, %p148
      %p150 = scmp.ne.s32.totalorder %s141, %s142
      %p151 = scmp.eq.s32.totalorder %s26, 0
      %p152 = por %p150, %p151
      %p153 = scmp.ne.s32.totalorder %s141, %s142
      %p154 = scmp.eq.s32.totalorder %s27, 1
      %p155 = por %p153, %p154
      %p157 = scmp.ne.s32.totalorder %s142, %s156
      %p158 = scmp.eq.s32.totalorder %s27, 0
      %p159 = por %p157, %p158
      %s161 = sadd.s32 %s160, 1
      %p164 = scmp.eq.s32.totalorder %s21, 1
      %p165 = scmp.ne.s32.totalorder %s160, %s162
      %p166 = scmp.eq.s32.totalorder %s21, 0
      %p167 = por %p165, %p166
      %p168 = scmp.ne.s32.totalorder %s160, %s162
      %p169 = scmp.eq.s32.totalorder %s26, 1
      %p170 = por %p168, %p169
      %p171 = scmp.ne.s32.totalorder %s162, %s163
      %p172 = scmp.eq.s32.totalorder %s26, 0
      %p173 = por %p171, %p172
      %p174 = scmp.ne.s32.totalorder %s162, %s163
      %p175 = scmp.eq.s32.totalorder %s27, 1
      %p176 = por %p174, %p175
      %p178 = scmp.ne.s32.totalorder %s163, %s177
      %p179 = scmp.eq.s32.totalorder %s27, 0
      %p180 = por %p178, %p179
      %s182 = sadd.s32 %s181, 1
      %p185 = scmp.eq.s32.totalorder %s21, 1
      %p186 = scmp.ne.s32.totalorder %s181, %s183
      %p187 = scmp.eq.s32.totalorder %s21, 0
      %p188 = por %p186, %p187
      %p189 = scmp.ne.s32.totalorder %s181, %s183
      %p190 = scmp.eq.s32.totalorder %s26, 1
      %p191 = por %p189, %p190
      %p192 = scmp.ne.s32.totalorder %s183, %s184
      %p193 = scmp.eq.s32.totalorder %s26, 0
      %p194 = por %p192, %p193
      %p195 = scmp.ne.s32.totalorder %s183, %s184
      %p196 = scmp.eq.s32.totalorder %s27, 1
      %p197 = por %p195, %p196
      %p199 = scmp.ne.s32.totalorder %s184, %s198
      %p200 = scmp.eq.s32.totalorder %s27, 0
      %p201 = por %p199, %p200
      %s203 = sadd.s32 %s202, 1
      %p206 = scmp.eq.s32.totalorder %s21, 1
      %p207 = scmp.ne.s32.totalorder %s202, %s204
      %p208 = scmp.eq.s32.totalorder %s21, 0
      %p209 = por %p207, %p208
      %p210 = scmp.ne.s32.totalorder %s202, %s204
      %p211 = scmp.eq.s32.totalorder %s26, 1
      %p212 = por %p210, %p211
      %p213 = scmp.ne.s32.totalorder %s204, %s205
      %p214 = scmp.eq.s32.totalorder %s26, 0
      %p215 = por %p213, %p214
      %p216 = scmp.ne.s32.totalorder %s204, %s205
      %p217 = scmp.eq.s32.totalorder %s27, 1
      %p218 = por %p216, %p217
      %p220 = scmp.ne.s32.totalorder %s205, %s219
      %p221 = scmp.eq.s32.totalorder %s27, 0
      %p222 = por %p220, %p221
      %s224 = sadd.s32 %s223, 1
      %p227 = scmp.eq.s32.totalorder %s21, 1
      %p228 = scmp.ne.s32.totalorder %s223, %s225
      %p229 = scmp.eq.s32.totalorder %s21, 0
      %p230 = por %p228, %p229
      %p231 = scmp.ne.s32.totalorder %s223, %s225
      %p232 = scmp.eq.s32.totalorder %s26, 1
      %p233 = por %p231, %p232
      %p234 = scmp.ne.s32.totalorder %s225, %s226
      %p235 = scmp.eq.s32.totalorder %s26, 0
      %p236 = por %p234, %p235
      %p237 = scmp.ne.s32.totalorder %s225, %s226
      %p238 = scmp.eq.s32.totalorder %s27, 1
      %p239 = por %p237, %p238
      %p241 = scmp.ne.s32.totalorder %s226, %s240
      %p242 = scmp.eq.s32.totalorder %s27, 0
      %p243 = por %p241, %p242
      %s244 = ssub.s32 %s21, %s28
      %p245 = scmp.eq.s32.totalorder %s244, 0
      %s247 = sadd.s32 %s246, 1
      %s248 = scalar_select %p245, %s246, %s247
      %p251 = pneg %p245
      %p252 = scmp.eq.s32.totalorder %s21, 1
      %p253 = por %p251, %p252
      %p254 = scmp.ne.s32.totalorder %s246, %s249
      %p255 = scmp.eq.s32.totalorder %s21, 0
      %p256 = por %p254, %p255
      %p257 = scmp.ne.s32.totalorder %s246, %s249
      %p258 = scmp.eq.s32.totalorder %s26, 1
      %p259 = por %p257, %p258
      %p260 = scmp.ne.s32.totalorder %s249, %s250
      %p261 = scmp.eq.s32.totalorder %s26, 0
      %p262 = por %p260, %p261
      %p263 = scmp.ne.s32.totalorder %s249, %s250
      %p264 = scmp.eq.s32.totalorder %s27, 1
      %p265 = por %p263, %p264
      %p267 = scmp.ne.s32.totalorder %s250, %s266
      %p268 = scmp.eq.s32.totalorder %s27, 0
      %p269 = por %p267, %p268
      %p270 = scmp.le.s32.totalorder 1, %s21
      %p271 = scmp.lt.s32.totalorder %s21, 3
      %p272 = pnand %p270, %p271
      %p273 = pneg %p272
      // Predicated region
      $region9: #{tpu_custom_call.1} parent=5 // pred_check
        _
      $region10: #{tpu_custom_call.1} parent=5 // pred_check_branch
        %275 = sbr.rel (%p272) target = $region12
      $region11: #{tpu_custom_call.1} parent=5 // pred_region
        %s276 = ssub.s32 %s21, 1
        // Predicated region
        $region13: #{tpu_custom_call.1} parent=11 // pred_check
          %p277 = pneg %p68
        $region14: #{tpu_custom_call.1} parent=11 // pred_check_branch
          %279 = sbr.rel (%p277) target = $region16
        $region15: #{tpu_custom_call.1} parent=11 // pred_region
          _
        $region16: #{tpu_custom_call.1} parent=11 // pred_fallthru
          _
        // Predicated region
        $region17: #{tpu_custom_call.1} parent=11 // pred_check
          %p280 = pneg %p89
        $region18: #{tpu_custom_call.1} parent=11 // pred_check_branch
          %282 = sbr.rel (%p280) target = $region20
        $region19: #{tpu_custom_call.1} parent=11 // pred_region
          _
        $region20: #{tpu_custom_call.1} parent=11 // pred_fallthru
          _
        // Predicated region
        $region21: #{tpu_custom_call.1} parent=11 // pred_check
          %p283 = pneg %p110
        $region22: #{tpu_custom_call.1} parent=11 // pred_check_branch
          %285 = sbr.rel (%p283) target = $region24
        $region23: #{tpu_custom_call.1} parent=11 // pred_region
          _
        $region24: #{tpu_custom_call.1} parent=11 // pred_fallthru
          _
        // Predicated region
        $region25: #{tpu_custom_call.1} parent=11 // pred_check
          %p286 = pneg %p131
        $region26: #{tpu_custom_call.1} parent=11 // pred_check_branch
          %288 = sbr.rel (%p286) target = $region28
        $region27: #{tpu_custom_call.1} parent=11 // pred_region
          _
        $region28: #{tpu_custom_call.1} parent=11 // pred_fallthru
          _
        // Predicated region
        $region29: #{tpu_custom_call.1} parent=11 // pred_check
          %p289 = pneg %p152
        $region30: #{tpu_custom_call.1} parent=11 // pred_check_branch
          %291 = sbr.rel (%p289) target = $region32
        $region31: #{tpu_custom_call.1} parent=11 // pred_region
          _
        $region32: #{tpu_custom_call.1} parent=11 // pred_fallthru
          _
        // Predicated region
        $region33: #{tpu_custom_call.1} parent=11 // pred_check
          %p292 = pneg %p173
        $region34: #{tpu_custom_call.1} parent=11 // pred_check_branch
          %294 = sbr.rel (%p292) target = $region36
        $region35: #{tpu_custom_call.1} parent=11 // pred_region
          %s296 = ssub.s32 5120, 5120
          %297 = vsyncadd [#allocation6], %s296
          %s298 = sshll.u32 [#allocation5], 4
          %s299 = int_to_ptr.vmem [resolvable:$true] %s298
          %304 = dma.hbm_to_vmem [thread:$0]  %s6, 5120, %s299, [#allocation6], 64, 64, 4
        $region36: #{tpu_custom_call.1} parent=11 // pred_fallthru
          _
        // Predicated region
        $region37: #{tpu_custom_call.1} parent=11 // pred_check
          %p305 = pneg %p194
        $region38: #{tpu_custom_call.1} parent=11 // pred_check_branch
          %307 = sbr.rel (%p305) target = $region40
        $region39: #{tpu_custom_call.1} parent=11 // pred_region
          _
        $region40: #{tpu_custom_call.1} parent=11 // pred_fallthru
          _
        // Predicated region
        $region41: #{tpu_custom_call.1} parent=11 // pred_check
          %p308 = pneg %p215
        $region42: #{tpu_custom_call.1} parent=11 // pred_check_branch
          %310 = sbr.rel (%p308) target = $region44
        $region43: #{tpu_custom_call.1} parent=11 // pred_region
          %s312 = ssub.s32 10240, 10240
          %313 = vsyncadd [#allocation9], %s312
          %s314 = sshll.u32 [#allocation8], 4
          %s315 = int_to_ptr.vmem [resolvable:$true] %s314
          %320 = dma.hbm_to_vmem [thread:$0]  %s8, 10240, %s315, [#allocation9], 128, 128, 8
        $region44: #{tpu_custom_call.1} parent=11 // pred_fallthru
          _
        // Predicated region
        $region45: #{tpu_custom_call.1} parent=11 // pred_check
          %p321 = pneg %p236
        $region46: #{tpu_custom_call.1} parent=11 // pred_check_branch
          %323 = sbr.rel (%p321) target = $region48
        $region47: #{tpu_custom_call.1} parent=11 // pred_region
          _
        $region48: #{tpu_custom_call.1} parent=11 // pred_fallthru
          _
      $region12: #{tpu_custom_call.1} parent=5 // pred_fallthru
        _
      %p324 = scmp.lt.s32.totalorder %s21, 2
      // Predicated region
      $region49: #{tpu_custom_call.1} parent=5 // pred_check
        %p325 = pneg %p324
      $region50: #{tpu_custom_call.1} parent=5 // pred_check_branch
        %327 = sbr.rel (%p325) target = $region52
      $region51: #{tpu_custom_call.1} parent=5 // pred_region
        // Predicated region
        $region53: #{tpu_custom_call.1} parent=51 // pred_check
          %p328 = pneg %p41
        $region54: #{tpu_custom_call.1} parent=51 // pred_check_branch
          %330 = sbr.rel (%p328) target = $region56
        $region55: #{tpu_custom_call.1} parent=51 // pred_region
          %p331 = scmp.lt.s32.totalorder %s21, 1
          %s332 = scalar_select %p331, %s21, 1
          %s333 = smul.addr %s332, 32
          %s334 = smul.addr %s333, 8
          %s335 = scalar_lea.vmem %s0, %s334
        $region56: #{tpu_custom_call.1} parent=51 // pred_fallthru
          _
      $region52: #{tpu_custom_call.1} parent=5 // pred_fallthru
        _
      %p336 = scmp.le.s32.totalorder 1, %s21
      %p337 = scmp.lt.s32.totalorder %s21, 3
      %p338 = pnand %p336, %p337
      %p339 = pneg %p338
      // Predicated region
      $region57: #{tpu_custom_call.1} parent=5 // pred_check
        _
      $region58: #{tpu_custom_call.1} parent=5 // pred_check_branch
        %341 = sbr.rel (%p338) target = $region60
      $region59: #{tpu_custom_call.1} parent=5 // pred_region
        %s342 = ssub.s32 %s21, 1
        // Predicated region
        $region61: #{tpu_custom_call.1} parent=59 // pred_check
          %p343 = pneg %p173
        $region62: #{tpu_custom_call.1} parent=59 // pred_check_branch
          %345 = sbr.rel (%p343) target = $region64
        $region63: #{tpu_custom_call.1} parent=59 // pred_region
          %346 = dma.done [#allocation6], 5120
        $region64: #{tpu_custom_call.1} parent=59 // pred_fallthru
          _
        // Predicated region
        $region65: #{tpu_custom_call.1} parent=59 // pred_check
          %p347 = pneg %p215
        $region66: #{tpu_custom_call.1} parent=59 // pred_check_branch
          %349 = sbr.rel (%p347) target = $region68
        $region67: #{tpu_custom_call.1} parent=59 // pred_region
          %350 = dma.done [#allocation9], 10240
        $region68: #{tpu_custom_call.1} parent=59 // pred_fallthru
          _
        %p351 = scmp.lt.s32.totalorder %s26, 1
        %s352 = scalar_select %p351, %s26, 1
        %s353 = smul.addr %s352, 32
        %s354 = smul.addr %s353, 8
        %s355 = scalar_lea.vmem %s0, %s354
        %p356 = pneg %p47
        %p357 = pneg %p44
        %p358 = pneg %p68
        %p359 = pneg %p65
        %p360 = pneg %p89
        %p361 = pneg %p86
        %p362 = pneg %p110
        %p363 = pneg %p107
        %p364 = pneg %p131
        %p365 = pneg %p128
        %p366 = pneg %p152
        %p367 = pneg %p149
        %p368 = pneg %p173
        %p369 = pneg %p170
        %p370 = pneg %p194
        %p371 = pneg %p191
        %p372 = pneg %p215
        %p373 = pneg %p212
        %p374 = pneg %p236
        %p375 = pneg %p233
        %p376 = pneg %p262
        %p377 = pneg %p259
        %s378 = sand.u32 %s249, 1
        %s379 = scalar_lea.sflag [#allocation7], %s378
        %s380 = sand.u32 %s249, 1
        %s381 = smul.addr %s380, 2
        %s382 = scalar_lea.vmem [#allocation10], %s381
        %p383 = scmp.lt.s32.totalorder %s26, 1
        %s384 = scalar_select %p383, %s26, 1
        %s385 = smul.addr %s384, 32
        %s386 = smul.addr %s385, 8
        %s387 = scalar_lea.vmem %s0, %s386
        %389 = vst [vmem:[#allocation3] sm:$0xff] 0
        %390 = vst [vmem:[#allocation3 + $0x88] sm:$0xff] 0
        %391 = vst [vmem:[#allocation2] sm:$0xff] 0
        %392 = vst [vmem:[#allocation2 + $0x88] sm:$0xff] 0
        %v393 = vld [vmem:[%s387] sm:$0xff]
        %v394 = vld [vmem:[%s387 + $0x8] sm:$0xff]
        %v395 = vld [vmem:[%s387 + $0x10] sm:$0xff]
        %v396 = vld [vmem:[%s387 + $0x18] sm:$0xff]
        %v397 = vld [vmem:[%s387 + $0x20] sm:$0xff]
        %v398 = vld [vmem:[%s387 + $0x28] sm:$0xff]
        %v399 = vld [vmem:[%s387 + $0x30] sm:$0xff]
        %v400 = vld [vmem:[%s387 + $0x38] sm:$0xff]
        %v401 = vld [vmem:[%s387 + $0x40] sm:$0xff]
        %v402 = vld [vmem:[%s387 + $0x48] sm:$0xff]
        %v403 = vld [vmem:[%s387 + $0x50] sm:$0xff]
        %v404 = vld [vmem:[%s387 + $0x58] sm:$0xff]
        %v405 = vld [vmem:[%s387 + $0x60] sm:$0xff]
        %v406 = vld [vmem:[%s387 + $0x68] sm:$0xff]
        %v407 = vld [vmem:[%s387 + $0x70] sm:$0xff]
        %v408 = vld [vmem:[%s387 + $0x78] sm:$0xff]
        %v409 = vld [vmem:[%s387 + $0x80] sm:$0xff]
        %v410 = vld [vmem:[%s387 + $0x88] sm:$0xff]
        %v411 = vld [vmem:[%s387 + $0x90] sm:$0xff]
        %v412 = vld [vmem:[%s387 + $0x98] sm:$0xff]
        %v413 = vld [vmem:[%s387 + $0xa0] sm:$0xff]
        %v414 = vld [vmem:[%s387 + $0xa8] sm:$0xff]
        %v415 = vld [vmem:[%s387 + $0xb0] sm:$0xff]
        %v416 = vld [vmem:[%s387 + $0xb8] sm:$0xff]
        %v417 = vld [vmem:[%s387 + $0xc0] sm:$0xff]
        %v418 = vld [vmem:[%s387 + $0xc8] sm:$0xff]
        %v419 = vld [vmem:[%s387 + $0xd0] sm:$0xff]
        %v420 = vld [vmem:[%s387 + $0xd8] sm:$0xff]
        %v421 = vld [vmem:[%s387 + $0xe0] sm:$0xff]
        %v422 = vld [vmem:[%s387 + $0xe8] sm:$0xff]
        %v423 = vld [vmem:[%s387 + $0xf0] sm:$0xff]
        %v424 = vld [vmem:[%s387 + $0xf8] sm:$0xff]
        %v425 = vpack.c.bf16 %v394, %v393
        %v426 = vpack.c.bf16 %v396, %v395
        %v427 = vpack.c.bf16 %v398, %v397
        %v428 = vpack.c.bf16 %v400, %v399
        %v429 = vpack.c.bf16 %v402, %v401
        %v430 = vpack.c.bf16 %v404, %v403
        %v431 = vpack.c.bf16 %v406, %v405
        %v432 = vpack.c.bf16 %v408, %v407
        %v433 = vpack.c.bf16 %v410, %v409
        %v434 = vpack.c.bf16 %v412, %v411
        %v435 = vpack.c.bf16 %v414, %v413
        %v436 = vpack.c.bf16 %v416, %v415
        %v437 = vpack.c.bf16 %v418, %v417
        %v438 = vpack.c.bf16 %v420, %v419
        %v439 = vpack.c.bf16 %v422, %v421
        %v440 = vpack.c.bf16 %v424, %v423
        %v441 = vld [vmem:[%s1] sm:$0x3]
        %vm442 = vcmask 31744
        %v444 = vsel %vm442, %v425, 0
        %v447 = vsel %vm442, %v426, 0
        %v450 = vsel %vm442, %v427, 0
        %v453 = vsel %vm442, %v428, 0
        %v456 = vsel %vm442, %v429, 0
        %v459 = vsel %vm442, %v430, 0
        %v462 = vsel %vm442, %v431, 0
        %v465 = vsel %vm442, %v432, 0
        %v468 = vsel %vm442, %v433, 0
        %v471 = vsel %vm442, %v434, 0
        %v474 = vsel %vm442, %v435, 0
        %v477 = vsel %vm442, %v436, 0
        %v480 = vsel %vm442, %v437, 0
        %v483 = vsel %vm442, %v438, 0
        %v486 = vsel %vm442, %v439, 0
        %v489 = vsel %vm442, %v440, 0
        %vm491 = vcmask 1041408
        %v493 = vsel %vm491, %v441, 0
        %495 = vmatprep.subr.bf16.mxu0 0
        %496 = vmatpush1.bf16.msra.mxu0 %v493
        %497 = vmatprep.subr.bf16.mxu0 0
        %498 = vmatpush1.bf16.msra.mxu0 0
        %499 = vmatprep.subr.bf16.mxu0 0
        %500 = vmatpush1.bf16.msra.mxu0 0
        %501 = vmatprep.subr.bf16.mxu0 0
        %502 = vmatpush1.bf16.msra.mxu0 0
        %503 = vmatprep.subr.bf16.mxu0 0
        %504 = vmatpush1.bf16.msra.mxu0 0
        %505 = vmatprep.subr.bf16.mxu0 0
        %506 = vmatpush1.bf16.msra.mxu0 0
        %507 = vmatprep.subr.bf16.mxu0 0
        %508 = vmatpush1.bf16.msra.mxu0 0
        %509 = vmatprep.subr.bf16.mxu0 0
        %510 = vmatpush1.bf16.msra.mxu0 0
        %511 = vmatprep.subr.bf16.mxu0 0
        %512 = vmatpush1.bf16.msra.mxu0 0
        %513 = vmatprep.subr.bf16.mxu0 0
        %514 = vmatpush1.bf16.msra.mxu0 0
        %515 = vmatprep.subr.bf16.mxu0 0
        %516 = vmatpush1.bf16.msra.mxu0 0
        %517 = vmatprep.subr.bf16.mxu0 0
        %518 = vmatpush1.bf16.msra.mxu0 0
        %519 = vmatprep.subr.bf16.mxu0 0
        %520 = vmatpush1.bf16.msra.mxu0 0
        %521 = vmatprep.subr.bf16.mxu0 0
        %522 = vmatpush1.bf16.msra.mxu0 0
        %523 = vmatprep.subr.bf16.mxu0 0
        %524 = vmatpush1.bf16.msra.mxu0 0
        %525 = vmatprep.subr.bf16.mxu0 0
        %526 = vmatpush1.bf16.msra.mxu0 0
        %527 = vmatprep.mubr.bf16.mxu0 0
        %528 = vmatmul.mubr.bf16.gmra.mrb[0].mxu0 %v444
        %v529 = vpop.f32.mrb[0].mxu0
        %v530 = vadd.f32 0.0, %v529
        %v531 = vpop.f32.mrb[0].mxu0
        %v532 = vpop.f32.mrb[0].mxu0
        %v533 = vadd.f32 0.0, %v532
        %v534 = vpop.f32.mrb[0].mxu0
        %535 = vmatprep.mubr.bf16.mxu0 0
        %536 = vmatmul.mubr.bf16.gmra.mrb[0].mxu0 %v447
        %v537 = vpop.f32.mrb[0].mxu0
        %v538 = vadd.f32 0.0, %v537
        %v539 = vpop.f32.mrb[0].mxu0
        %v540 = vpop.f32.mrb[0].mxu0
        %v541 = vadd.f32 0.0, %v540
        %v542 = vpop.f32.mrb[0].mxu0
        %543 = vmatprep.mubr.bf16.mxu0 0
        %544 = vmatmul.mubr.bf16.gmra.mrb[0].mxu0 %v450
        %v545 = vpop.f32.mrb[0].mxu0
        %v546 = vadd.f32 0.0, %v545
        %v547 = vpop.f32.mrb[0].mxu0
        %v548 = vpop.f32.mrb[0].mxu0
        %v549 = vadd.f32 0.0, %v548
        %v550 = vpop.f32.mrb[0].mxu0
        %551 = vmatprep.mubr.bf16.mxu0 0
        %552 = vmatmul.mubr.bf16.gmra.mrb[0].mxu0 %v453
        %v553 = vpop.f32.mrb[0].mxu0
        %v554 = vadd.f32 0.0, %v553
        %v555 = vpop.f32.mrb[0].mxu0
        %v556 = vpop.f32.mrb[0].mxu0
        %v557 = vadd.f32 0.0, %v556
        %v558 = vpop.f32.mrb[0].mxu0
        %559 = vmatprep.mubr.bf16.mxu0 0
        %560 = vmatmul.mubr.bf16.gmra.mrb[0].mxu0 %v456
        %v561 = vpop.f32.mrb[0].mxu0
        %v562 = vadd.f32 0.0, %v561
        %v563 = vpop.f32.mrb[0].mxu0
        %v564 = vpop.f32.mrb[0].mxu0
        %v565 = vadd.f32 0.0, %v564
        %v566 = vpop.f32.mrb[0].mxu0
        %567 = vmatprep.mubr.bf16.mxu0 0
        %568 = vmatmul.mubr.bf16.gmra.mrb[0].mxu0 %v459
        %v569 = vpop.f32.mrb[0].mxu0
        %v570 = vadd.f32 0.0, %v569
        %v571 = vpop.f32.mrb[0].mxu0
        %v572 = vpop.f32.mrb[0].mxu0
        %v573 = vadd.f32 0.0, %v572
        %v574 = vpop.f32.mrb[0].mxu0
        %575 = vmatprep.mubr.bf16.mxu0 0
        %576 = vmatmul.mubr.bf16.gmra.mrb[0].mxu0 %v462
        %v577 = vpop.f32.mrb[0].mxu0
        %v578 = vadd.f32 0.0, %v577
        %v579 = vpop.f32.mrb[0].mxu0
        %v580 = vpop.f32.mrb[0].mxu0
        %v581 = vadd.f32 0.0, %v580
        %v582 = vpop.f32.mrb[0].mxu0
        %583 = vmatprep.mubr.bf16.mxu0 0
        %584 = vmatmul.mubr.bf16.gmra.mrb[0].mxu0 %v465
        %v585 = vpop.f32.mrb[0].mxu0
        %v586 = vadd.f32 0.0, %v585
        %v587 = vpop.f32.mrb[0].mxu0
        %v588 = vpop.f32.mrb[0].mxu0
        %v589 = vadd.f32 0.0, %v588
        %v590 = vpop.f32.mrb[0].mxu0
        %591 = vmatprep.mubr.bf16.mxu0 0
        %592 = vmatmul.mubr.bf16.gmra.mrb[0].mxu0 %v468
        %v593 = vpop.f32.mrb[0].mxu0
        %v594 = vadd.f32 0.0, %v593
        %v595 = vpop.f32.mrb[0].mxu0
        %v596 = vpop.f32.mrb[0].mxu0
        %v597 = vadd.f32 0.0, %v596
        %v598 = vpop.f32.mrb[0].mxu0
        %599 = vmatprep.mubr.bf16.mxu0 0
        %600 = vmatmul.mubr.bf16.gmra.mrb[0].mxu0 %v471
        %v601 = vpop.f32.mrb[0].mxu0
        %v602 = vadd.f32 0.0, %v601
        %v603 = vpop.f32.mrb[0].mxu0
        %v604 = vpop.f32.mrb[0].mxu0
        %v605 = vadd.f32 0.0, %v604
        %v606 = vpop.f32.mrb[0].mxu0
        %607 = vmatprep.mubr.bf16.mxu0 0
        %608 = vmatmul.mubr.bf16.gmra.mrb[0].mxu0 %v474
        %v609 = vpop.f32.mrb[0].mxu0
        %v610 = vadd.f32 0.0, %v609
        %v611 = vpop.f32.mrb[0].mxu0
        %v612 = vpop.f32.mrb[0].mxu0
        %v613 = vadd.f32 0.0, %v612
        %v614 = vpop.f32.mrb[0].mxu0
        %615 = vmatprep.mubr.bf16.mxu0 0
        %616 = vmatmul.mubr.bf16.gmra.mrb[0].mxu0 %v477
        %v617 = vpop.f32.mrb[0].mxu0
        %v618 = vadd.f32 0.0, %v617
        %v619 = vpop.f32.mrb[0].mxu0
        %v620 = vpop.f32.mrb[0].mxu0
        %v621 = vadd.f32 0.0, %v620
        %v622 = vpop.f32.mrb[0].mxu0
        %623 = vmatprep.mubr.bf16.mxu0 0
        %624 = vmatmul.mubr.bf16.gmra.mrb[0].mxu0 %v480
        %v625 = vpop.f32.mrb[0].mxu0
        %v626 = vadd.f32 0.0, %v625
        %v627 = vpop.f32.mrb[0].mxu0
        %v628 = vpop.f32.mrb[0].mxu0
        %v629 = vadd.f32 0.0, %v628
        %v630 = vpop.f32.mrb[0].mxu0
        %631 = vmatprep.mubr.bf16.mxu0 0
        %632 = vmatmul.mubr.bf16.gmra.mrb[0].mxu0 %v483
        %v633 = vpop.f32.mrb[0].mxu0
        %v634 = vadd.f32 0.0, %v633
        %v635 = vpop.f32.mrb[0].mxu0
        %v636 = vpop.f32.mrb[0].mxu0
        %v637 = vadd.f32 0.0, %v636
        %v638 = vpop.f32.mrb[0].mxu0
        %639 = vmatprep.mubr.bf16.mxu0 0
        %640 = vmatmul.mubr.bf16.gmra.mrb[0].mxu0 %v486
        %v641 = vpop.f32.mrb[0].mxu0
        %v642 = vadd.f32 0.0, %v641
        %v643 = vpop.f32.mrb[0].mxu0
        %v644 = vpop.f32.mrb[0].mxu0
        %v645 = vadd.f32 0.0, %v644
        %v646 = vpop.f32.mrb[0].mxu0
        %647 = vmatprep.mubr.bf16.mxu0 0
        %648 = vmatmul.mubr.bf16.gmra.mrb[0].mxu0 %v489
        %v649 = vpop.f32.mrb[0].mxu0
        %v650 = vadd.f32 0.0, %v649
        %v651 = vpop.f32.mrb[0].mxu0
        %v652 = vpop.f32.mrb[0].mxu0
        %v653 = vadd.f32 0.0, %v652
        %v654 = vpop.f32.mrb[0].mxu0
        %655 = vdwg.mxu0
        %v656 = vpack.c.bf16 %v533, %v530
        %v657 = vpack.c.bf16 %v541, %v538
        %v658 = vpack.c.bf16 %v549, %v546
        %v659 = vpack.c.bf16 %v557, %v554
        %v660 = vpack.c.bf16 %v565, %v562
        %v661 = vpack.c.bf16 %v573, %v570
        %v662 = vpack.c.bf16 %v581, %v578
        %v663 = vpack.c.bf16 %v589, %v586
        %v664 = vpack.c.bf16 %v597, %v594
        %v665 = vpack.c.bf16 %v605, %v602
        %v666 = vpack.c.bf16 %v613, %v610
        %v667 = vpack.c.bf16 %v621, %v618
        %v668 = vpack.c.bf16 %v629, %v626
        %v669 = vpack.c.bf16 %v637, %v634
        %v670 = vpack.c.bf16 %v645, %v642
        %v671 = vpack.c.bf16 %v653, %v650
        %672 = vst [vmem:[#allocation2 + $0x8] sm:$0xff] %v656
        %673 = vst [vmem:[#allocation2 + $0x10] sm:$0xff] %v657
        %674 = vst [vmem:[#allocation2 + $0x18] sm:$0xff] %v658
        %675 = vst [vmem:[#allocation2 + $0x20] sm:$0xff] %v659
        %676 = vst [vmem:[#allocation2 + $0x28] sm:$0xff] %v660
        %677 = vst [vmem:[#allocation2 + $0x30] sm:$0xff] %v661
        %678 = vst [vmem:[#allocation2 + $0x38] sm:$0xff] %v662
        %679 = vst [vmem:[#allocation2 + $0x40] sm:$0xff] %v663
        %680 = vst [vmem:[#allocation2 + $0x48] sm:$0xff] %v664
        %681 = vst [vmem:[#allocation2 + $0x50] sm:$0xff] %v665
        %682 = vst [vmem:[#allocation2 + $0x58] sm:$0xff] %v666
        %683 = vst [vmem:[#allocation2 + $0x60] sm:$0xff] %v667
        %684 = vst [vmem:[#allocation2 + $0x68] sm:$0xff] %v668
        %685 = vst [vmem:[#allocation2 + $0x70] sm:$0xff] %v669
        %686 = vst [vmem:[#allocation2 + $0x78] sm:$0xff] %v670
        %687 = vst [vmem:[#allocation2 + $0x80] sm:$0xff] %v671
        %v688 = vld [vmem:[#allocation2] sm:$0x80]
        %v689 = vld [vmem:[#allocation2 + $0x8] sm:$0xff]
        %v690 = vld [vmem:[#allocation2 + $0x10] sm:$0xff]
        %v691 = vld [vmem:[#allocation2 + $0x18] sm:$0xff]
        %v692 = vld [vmem:[#allocation2 + $0x20] sm:$0xff]
        %v693 = vld [vmem:[#allocation2 + $0x28] sm:$0xff]
        %v694 = vld [vmem:[#allocation2 + $0x30] sm:$0xff]
        %v695 = vld [vmem:[#allocation2 + $0x38] sm:$0xff]
        %v696 = vld [vmem:[#allocation2 + $0x40] sm:$0xff]
        %v697 = vld [vmem:[#allocation2 + $0x48] sm:$0xff]
        %v698 = vld [vmem:[#allocation2 + $0x50] sm:$0xff]
        %v699 = vld [vmem:[#allocation2 + $0x58] sm:$0xff]
        %v700 = vld [vmem:[#allocation2 + $0x60] sm:$0xff]
        %v701 = vld [vmem:[#allocation2 + $0x68] sm:$0xff]
        %v702 = vld [vmem:[#allocation2 + $0x70] sm:$0xff]
        %v703 = vld [vmem:[#allocation2 + $0x78] sm:$0xff]
        %v704 = vld [vmem:[#allocation2 + $0x80] sm:$0x7f]
        %vm722 = vcmask 1043456
        %v723 = vrot.slane %v688, 4
        %v724 = vrot.slane %v689, 4
        %v725 = vsel %vm722, %v723, %v724
        %v726 = vrot.slane %v690, 4
        %v727 = vsel %vm722, %v724, %v726
        %v728 = vrot.slane %v691, 4
        %v729 = vsel %vm722, %v726, %v728
        %v730 = vrot.slane %v692, 4
        %v731 = vsel %vm722, %v728, %v730
        %v732 = vrot.slane %v693, 4
        %v733 = vsel %vm722, %v730, %v732
        %v734 = vrot.slane %v694, 4
        %v735 = vsel %vm722, %v732, %v734
        %v736 = vrot.slane %v695, 4
        %v737 = vsel %vm722, %v734, %v736
        %v738 = vrot.slane %v696, 4
        %v739 = vsel %vm722, %v736, %v738
        %v740 = vrot.slane %v697, 4
        %v741 = vsel %vm722, %v738, %v740
        %v742 = vrot.slane %v698, 4
        %v743 = vsel %vm722, %v740, %v742
        %v744 = vrot.slane %v699, 4
        %v745 = vsel %vm722, %v742, %v744
        %v746 = vrot.slane %v700, 4
        %v747 = vsel %vm722, %v744, %v746
        %v748 = vrot.slane %v701, 4
        %v749 = vsel %vm722, %v746, %v748
        %v750 = vrot.slane %v702, 4
        %v751 = vsel %vm722, %v748, %v750
        %v752 = vrot.slane %v703, 4
        %v753 = vsel %vm722, %v750, %v752
        %v754 = vrot.slane %v704, 4
        %v755 = vsel %vm722, %v752, %v754
        %v773 = vunpack.c.l.bf16 %v725
        %v774 = vunpack.c.h.bf16 %v725
        %v775 = vunpack.c.l.bf16 %v727
        %v776 = vunpack.c.h.bf16 %v727
        %v777 = vunpack.c.l.bf16 %v729
        %v778 = vunpack.c.h.bf16 %v729
        %v779 = vunpack.c.l.bf16 %v731
        %v780 = vunpack.c.h.bf16 %v731
        %v781 = vunpack.c.l.bf16 %v733
        %v782 = vunpack.c.h.bf16 %v733
        %v783 = vunpack.c.l.bf16 %v735
        %v784 = vunpack.c.h.bf16 %v735
        %v785 = vunpack.c.l.bf16 %v737
        %v786 = vunpack.c.h.bf16 %v737
        %v787 = vunpack.c.l.bf16 %v739
        %v788 = vunpack.c.h.bf16 %v739
        %v789 = vunpack.c.l.bf16 %v741
        %v790 = vunpack.c.h.bf16 %v741
        %v791 = vunpack.c.l.bf16 %v743
        %v792 = vunpack.c.h.bf16 %v743
        %v793 = vunpack.c.l.bf16 %v745
        %v794 = vunpack.c.h.bf16 %v745
        %v795 = vunpack.c.l.bf16 %v747
        %v796 = vunpack.c.h.bf16 %v747
        %v797 = vunpack.c.l.bf16 %v749
        %v798 = vunpack.c.h.bf16 %v749
        %v799 = vunpack.c.l.bf16 %v751
        %v800 = vunpack.c.h.bf16 %v751
        %v801 = vunpack.c.l.bf16 %v753
        %v802 = vunpack.c.h.bf16 %v753
        %v803 = vunpack.c.l.bf16 %v755
        %v804 = vunpack.c.h.bf16 %v755
        %v805 = vunpack.c.l.bf16 %v754
        %v806 = vld [vmem:[%s2] sm:$0x1]
        %v808 = vlaneseq
        %v809 = vshrl.u32 %v808, 7
        %v810 = vsub.s32 0, %v809
        %v811 = vrot.slane %v806, %v810
        %v813 = vmul.f32 %v773, %v811
        %v814 = vmul.f32 %v774, %v811
        %v815 = vmul.f32 %v775, %v811
        %v816 = vmul.f32 %v776, %v811
        %v817 = vmul.f32 %v777, %v811
        %v818 = vmul.f32 %v778, %v811
        %v819 = vmul.f32 %v779, %v811
        %v820 = vmul.f32 %v780, %v811
        %v821 = vmul.f32 %v781, %v811
        %v822 = vmul.f32 %v782, %v811
        %v823 = vmul.f32 %v783, %v811
        %v824 = vmul.f32 %v784, %v811
        %v825 = vmul.f32 %v785, %v811
        %v826 = vmul.f32 %v786, %v811
        %v827 = vmul.f32 %v787, %v811
        %v828 = vmul.f32 %v788, %v811
        %v829 = vmul.f32 %v789, %v811
        %v830 = vmul.f32 %v790, %v811
        %v831 = vmul.f32 %v791, %v811
        %v832 = vmul.f32 %v792, %v811
        %v833 = vmul.f32 %v793, %v811
        %v834 = vmul.f32 %v794, %v811
        %v835 = vmul.f32 %v795, %v811
        %v836 = vmul.f32 %v796, %v811
        %v837 = vmul.f32 %v797, %v811
        %v838 = vmul.f32 %v798, %v811
        %v839 = vmul.f32 %v799, %v811
        %v840 = vmul.f32 %v800, %v811
        %v841 = vmul.f32 %v801, %v811
        %v842 = vmul.f32 %v802, %v811
        %v843 = vmul.f32 %v803, %v811
        %v844 = vmul.f32 %v804, %v811
        %v845 = vmul.f32 %v805, %v811
        %v846 = vadd.f32 %v813, 0.0
        %v847 = vadd.f32 %v814, 0.0
        %v848 = vadd.f32 %v815, 0.0
        %v849 = vadd.f32 %v816, 0.0
        %v850 = vadd.f32 %v817, 0.0
        %v851 = vadd.f32 %v818, 0.0
        %v852 = vadd.f32 %v819, 0.0
        %v853 = vadd.f32 %v820, 0.0
        %v854 = vadd.f32 %v821, 0.0
        %v855 = vadd.f32 %v822, 0.0
        %v856 = vadd.f32 %v823, 0.0
        %v857 = vadd.f32 %v824, 0.0
        %v858 = vadd.f32 %v825, 0.0
        %v859 = vadd.f32 %v826, 0.0
        %v860 = vadd.f32 %v827, 0.0
        %v861 = vadd.f32 %v828, 0.0
        %v862 = vadd.f32 %v829, 0.0
        %v863 = vadd.f32 %v830, 0.0
        %v864 = vadd.f32 %v831, 0.0
        %v865 = vadd.f32 %v832, 0.0
        %v866 = vadd.f32 %v833, 0.0
        %v867 = vadd.f32 %v834, 0.0
        %v868 = vadd.f32 %v835, 0.0
        %v869 = vadd.f32 %v836, 0.0
        %v870 = vadd.f32 %v837, 0.0
        %v871 = vadd.f32 %v838, 0.0
        %v872 = vadd.f32 %v839, 0.0
        %v873 = vadd.f32 %v840, 0.0
        %v874 = vadd.f32 %v841, 0.0
        %v875 = vadd.f32 %v842, 0.0
        %v876 = vadd.f32 %v843, 0.0
        %v877 = vadd.f32 %v844, 0.0
        %v878 = vadd.f32 %v845, 0.0
        %v879 = vld [vmem:[#allocation2 + $0x80] sm:$0xff]
        %v881 = vrot.slane %v879, 4
        %v882 = vsel %vm722, %v752, %v881
        %v885 = vunpack.c.l.bf16 %v882
        %v886 = vunpack.c.h.bf16 %v882
        %v887 = vunpack.c.l.bf16 %v881
        %s888 = scalar_lea.vmem %s2, 1
        %v889 = vld [vmem:[%s888] sm:$0x1]
        %v891 = vlaneseq
        %v892 = vshrl.u32 %v891, 7
        %v893 = vsub.s32 0, %v892
        %v894 = vrot.slane %v889, %v893
        %v896 = vmul.f32 %v773, %v894
        %v897 = vmul.f32 %v774, %v894
        %v898 = vmul.f32 %v775, %v894
        %v899 = vmul.f32 %v776, %v894
        %v900 = vmul.f32 %v777, %v894
        %v901 = vmul.f32 %v778, %v894
        %v902 = vmul.f32 %v779, %v894
        %v903 = vmul.f32 %v780, %v894
        %v904 = vmul.f32 %v781, %v894
        %v905 = vmul.f32 %v782, %v894
        %v906 = vmul.f32 %v783, %v894
        %v907 = vmul.f32 %v784, %v894
        %v908 = vmul.f32 %v785, %v894
        %v909 = vmul.f32 %v786, %v894
        %v910 = vmul.f32 %v787, %v894
        %v911 = vmul.f32 %v788, %v894
        %v912 = vmul.f32 %v789, %v894
        %v913 = vmul.f32 %v790, %v894
        %v914 = vmul.f32 %v791, %v894
        %v915 = vmul.f32 %v792, %v894
        %v916 = vmul.f32 %v793, %v894
        %v917 = vmul.f32 %v794, %v894
        %v918 = vmul.f32 %v795, %v894
        %v919 = vmul.f32 %v796, %v894
        %v920 = vmul.f32 %v797, %v894
        %v921 = vmul.f32 %v798, %v894
        %v922 = vmul.f32 %v799, %v894
        %v923 = vmul.f32 %v800, %v894
        %v924 = vmul.f32 %v801, %v894
        %v925 = vmul.f32 %v802, %v894
        %v926 = vmul.f32 %v885, %v894
        %v927 = vmul.f32 %v886, %v894
        %v928 = vmul.f32 %v887, %v894
        %vm962 = vcmask 1046528
        %v963 = vrot.slane %v896, 1
        %v964 = vrot.slane %v897, 1
        %v965 = vsel %vm962, %v963, %v964
        %v966 = vrot.slane %v898, 1
        %v967 = vsel %vm962, %v964, %v966
        %v968 = vrot.slane %v899, 1
        %v969 = vsel %vm962, %v966, %v968
        %v970 = vrot.slane %v900, 1
        %v971 = vsel %vm962, %v968, %v970
        %v972 = vrot.slane %v901, 1
        %v973 = vsel %vm962, %v970, %v972
        %v974 = vrot.slane %v902, 1
        %v975 = vsel %vm962, %v972, %v974
        %v976 = vrot.slane %v903, 1
        %v977 = vsel %vm962, %v974, %v976
        %v978 = vrot.slane %v904, 1
        %v979 = vsel %vm962, %v976, %v978
        %v980 = vrot.slane %v905, 1
        %v981 = vsel %vm962, %v978, %v980
        %v982 = vrot.slane %v906, 1
        %v983 = vsel %vm962, %v980, %v982
        %v984 = vrot.slane %v907, 1
        %v985 = vsel %vm962, %v982, %v984
        %v986 = vrot.slane %v908, 1
        %v987 = vsel %vm962, %v984, %v986
        %v988 = vrot.slane %v909, 1
        %v989 = vsel %vm962, %v986, %v988
        %v990 = vrot.slane %v910, 1
        %v991 = vsel %vm962, %v988, %v990
        %v992 = vrot.slane %v911, 1
        %v993 = vsel %vm962, %v990, %v992
        %v994 = vrot.slane %v912, 1
        %v995 = vsel %vm962, %v992, %v994
        %v996 = vrot.slane %v913, 1
        %v997 = vsel %vm962, %v994, %v996
        %v998 = vrot.slane %v914, 1
        %v999 = vsel %vm962, %v996, %v998
        %v1000 = vrot.slane %v915, 1
        %v1001 = vsel %vm962, %v998, %v1000
        %v1002 = vrot.slane %v916, 1
        %v1003 = vsel %vm962, %v1000, %v1002
        %v1004 = vrot.slane %v917, 1
        %v1005 = vsel %vm962, %v1002, %v1004
        %v1006 = vrot.slane %v918, 1
        %v1007 = vsel %vm962, %v1004, %v1006
        %v1008 = vrot.slane %v919, 1
        %v1009 = vsel %vm962, %v1006, %v1008
        %v1010 = vrot.slane %v920, 1
        %v1011 = vsel %vm962, %v1008, %v1010
        %v1012 = vrot.slane %v921, 1
        %v1013 = vsel %vm962, %v1010, %v1012
        %v1014 = vrot.slane %v922, 1
        %v1015 = vsel %vm962, %v1012, %v1014
        %v1016 = vrot.slane %v923, 1
        %v1017 = vsel %vm962, %v1014, %v1016
        %v1018 = vrot.slane %v924, 1
        %v1019 = vsel %vm962, %v1016, %v1018
        %v1020 = vrot.slane %v925, 1
        %v1021 = vsel %vm962, %v1018, %v1020
        %v1022 = vrot.slane %v926, 1
        %v1023 = vsel %vm962, %v1020, %v1022
        %v1024 = vrot.slane %v927, 1
        %v1025 = vsel %vm962, %v1022, %v1024
        %v1026 = vrot.slane %v928, 1
        %v1027 = vsel %vm962, %v1024, %v1026
        %v1061 = vadd.f32 %v846, %v965
        %v1062 = vadd.f32 %v847, %v967
        %v1063 = vadd.f32 %v848, %v969
        %v1064 = vadd.f32 %v849, %v971
        %v1065 = vadd.f32 %v850, %v973
        %v1066 = vadd.f32 %v851, %v975
        %v1067 = vadd.f32 %v852, %v977
        %v1068 = vadd.f32 %v853, %v979
        %v1069 = vadd.f32 %v854, %v981
        %v1070 = vadd.f32 %v855, %v983
        %v1071 = vadd.f32 %v856, %v985
        %v1072 = vadd.f32 %v857, %v987
        %v1073 = vadd.f32 %v858, %v989
        %v1074 = vadd.f32 %v859, %v991
        %v1075 = vadd.f32 %v860, %v993
        %v1076 = vadd.f32 %v861, %v995
        %v1077 = vadd.f32 %v862, %v997
        %v1078 = vadd.f32 %v863, %v999
        %v1079 = vadd.f32 %v864, %v1001
        %v1080 = vadd.f32 %v865, %v1003
        %v1081 = vadd.f32 %v866, %v1005
        %v1082 = vadd.f32 %v867, %v1007
        %v1083 = vadd.f32 %v868, %v1009
        %v1084 = vadd.f32 %v869, %v1011
        %v1085 = vadd.f32 %v870, %v1013
        %v1086 = vadd.f32 %v871, %v1015
        %v1087 = vadd.f32 %v872, %v1017
        %v1088 = vadd.f32 %v873, %v1019
        %v1089 = vadd.f32 %v874, %v1021
        %v1090 = vadd.f32 %v875, %v1023
        %v1091 = vadd.f32 %v876, %v1025
        %v1092 = vadd.f32 %v877, %v1027
        %v1093 = vadd.f32 %v878, %v1026
        %v1094 = vunpack.c.l.bf16 %v689
        %v1095 = vunpack.c.h.bf16 %v689
        %v1096 = vunpack.c.l.bf16 %v690
        %v1097 = vunpack.c.h.bf16 %v690
        %v1098 = vunpack.c.l.bf16 %v691
        %v1099 = vunpack.c.h.bf16 %v691
        %v1100 = vunpack.c.l.bf16 %v692
        %v1101 = vunpack.c.h.bf16 %v692
        %v1102 = vunpack.c.l.bf16 %v693
        %v1103 = vunpack.c.h.bf16 %v693
        %v1104 = vunpack.c.l.bf16 %v694
        %v1105 = vunpack.c.h.bf16 %v694
        %v1106 = vunpack.c.l.bf16 %v695
        %v1107 = vunpack.c.h.bf16 %v695
        %v1108 = vunpack.c.l.bf16 %v696
        %v1109 = vunpack.c.h.bf16 %v696
        %v1110 = vunpack.c.l.bf16 %v697
        %v1111 = vunpack.c.h.bf16 %v697
        %v1112 = vunpack.c.l.bf16 %v698
        %v1113 = vunpack.c.h.bf16 %v698
        %v1114 = vunpack.c.l.bf16 %v699
        %v1115 = vunpack.c.h.bf16 %v699
        %v1116 = vunpack.c.l.bf16 %v700
        %v1117 = vunpack.c.h.bf16 %v700
        %v1118 = vunpack.c.l.bf16 %v701
        %v1119 = vunpack.c.h.bf16 %v701
        %v1120 = vunpack.c.l.bf16 %v702
        %v1121 = vunpack.c.h.bf16 %v702
        %v1122 = vunpack.c.l.bf16 %v703
        %v1123 = vunpack.c.h.bf16 %v703
        %v1124 = vunpack.c.l.bf16 %v879
        %v1125 = vunpack.c.h.bf16 %v879
        %s1126 = scalar_lea.vmem %s2, 2
        %v1127 = vld [vmem:[%s1126] sm:$0x1]
        %v1129 = vlaneseq
        %v1130 = vshrl.u32 %v1129, 7
        %v1131 = vsub.s32 0, %v1130
        %v1132 = vrot.slane %v1127, %v1131
        %v1134 = vmul.f32 %v1094, %v1132
        %v1135 = vmul.f32 %v1095, %v1132
        %v1136 = vmul.f32 %v1096, %v1132
        %v1137 = vmul.f32 %v1097, %v1132
        %v1138 = vmul.f32 %v1098, %v1132
        %v1139 = vmul.f32 %v1099, %v1132
        %v1140 = vmul.f32 %v1100, %v1132
        %v1141 = vmul.f32 %v1101, %v1132
        %v1142 = vmul.f32 %v1102, %v1132
        %v1143 = vmul.f32 %v1103, %v1132
        %v1144 = vmul.f32 %v1104, %v1132
        %v1145 = vmul.f32 %v1105, %v1132
        %v1146 = vmul.f32 %v1106, %v1132
        %v1147 = vmul.f32 %v1107, %v1132
        %v1148 = vmul.f32 %v1108, %v1132
        %v1149 = vmul.f32 %v1109, %v1132
        %v1150 = vmul.f32 %v1110, %v1132
        %v1151 = vmul.f32 %v1111, %v1132
        %v1152 = vmul.f32 %v1112, %v1132
        %v1153 = vmul.f32 %v1113, %v1132
        %v1154 = vmul.f32 %v1114, %v1132
        %v1155 = vmul.f32 %v1115, %v1132
        %v1156 = vmul.f32 %v1116, %v1132
        %v1157 = vmul.f32 %v1117, %v1132
        %v1158 = vmul.f32 %v1118, %v1132
        %v1159 = vmul.f32 %v1119, %v1132
        %v1160 = vmul.f32 %v1120, %v1132
        %v1161 = vmul.f32 %v1121, %v1132
        %v1162 = vmul.f32 %v1122, %v1132
        %v1163 = vmul.f32 %v1123, %v1132
        %v1164 = vmul.f32 %v1124, %v1132
        %v1165 = vmul.f32 %v1125, %v1132
        %vm1198 = vcmask 1045504
        %v1199 = vrot.slane %v1134, 2
        %v1200 = vrot.slane %v1135, 2
        %v1201 = vsel %vm1198, %v1199, %v1200
        %v1202 = vrot.slane %v1136, 2
        %v1203 = vsel %vm1198, %v1200, %v1202
        %v1204 = vrot.slane %v1137, 2
        %v1205 = vsel %vm1198, %v1202, %v1204
        %v1206 = vrot.slane %v1138, 2
        %v1207 = vsel %vm1198, %v1204, %v1206
        %v1208 = vrot.slane %v1139, 2
        %v1209 = vsel %vm1198, %v1206, %v1208
        %v1210 = vrot.slane %v1140, 2
        %v1211 = vsel %vm1198, %v1208, %v1210
        %v1212 = vrot.slane %v1141, 2
        %v1213 = vsel %vm1198, %v1210, %v1212
        %v1214 = vrot.slane %v1142, 2
        %v1215 = vsel %vm1198, %v1212, %v1214
        %v1216 = vrot.slane %v1143, 2
        %v1217 = vsel %vm1198, %v1214, %v1216
        %v1218 = vrot.slane %v1144, 2
        %v1219 = vsel %vm1198, %v1216, %v1218
        %v1220 = vrot.slane %v1145, 2
        %v1221 = vsel %vm1198, %v1218, %v1220
        %v1222 = vrot.slane %v1146, 2
        %v1223 = vsel %vm1198, %v1220, %v1222
        %v1224 = vrot.slane %v1147, 2
        %v1225 = vsel %vm1198, %v1222, %v1224
        %v1226 = vrot.slane %v1148, 2
        %v1227 = vsel %vm1198, %v1224, %v1226
        %v1228 = vrot.slane %v1149, 2
        %v1229 = vsel %vm1198, %v1226, %v1228
        %v1230 = vrot.slane %v1150, 2
        %v1231 = vsel %vm1198, %v1228, %v1230
        %v1232 = vrot.slane %v1151, 2
        %v1233 = vsel %vm1198, %v1230, %v1232
        %v1234 = vrot.slane %v1152, 2
        %v1235 = vsel %vm1198, %v1232, %v1234
        %v1236 = vrot.slane %v1153, 2
        %v1237 = vsel %vm1198, %v1234, %v1236
        %v1238 = vrot.slane %v1154, 2
        %v1239 = vsel %vm1198, %v1236, %v1238
        %v1240 = vrot.slane %v1155, 2
        %v1241 = vsel %vm1198, %v1238, %v1240
        %v1242 = vrot.slane %v1156, 2
        %v1243 = vsel %vm1198, %v1240, %v1242
        %v1244 = vrot.slane %v1157, 2
        %v1245 = vsel %vm1198, %v1242, %v1244
        %v1246 = vrot.slane %v1158, 2
        %v1247 = vsel %vm1198, %v1244, %v1246
        %v1248 = vrot.slane %v1159, 2
        %v1249 = vsel %vm1198, %v1246, %v1248
        %v1250 = vrot.slane %v1160, 2
        %v1251 = vsel %vm1198, %v1248, %v1250
        %v1252 = vrot.slane %v1161, 2
        %v1253 = vsel %vm1198, %v1250, %v1252
        %v1254 = vrot.slane %v1162, 2
        %v1255 = vsel %vm1198, %v1252, %v1254
        %v1256 = vrot.slane %v1163, 2
        %v1257 = vsel %vm1198, %v1254, %v1256
        %v1258 = vrot.slane %v1164, 2
        %v1259 = vsel %vm1198, %v1256, %v1258
        %v1260 = vrot.slane %v1165, 2
        %v1261 = vsel %vm1198, %v1258, %v1260
        %v1295 = vadd.f32 %v1061, %v1199
        %v1296 = vadd.f32 %v1062, %v1201
        %v1297 = vadd.f32 %v1063, %v1203
        %v1298 = vadd.f32 %v1064, %v1205
        %v1299 = vadd.f32 %v1065, %v1207
        %v1300 = vadd.f32 %v1066, %v1209
        %v1301 = vadd.f32 %v1067, %v1211
        %v1302 = vadd.f32 %v1068, %v1213
        %v1303 = vadd.f32 %v1069, %v1215
        %v1304 = vadd.f32 %v1070, %v1217
        %v1305 = vadd.f32 %v1071, %v1219
        %v1306 = vadd.f32 %v1072, %v1221
        %v1307 = vadd.f32 %v1073, %v1223
        %v1308 = vadd.f32 %v1074, %v1225
        %v1309 = vadd.f32 %v1075, %v1227
        %v1310 = vadd.f32 %v1076, %v1229
        %v1311 = vadd.f32 %v1077, %v1231
        %v1312 = vadd.f32 %v1078, %v1233
        %v1313 = vadd.f32 %v1079, %v1235
        %v1314 = vadd.f32 %v1080, %v1237
        %v1315 = vadd.f32 %v1081, %v1239
        %v1316 = vadd.f32 %v1082, %v1241
        %v1317 = vadd.f32 %v1083, %v1243
        %v1318 = vadd.f32 %v1084, %v1245
        %v1319 = vadd.f32 %v1085, %v1247
        %v1320 = vadd.f32 %v1086, %v1249
        %v1321 = vadd.f32 %v1087, %v1251
        %v1322 = vadd.f32 %v1088, %v1253
        %v1323 = vadd.f32 %v1089, %v1255
        %v1324 = vadd.f32 %v1090, %v1257
        %v1325 = vadd.f32 %v1091, %v1259
        %v1326 = vadd.f32 %v1092, %v1261
        %v1327 = vadd.f32 %v1093, %v1260
        %v1328 = vld [vmem:[#allocation2 + $0x8] sm:$0xff]
        %v1329 = vld [vmem:[#allocation2 + $0x10] sm:$0xff]
        %v1330 = vld [vmem:[#allocation2 + $0x18] sm:$0xff]
        %v1331 = vld [vmem:[#allocation2 + $0x20] sm:$0xff]
        %v1332 = vld [vmem:[#allocation2 + $0x28] sm:$0xff]
        %v1333 = vld [vmem:[#allocation2 + $0x30] sm:$0xff]
        %v1334 = vld [vmem:[#allocation2 + $0x38] sm:$0xff]
        %v1335 = vld [vmem:[#allocation2 + $0x40] sm:$0xff]
        %v1336 = vld [vmem:[#allocation2 + $0x48] sm:$0xff]
        %v1337 = vld [vmem:[#allocation2 + $0x50] sm:$0xff]
        %v1338 = vld [vmem:[#allocation2 + $0x58] sm:$0xff]
        %v1339 = vld [vmem:[#allocation2 + $0x60] sm:$0xff]
        %v1340 = vld [vmem:[#allocation2 + $0x68] sm:$0xff]
        %v1341 = vld [vmem:[#allocation2 + $0x70] sm:$0xff]
        %v1342 = vld [vmem:[#allocation2 + $0x78] sm:$0xff]
        %v1343 = vld [vmem:[#allocation2 + $0x80] sm:$0xff]
        %v1344 = vld [vmem:[#allocation2 + $0x88] sm:$0x1]
        %v1345 = vunpack.c.l.bf16 %v1328
        %v1346 = vunpack.c.h.bf16 %v1328
        %v1347 = vunpack.c.l.bf16 %v1329
        %v1348 = vunpack.c.h.bf16 %v1329
        %v1349 = vunpack.c.l.bf16 %v1330
        %v1350 = vunpack.c.h.bf16 %v1330
        %v1351 = vunpack.c.l.bf16 %v1331
        %v1352 = vunpack.c.h.bf16 %v1331
        %v1353 = vunpack.c.l.bf16 %v1332
        %v1354 = vunpack.c.h.bf16 %v1332
        %v1355 = vunpack.c.l.bf16 %v1333
        %v1356 = vunpack.c.h.bf16 %v1333
        %v1357 = vunpack.c.l.bf16 %v1334
        %v1358 = vunpack.c.h.bf16 %v1334
        %v1359 = vunpack.c.l.bf16 %v1335
        %v1360 = vunpack.c.h.bf16 %v1335
        %v1361 = vunpack.c.l.bf16 %v1336
        %v1362 = vunpack.c.h.bf16 %v1336
        %v1363 = vunpack.c.l.bf16 %v1337
        %v1364 = vunpack.c.h.bf16 %v1337
        %v1365 = vunpack.c.l.bf16 %v1338
        %v1366 = vunpack.c.h.bf16 %v1338
        %v1367 = vunpack.c.l.bf16 %v1339
        %v1368 = vunpack.c.h.bf16 %v1339
        %v1369 = vunpack.c.l.bf16 %v1340
        %v1370 = vunpack.c.h.bf16 %v1340
        %v1371 = vunpack.c.l.bf16 %v1341
        %v1372 = vunpack.c.h.bf16 %v1341
        %v1373 = vunpack.c.l.bf16 %v1342
        %v1374 = vunpack.c.h.bf16 %v1342
        %v1375 = vunpack.c.l.bf16 %v1343
        %v1376 = vunpack.c.h.bf16 %v1343
        %v1377 = vunpack.c.l.bf16 %v1344
        %s1378 = scalar_lea.vmem %s2, 3
        %v1379 = vld [vmem:[%s1378] sm:$0x1]
        %v1381 = vlaneseq
        %v1382 = vshrl.u32 %v1381, 7
        %v1383 = vsub.s32 0, %v1382
        %v1384 = vrot.slane %v1379, %v1383
        %v1386 = vmul.f32 %v1345, %v1384
        %v1387 = vmul.f32 %v1346, %v1384
        %v1388 = vmul.f32 %v1347, %v1384
        %v1389 = vmul.f32 %v1348, %v1384
        %v1390 = vmul.f32 %v1349, %v1384
        %v1391 = vmul.f32 %v1350, %v1384
        %v1392 = vmul.f32 %v1351, %v1384
        %v1393 = vmul.f32 %v1352, %v1384
        %v1394 = vmul.f32 %v1353, %v1384
        %v1395 = vmul.f32 %v1354, %v1384
        %v1396 = vmul.f32 %v1355, %v1384
        %v1397 = vmul.f32 %v1356, %v1384
        %v1398 = vmul.f32 %v1357, %v1384
        %v1399 = vmul.f32 %v1358, %v1384
        %v1400 = vmul.f32 %v1359, %v1384
        %v1401 = vmul.f32 %v1360, %v1384
        %v1402 = vmul.f32 %v1361, %v1384
        %v1403 = vmul.f32 %v1362, %v1384
        %v1404 = vmul.f32 %v1363, %v1384
        %v1405 = vmul.f32 %v1364, %v1384
        %v1406 = vmul.f32 %v1365, %v1384
        %v1407 = vmul.f32 %v1366, %v1384
        %v1408 = vmul.f32 %v1367, %v1384
        %v1409 = vmul.f32 %v1368, %v1384
        %v1410 = vmul.f32 %v1369, %v1384
        %v1411 = vmul.f32 %v1370, %v1384
        %v1412 = vmul.f32 %v1371, %v1384
        %v1413 = vmul.f32 %v1372, %v1384
        %v1414 = vmul.f32 %v1373, %v1384
        %v1415 = vmul.f32 %v1374, %v1384
        %v1416 = vmul.f32 %v1375, %v1384
        %v1417 = vmul.f32 %v1376, %v1384
        %v1418 = vmul.f32 %v1377, %v1384
        %vm1452 = vcmask 1044480
        %v1453 = vrot.slane %v1386, 3
        %v1454 = vrot.slane %v1387, 3
        %v1455 = vsel %vm1452, %v1453, %v1454
        %v1456 = vrot.slane %v1388, 3
        %v1457 = vsel %vm1452, %v1454, %v1456
        %v1458 = vrot.slane %v1389, 3
        %v1459 = vsel %vm1452, %v1456, %v1458
        %v1460 = vrot.slane %v1390, 3
        %v1461 = vsel %vm1452, %v1458, %v1460
        %v1462 = vrot.slane %v1391, 3
        %v1463 = vsel %vm1452, %v1460, %v1462
        %v1464 = vrot.slane %v1392, 3
        %v1465 = vsel %vm1452, %v1462, %v1464
        %v1466 = vrot.slane %v1393, 3
        %v1467 = vsel %vm1452, %v1464, %v1466
        %v1468 = vrot.slane %v1394, 3
        %v1469 = vsel %vm1452, %v1466, %v1468
        %v1470 = vrot.slane %v1395, 3
        %v1471 = vsel %vm1452, %v1468, %v1470
        %v1472 = vrot.slane %v1396, 3
        %v1473 = vsel %vm1452, %v1470, %v1472
        %v1474 = vrot.slane %v1397, 3
        %v1475 = vsel %vm1452, %v1472, %v1474
        %v1476 = vrot.slane %v1398, 3
        %v1477 = vsel %vm1452, %v1474, %v1476
        %v1478 = vrot.slane %v1399, 3
        %v1479 = vsel %vm1452, %v1476, %v1478
        %v1480 = vrot.slane %v1400, 3
        %v1481 = vsel %vm1452, %v1478, %v1480
        %v1482 = vrot.slane %v1401, 3
        %v1483 = vsel %vm1452, %v1480, %v1482
        %v1484 = vrot.slane %v1402, 3
        %v1485 = vsel %vm1452, %v1482, %v1484
        %v1486 = vrot.slane %v1403, 3
        %v1487 = vsel %vm1452, %v1484, %v1486
        %v1488 = vrot.slane %v1404, 3
        %v1489 = vsel %vm1452, %v1486, %v1488
        %v1490 = vrot.slane %v1405, 3
        %v1491 = vsel %vm1452, %v1488, %v1490
        %v1492 = vrot.slane %v1406, 3
        %v1493 = vsel %vm1452, %v1490, %v1492
        %v1494 = vrot.slane %v1407, 3
        %v1495 = vsel %vm1452, %v1492, %v1494
        %v1496 = vrot.slane %v1408, 3
        %v1497 = vsel %vm1452, %v1494, %v1496
        %v1498 = vrot.slane %v1409, 3
        %v1499 = vsel %vm1452, %v1496, %v1498
        %v1500 = vrot.slane %v1410, 3
        %v1501 = vsel %vm1452, %v1498, %v1500
        %v1502 = vrot.slane %v1411, 3
        %v1503 = vsel %vm1452, %v1500, %v1502
        %v1504 = vrot.slane %v1412, 3
        %v1505 = vsel %vm1452, %v1502, %v1504
        %v1506 = vrot.slane %v1413, 3
        %v1507 = vsel %vm1452, %v1504, %v1506
        %v1508 = vrot.slane %v1414, 3
        %v1509 = vsel %vm1452, %v1506, %v1508
        %v1510 = vrot.slane %v1415, 3
        %v1511 = vsel %vm1452, %v1508, %v1510
        %v1512 = vrot.slane %v1416, 3
        %v1513 = vsel %vm1452, %v1510, %v1512
        %v1514 = vrot.slane %v1417, 3
        %v1515 = vsel %vm1452, %v1512, %v1514
        %v1516 = vrot.slane %v1418, 3
        %v1517 = vsel %vm1452, %v1514, %v1516
        %v1551 = vadd.f32 %v1295, %v1453
        %v1552 = vadd.f32 %v1296, %v1455
        %v1553 = vadd.f32 %v1297, %v1457
        %v1554 = vadd.f32 %v1298, %v1459
        %v1555 = vadd.f32 %v1299, %v1461
        %v1556 = vadd.f32 %v1300, %v1463
        %v1557 = vadd.f32 %v1301, %v1465
        %v1558 = vadd.f32 %v1302, %v1467
        %v1559 = vadd.f32 %v1303, %v1469
        %v1560 = vadd.f32 %v1304, %v1471
        %v1561 = vadd.f32 %v1305, %v1473
        %v1562 = vadd.f32 %v1306, %v1475
        %v1563 = vadd.f32 %v1307, %v1477
        %v1564 = vadd.f32 %v1308, %v1479
        %v1565 = vadd.f32 %v1309, %v1481
        %v1566 = vadd.f32 %v1310, %v1483
        %v1567 = vadd.f32 %v1311, %v1485
        %v1568 = vadd.f32 %v1312, %v1487
        %v1569 = vadd.f32 %v1313, %v1489
        %v1570 = vadd.f32 %v1314, %v1491
        %v1571 = vadd.f32 %v1315, %v1493
        %v1572 = vadd.f32 %v1316, %v1495
        %v1573 = vadd.f32 %v1317, %v1497
        %v1574 = vadd.f32 %v1318, %v1499
        %v1575 = vadd.f32 %v1319, %v1501
        %v1576 = vadd.f32 %v1320, %v1503
        %v1577 = vadd.f32 %v1321, %v1505
        %v1578 = vadd.f32 %v1322, %v1507
        %v1579 = vadd.f32 %v1323, %v1509
        %v1580 = vadd.f32 %v1324, %v1511
        %v1581 = vadd.f32 %v1325, %v1513
        %v1582 = vadd.f32 %v1326, %v1515
        %v1583 = vadd.f32 %v1327, %v1517
        %v1584 = vld [vmem:[#allocation2 + $0x8] sm:$0xfe]
        %v1585 = vunpack.c.l.bf16 %v1584
        %v1586 = vunpack.c.h.bf16 %v1584
        %s1587 = scalar_lea.vmem %s2, 4
        %v1588 = vld [vmem:[%s1587] sm:$0x1]
        %v1590 = vlaneseq
        %v1591 = vshrl.u32 %v1590, 7
        %v1592 = vsub.s32 0, %v1591
        %v1593 = vrot.slane %v1588, %v1592
        %v1595 = vmul.f32 %v1585, %v1593
        %v1596 = vmul.f32 %v1586, %v1593
        %v1597 = vmul.f32 %v1347, %v1593
        %v1598 = vmul.f32 %v1348, %v1593
        %v1599 = vmul.f32 %v1349, %v1593
        %v1600 = vmul.f32 %v1350, %v1593
        %v1601 = vmul.f32 %v1351, %v1593
        %v1602 = vmul.f32 %v1352, %v1593
        %v1603 = vmul.f32 %v1353, %v1593
        %v1604 = vmul.f32 %v1354, %v1593
        %v1605 = vmul.f32 %v1355, %v1593
        %v1606 = vmul.f32 %v1356, %v1593
        %v1607 = vmul.f32 %v1357, %v1593
        %v1608 = vmul.f32 %v1358, %v1593
        %v1609 = vmul.f32 %v1359, %v1593
        %v1610 = vmul.f32 %v1360, %v1593
        %v1611 = vmul.f32 %v1361, %v1593
        %v1612 = vmul.f32 %v1362, %v1593
        %v1613 = vmul.f32 %v1363, %v1593
        %v1614 = vmul.f32 %v1364, %v1593
        %v1615 = vmul.f32 %v1365, %v1593
        %v1616 = vmul.f32 %v1366, %v1593
        %v1617 = vmul.f32 %v1367, %v1593
        %v1618 = vmul.f32 %v1368, %v1593
        %v1619 = vmul.f32 %v1369, %v1593
        %v1620 = vmul.f32 %v1370, %v1593
        %v1621 = vmul.f32 %v1371, %v1593
        %v1622 = vmul.f32 %v1372, %v1593
        %v1623 = vmul.f32 %v1373, %v1593
        %v1624 = vmul.f32 %v1374, %v1593
        %v1625 = vmul.f32 %v1375, %v1593
        %v1626 = vmul.f32 %v1376, %v1593
        %v1627 = vmul.f32 %v1377, %v1593
        %vm1661 = vcmask 1043456
        %v1662 = vrot.slane %v1595, 4
        %v1663 = vrot.slane %v1596, 4
        %v1664 = vsel %vm1661, %v1662, %v1663
        %v1665 = vrot.slane %v1597, 4
        %v1666 = vsel %vm1661, %v1663, %v1665
        %v1667 = vrot.slane %v1598, 4
        %v1668 = vsel %vm1661, %v1665, %v1667
        %v1669 = vrot.slane %v1599, 4
        %v1670 = vsel %vm1661, %v1667, %v1669
        %v1671 = vrot.slane %v1600, 4
        %v1672 = vsel %vm1661, %v1669, %v1671
        %v1673 = vrot.slane %v1601, 4
        %v1674 = vsel %vm1661, %v1671, %v1673
        %v1675 = vrot.slane %v1602, 4
        %v1676 = vsel %vm1661, %v1673, %v1675
        %v1677 = vrot.slane %v1603, 4
        %v1678 = vsel %vm1661, %v1675, %v1677
        %v1679 = vrot.slane %v1604, 4
        %v1680 = vsel %vm1661, %v1677, %v1679
        %v1681 = vrot.slane %v1605, 4
        %v1682 = vsel %vm1661, %v1679, %v1681
        %v1683 = vrot.slane %v1606, 4
        %v1684 = vsel %vm1661, %v1681, %v1683
        %v1685 = vrot.slane %v1607, 4
        %v1686 = vsel %vm1661, %v1683, %v1685
        %v1687 = vrot.slane %v1608, 4
        %v1688 = vsel %vm1661, %v1685, %v1687
        %v1689 = vrot.slane %v1609, 4
        %v1690 = vsel %vm1661, %v1687, %v1689
        %v1691 = vrot.slane %v1610, 4
        %v1692 = vsel %vm1661, %v1689, %v1691
        %v1693 = vrot.slane %v1611, 4
        %v1694 = vsel %vm1661, %v1691, %v1693
        %v1695 = vrot.slane %v1612, 4
        %v1696 = vsel %vm1661, %v1693, %v1695
        %v1697 = vrot.slane %v1613, 4
        %v1698 = vsel %vm1661, %v1695, %v1697
        %v1699 = vrot.slane %v1614, 4
        %v1700 = vsel %vm1661, %v1697, %v1699
        %v1701 = vrot.slane %v1615, 4
        %v1702 = vsel %vm1661, %v1699, %v1701
        %v1703 = vrot.slane %v1616, 4
        %v1704 = vsel %vm1661, %v1701, %v1703
        %v1705 = vrot.slane %v1617, 4
        %v1706 = vsel %vm1661, %v1703, %v1705
        %v1707 = vrot.slane %v1618, 4
        %v1708 = vsel %vm1661, %v1705, %v1707
        %v1709 = vrot.slane %v1619, 4
        %v1710 = vsel %vm1661, %v1707, %v1709
        %v1711 = vrot.slane %v1620, 4
        %v1712 = vsel %vm1661, %v1709, %v1711
        %v1713 = vrot.slane %v1621, 4
        %v1714 = vsel %vm1661, %v1711, %v1713
        %v1715 = vrot.slane %v1622, 4
        %v1716 = vsel %vm1661, %v1713, %v1715
        %v1717 = vrot.slane %v1623, 4
        %v1718 = vsel %vm1661, %v1715, %v1717
        %v1719 = vrot.slane %v1624, 4
        %v1720 = vsel %vm1661, %v1717, %v1719
        %v1721 = vrot.slane %v1625, 4
        %v1722 = vsel %vm1661, %v1719, %v1721
        %v1723 = vrot.slane %v1626, 4
        %v1724 = vsel %vm1661, %v1721, %v1723
        %v1725 = vrot.slane %v1627, 4
        %v1726 = vsel %vm1661, %v1723, %v1725
        %v1760 = vadd.f32 %v1551, %v1662
        %v1761 = vadd.f32 %v1552, %v1664
        %v1762 = vadd.f32 %v1553, %v1666
        %v1763 = vadd.f32 %v1554, %v1668
        %v1764 = vadd.f32 %v1555, %v1670
        %v1765 = vadd.f32 %v1556, %v1672
        %v1766 = vadd.f32 %v1557, %v1674
        %v1767 = vadd.f32 %v1558, %v1676
        %v1768 = vadd.f32 %v1559, %v1678
        %v1769 = vadd.f32 %v1560, %v1680
        %v1770 = vadd.f32 %v1561, %v1682
        %v1771 = vadd.f32 %v1562, %v1684
        %v1772 = vadd.f32 %v1563, %v1686
        %v1773 = vadd.f32 %v1564, %v1688
        %v1774 = vadd.f32 %v1565, %v1690
        %v1775 = vadd.f32 %v1566, %v1692
        %v1776 = vadd.f32 %v1567, %v1694
        %v1777 = vadd.f32 %v1568, %v1696
        %v1778 = vadd.f32 %v1569, %v1698
        %v1779 = vadd.f32 %v1570, %v1700
        %v1780 = vadd.f32 %v1571, %v1702
        %v1781 = vadd.f32 %v1572, %v1704
        %v1782 = vadd.f32 %v1573, %v1706
        %v1783 = vadd.f32 %v1574, %v1708
        %v1784 = vadd.f32 %v1575, %v1710
        %v1785 = vadd.f32 %v1576, %v1712
        %v1786 = vadd.f32 %v1577, %v1714
        %v1787 = vadd.f32 %v1578, %v1716
        %v1788 = vadd.f32 %v1579, %v1718
        %v1789 = vadd.f32 %v1580, %v1720
        %v1790 = vadd.f32 %v1581, %v1722
        %v1791 = vadd.f32 %v1582, %v1724
        %v1792 = vadd.f32 %v1583, %v1726
        %v1793 = vld [vmem:[%s3] sm:$0x1]
        %v1795 = vlaneseq
        %v1796 = vshrl.u32 %v1795, 7
        %v1797 = vsub.s32 0, %v1796
        %v1798 = vrot.slane %v1793, %v1797
        %v1800 = vadd.f32 %v1760, %v1798
        %v1801 = vadd.f32 %v1761, %v1798
        %v1802 = vadd.f32 %v1762, %v1798
        %v1803 = vadd.f32 %v1763, %v1798
        %v1804 = vadd.f32 %v1764, %v1798
        %v1805 = vadd.f32 %v1765, %v1798
        %v1806 = vadd.f32 %v1766, %v1798
        %v1807 = vadd.f32 %v1767, %v1798
        %v1808 = vadd.f32 %v1768, %v1798
        %v1809 = vadd.f32 %v1769, %v1798
        %v1810 = vadd.f32 %v1770, %v1798
        %v1811 = vadd.f32 %v1771, %v1798
        %v1812 = vadd.f32 %v1772, %v1798
        %v1813 = vadd.f32 %v1773, %v1798
        %v1814 = vadd.f32 %v1774, %v1798
        %v1815 = vadd.f32 %v1775, %v1798
        %v1816 = vadd.f32 %v1776, %v1798
        %v1817 = vadd.f32 %v1777, %v1798
        %v1818 = vadd.f32 %v1778, %v1798
        %v1819 = vadd.f32 %v1779, %v1798
        %v1820 = vadd.f32 %v1780, %v1798
        %v1821 = vadd.f32 %v1781, %v1798
        %v1822 = vadd.f32 %v1782, %v1798
        %v1823 = vadd.f32 %v1783, %v1798
        %v1824 = vadd.f32 %v1784, %v1798
        %v1825 = vadd.f32 %v1785, %v1798
        %v1826 = vadd.f32 %v1786, %v1798
        %v1827 = vadd.f32 %v1787, %v1798
        %v1828 = vadd.f32 %v1788, %v1798
        %v1829 = vadd.f32 %v1789, %v1798
        %v1830 = vadd.f32 %v1790, %v1798
        %v1831 = vadd.f32 %v1791, %v1798
        %v1832 = vadd.f32 %v1792, %v1798
        %v1833 = vmax.f32 %v1800, 0.0
        %v1834 = vmax.f32 %v1801, 0.0
        %v1835 = vmax.f32 %v1802, 0.0
        %v1836 = vmax.f32 %v1803, 0.0
        %v1837 = vmax.f32 %v1804, 0.0
        %v1838 = vmax.f32 %v1805, 0.0
        %v1839 = vmax.f32 %v1806, 0.0
        %v1840 = vmax.f32 %v1807, 0.0
        %v1841 = vmax.f32 %v1808, 0.0
        %v1842 = vmax.f32 %v1809, 0.0
        %v1843 = vmax.f32 %v1810, 0.0
        %v1844 = vmax.f32 %v1811, 0.0
        %v1845 = vmax.f32 %v1812, 0.0
        %v1846 = vmax.f32 %v1813, 0.0
        %v1847 = vmax.f32 %v1814, 0.0
        %v1848 = vmax.f32 %v1815, 0.0
        %v1849 = vmax.f32 %v1816, 0.0
        %v1850 = vmax.f32 %v1817, 0.0
        %v1851 = vmax.f32 %v1818, 0.0
        %v1852 = vmax.f32 %v1819, 0.0
        %v1853 = vmax.f32 %v1820, 0.0
        %v1854 = vmax.f32 %v1821, 0.0
        %v1855 = vmax.f32 %v1822, 0.0
        %v1856 = vmax.f32 %v1823, 0.0
        %v1857 = vmax.f32 %v1824, 0.0
        %v1858 = vmax.f32 %v1825, 0.0
        %v1859 = vmax.f32 %v1826, 0.0
        %v1860 = vmax.f32 %v1827, 0.0
        %v1861 = vmax.f32 %v1828, 0.0
        %v1862 = vmax.f32 %v1829, 0.0
        %v1863 = vmax.f32 %v1830, 0.0
        %v1864 = vmax.f32 %v1831, 0.0
        %v1865 = vmax.f32 %v1832, 0.0
        %v1866 = vpack.c.bf16 %v1834, %v1833
        %v1867 = vpack.c.bf16 %v1836, %v1835
        %v1868 = vpack.c.bf16 %v1838, %v1837
        %v1869 = vpack.c.bf16 %v1840, %v1839
        %v1870 = vpack.c.bf16 %v1842, %v1841
        %v1871 = vpack.c.bf16 %v1844, %v1843
        %v1872 = vpack.c.bf16 %v1846, %v1845
        %v1873 = vpack.c.bf16 %v1848, %v1847
        %v1874 = vpack.c.bf16 %v1850, %v1849
        %v1875 = vpack.c.bf16 %v1852, %v1851
        %v1876 = vpack.c.bf16 %v1854, %v1853
        %v1877 = vpack.c.bf16 %v1856, %v1855
        %v1878 = vpack.c.bf16 %v1858, %v1857
        %v1879 = vpack.c.bf16 %v1860, %v1859
        %v1880 = vpack.c.bf16 %v1862, %v1861
        %v1881 = vpack.c.bf16 %v1864, %v1863
        %v1882 = vpack.c.bf16 %v1865, %v1865
        %vm1900 = vcmask 1044480
        %v1901 = vrot.slane %v1866, 3
        %v1902 = vrot.slane %v1867, 3
        %v1903 = vsel %vm1900, %v1901, %v1902
        %v1904 = vrot.slane %v1868, 3
        %v1905 = vsel %vm1900, %v1902, %v1904
        %v1906 = vrot.slane %v1869, 3
        %v1907 = vsel %vm1900, %v1904, %v1906
        %v1908 = vrot.slane %v1870, 3
        %v1909 = vsel %vm1900, %v1906, %v1908
        %v1910 = vrot.slane %v1871, 3
        %v1911 = vsel %vm1900, %v1908, %v1910
        %v1912 = vrot.slane %v1872, 3
        %v1913 = vsel %vm1900, %v1910, %v1912
        %v1914 = vrot.slane %v1873, 3
        %v1915 = vsel %vm1900, %v1912, %v1914
        %v1916 = vrot.slane %v1874, 3
        %v1917 = vsel %vm1900, %v1914, %v1916
        %v1918 = vrot.slane %v1875, 3
        %v1919 = vsel %vm1900, %v1916, %v1918
        %v1920 = vrot.slane %v1876, 3
        %v1921 = vsel %vm1900, %v1918, %v1920
        %v1922 = vrot.slane %v1877, 3
        %v1923 = vsel %vm1900, %v1920, %v1922
        %v1924 = vrot.slane %v1878, 3
        %v1925 = vsel %vm1900, %v1922, %v1924
        %v1926 = vrot.slane %v1879, 3
        %v1927 = vsel %vm1900, %v1924, %v1926
        %v1928 = vrot.slane %v1880, 3
        %v1929 = vsel %vm1900, %v1926, %v1928
        %v1930 = vrot.slane %v1881, 3
        %v1931 = vsel %vm1900, %v1928, %v1930
        %v1932 = vrot.slane %v1882, 3
        %v1933 = vsel %vm1900, %v1930, %v1932
        %1950 = vst [vmem:[#allocation3 + $0x8] sm:$0xff] %v1903
        %1951 = vst [vmem:[#allocation3 + $0x10] sm:$0xff] %v1905
        %1952 = vst [vmem:[#allocation3 + $0x18] sm:$0xff] %v1907
        %1953 = vst [vmem:[#allocation3 + $0x20] sm:$0xff] %v1909
        %1954 = vst [vmem:[#allocation3 + $0x28] sm:$0xff] %v1911
        %1955 = vst [vmem:[#allocation3 + $0x30] sm:$0xff] %v1913
        %1956 = vst [vmem:[#allocation3 + $0x38] sm:$0xff] %v1915
        %1957 = vst [vmem:[#allocation3 + $0x40] sm:$0xff] %v1917
        %1958 = vst [vmem:[#allocation3 + $0x48] sm:$0xff] %v1919
        %1959 = vst [vmem:[#allocation3 + $0x50] sm:$0xff] %v1921
        %1960 = vst [vmem:[#allocation3 + $0x58] sm:$0xff] %v1923
        %1961 = vst [vmem:[#allocation3 + $0x60] sm:$0xff] %v1925
        %1962 = vst [vmem:[#allocation3 + $0x68] sm:$0xff] %v1927
        %1963 = vst [vmem:[#allocation3 + $0x70] sm:$0xff] %v1929
        %1964 = vst [vmem:[#allocation3 + $0x78] sm:$0xff] %v1931
        %1965 = vst [vmem:[#allocation3 + $0x80] sm:$0xff] %v1933
        %v1966 = vld [vmem:[#allocation3] sm:$0xc0]
        %v1967 = vld [vmem:[#allocation3 + $0x8] sm:$0xff]
        %v1968 = vld [vmem:[#allocation3 + $0x10] sm:$0xff]
        %v1969 = vld [vmem:[#allocation3 + $0x18] sm:$0xff]
        %v1970 = vld [vmem:[#allocation3 + $0x20] sm:$0xff]
        %v1971 = vld [vmem:[#allocation3 + $0x28] sm:$0xff]
        %v1972 = vld [vmem:[#allocation3 + $0x30] sm:$0xff]
        %v1973 = vld [vmem:[#allocation3 + $0x38] sm:$0xff]
        %v1974 = vld [vmem:[#allocation3 + $0x40] sm:$0xff]
        %v1975 = vld [vmem:[#allocation3 + $0x48] sm:$0xff]
        %v1976 = vld [vmem:[#allocation3 + $0x50] sm:$0xff]
        %v1977 = vld [vmem:[#allocation3 + $0x58] sm:$0xff]
        %v1978 = vld [vmem:[#allocation3 + $0x60] sm:$0xff]
        %v1979 = vld [vmem:[#allocation3 + $0x68] sm:$0xff]
        %v1980 = vld [vmem:[#allocation3 + $0x70] sm:$0xff]
        %v1981 = vld [vmem:[#allocation3 + $0x78] sm:$0xff]
        %v1982 = vld [vmem:[#allocation3 + $0x80] sm:$0x3f]
        %vm2000 = vcmask 1041408
        %v2001 = vrot.slane %v1966, 6
        %v2002 = vrot.slane %v1967, 6
        %v2003 = vsel %vm2000, %v2001, %v2002
        %v2004 = vrot.slane %v1968, 6
        %v2005 = vsel %vm2000, %v2002, %v2004
        %v2006 = vrot.slane %v1969, 6
        %v2007 = vsel %vm2000, %v2004, %v2006
        %v2008 = vrot.slane %v1970, 6
        %v2009 = vsel %vm2000, %v2006, %v2008
        %v2010 = vrot.slane %v1971, 6
        %v2011 = vsel %vm2000, %v2008, %v2010
        %v2012 = vrot.slane %v1972, 6
        %v2013 = vsel %vm2000, %v2010, %v2012
        %v2014 = vrot.slane %v1973, 6
        %v2015 = vsel %vm2000, %v2012, %v2014
        %v2016 = vrot.slane %v1974, 6
        %v2017 = vsel %vm2000, %v2014, %v2016
        %v2018 = vrot.slane %v1975, 6
        %v2019 = vsel %vm2000, %v2016, %v2018
        %v2020 = vrot.slane %v1976, 6
        %v2021 = vsel %vm2000, %v2018, %v2020
        %v2022 = vrot.slane %v1977, 6
        %v2023 = vsel %vm2000, %v2020, %v2022
        %v2024 = vrot.slane %v1978, 6
        %v2025 = vsel %vm2000, %v2022, %v2024
        %v2026 = vrot.slane %v1979, 6
        %v2027 = vsel %vm2000, %v2024, %v2026
        %v2028 = vrot.slane %v1980, 6
        %v2029 = vsel %vm2000, %v2026, %v2028
        %v2030 = vrot.slane %v1981, 6
        %v2031 = vsel %vm2000, %v2028, %v2030
        %v2032 = vrot.slane %v1982, 6
        %v2033 = vsel %vm2000, %v2030, %v2032
        %2050 = vst [vmem:[#allocation4] sm:$0xff] %v2003
        %2051 = vst [vmem:[#allocation4 + $0x28] sm:$0xff] %v2005
        %2052 = vst [vmem:[#allocation4 + $0x50] sm:$0xff] %v2007
        %2053 = vst [vmem:[#allocation4 + $0x78] sm:$0xff] %v2009
        %2054 = vst [vmem:[#allocation4 + $0xa0] sm:$0xff] %v2011
        %2055 = vst [vmem:[#allocation4 + $0xc8] sm:$0xff] %v2013
        %2056 = vst [vmem:[#allocation4 + $0xf0] sm:$0xff] %v2015
        %2057 = vst [vmem:[#allocation4 + $0x118] sm:$0xff] %v2017
        %2058 = vst [vmem:[#allocation4 + $0x140] sm:$0xff] %v2019
        %2059 = vst [vmem:[#allocation4 + $0x168] sm:$0xff] %v2021
        %2060 = vst [vmem:[#allocation4 + $0x190] sm:$0xff] %v2023
        %2061 = vst [vmem:[#allocation4 + $0x1b8] sm:$0xff] %v2025
        %2062 = vst [vmem:[#allocation4 + $0x1e0] sm:$0xff] %v2027
        %2063 = vst [vmem:[#allocation4 + $0x208] sm:$0xff] %v2029
        %2064 = vst [vmem:[#allocation4 + $0x230] sm:$0xff] %v2031
        %2065 = vst [vmem:[#allocation4 + $0x258] sm:$0xff] %v2033
        %v2066 = vld [vmem:[#allocation3] sm:$0x80]
        %v2067 = vld [vmem:[#allocation3 + $0x8] sm:$0xff]
        %v2068 = vld [vmem:[#allocation3 + $0x10] sm:$0xff]
        %v2069 = vld [vmem:[#allocation3 + $0x18] sm:$0xff]
        %v2070 = vld [vmem:[#allocation3 + $0x20] sm:$0xff]
        %v2071 = vld [vmem:[#allocation3 + $0x28] sm:$0xff]
        %v2072 = vld [vmem:[#allocation3 + $0x30] sm:$0xff]
        %v2073 = vld [vmem:[#allocation3 + $0x38] sm:$0xff]
        %v2074 = vld [vmem:[#allocation3 + $0x40] sm:$0xff]
        %v2075 = vld [vmem:[#allocation3 + $0x48] sm:$0xff]
        %v2076 = vld [vmem:[#allocation3 + $0x50] sm:$0xff]
        %v2077 = vld [vmem:[#allocation3 + $0x58] sm:$0xff]
        %v2078 = vld [vmem:[#allocation3 + $0x60] sm:$0xff]
        %v2079 = vld [vmem:[#allocation3 + $0x68] sm:$0xff]
        %v2080 = vld [vmem:[#allocation3 + $0x70] sm:$0xff]
        %v2081 = vld [vmem:[#allocation3 + $0x78] sm:$0xff]
        %v2082 = vld [vmem:[#allocation3 + $0x80] sm:$0x7f]
        %vm2100 = vcmask 1040384
        %v2101 = vrot.slane %v2066, 7
        %v2102 = vrot.slane %v2067, 7
        %v2103 = vsel %vm2100, %v2101, %v2102
        %v2104 = vrot.slane %v2068, 7
        %v2105 = vsel %vm2100, %v2102, %v2104
        %v2106 = vrot.slane %v2069, 7
        %v2107 = vsel %vm2100, %v2104, %v2106
        %v2108 = vrot.slane %v2070, 7
        %v2109 = vsel %vm2100, %v2106, %v2108
        %v2110 = vrot.slane %v2071, 7
        %v2111 = vsel %vm2100, %v2108, %v2110
        %v2112 = vrot.slane %v2072, 7
        %v2113 = vsel %vm2100, %v2110, %v2112
        %v2114 = vrot.slane %v2073, 7
        %v2115 = vsel %vm2100, %v2112, %v2114
        %v2116 = vrot.slane %v2074, 7
        %v2117 = vsel %vm2100, %v2114, %v2116
        %v2118 = vrot.slane %v2075, 7
        %v2119 = vsel %vm2100, %v2116, %v2118
        %v2120 = vrot.slane %v2076, 7
        %v2121 = vsel %vm2100, %v2118, %v2120
        %v2122 = vrot.slane %v2077, 7
        %v2123 = vsel %vm2100, %v2120, %v2122
        %v2124 = vrot.slane %v2078, 7
        %v2125 = vsel %vm2100, %v2122, %v2124
        %v2126 = vrot.slane %v2079, 7
        %v2127 = vsel %vm2100, %v2124, %v2126
        %v2128 = vrot.slane %v2080, 7
        %v2129 = vsel %vm2100, %v2126, %v2128
        %v2130 = vrot.slane %v2081, 7
        %v2131 = vsel %vm2100, %v2128, %v2130
        %v2132 = vrot.slane %v2082, 7
        %v2133 = vsel %vm2100, %v2130, %v2132
        %2150 = vst [vmem:[#allocation4 + $0x8] sm:$0xff] %v2103
        %2151 = vst [vmem:[#allocation4 + $0x30] sm:$0xff] %v2105
        %2152 = vst [vmem:[#allocation4 + $0x58] sm:$0xff] %v2107
        %2153 = vst [vmem:[#allocation4 + $0x80] sm:$0xff] %v2109
        %2154 = vst [vmem:[#allocation4 + $0xa8] sm:$0xff] %v2111
        %2155 = vst [vmem:[#allocation4 + $0xd0] sm:$0xff] %v2113
        %2156 = vst [vmem:[#allocation4 + $0xf8] sm:$0xff] %v2115
        %2157 = vst [vmem:[#allocation4 + $0x120] sm:$0xff] %v2117
        %2158 = vst [vmem:[#allocation4 + $0x148] sm:$0xff] %v2119
        %2159 = vst [vmem:[#allocation4 + $0x170] sm:$0xff] %v2121
        %2160 = vst [vmem:[#allocation4 + $0x198] sm:$0xff] %v2123
        %2161 = vst [vmem:[#allocation4 + $0x1c0] sm:$0xff] %v2125
        %2162 = vst [vmem:[#allocation4 + $0x1e8] sm:$0xff] %v2127
        %2163 = vst [vmem:[#allocation4 + $0x210] sm:$0xff] %v2129
        %2164 = vst [vmem:[#allocation4 + $0x238] sm:$0xff] %v2131
        %2165 = vst [vmem:[#allocation4 + $0x260] sm:$0xff] %v2133
        %v2166 = vld [vmem:[#allocation3 + $0x8] sm:$0xff]
        %v2167 = vld [vmem:[#allocation3 + $0x10] sm:$0xff]
        %v2168 = vld [vmem:[#allocation3 + $0x18] sm:$0xff]
        %v2169 = vld [vmem:[#allocation3 + $0x20] sm:$0xff]
        %v2170 = vld [vmem:[#allocation3 + $0x28] sm:$0xff]
        %v2171 = vld [vmem:[#allocation3 + $0x30] sm:$0xff]
        %v2172 = vld [vmem:[#allocation3 + $0x38] sm:$0xff]
        %v2173 = vld [vmem:[#allocation3 + $0x40] sm:$0xff]
        %v2174 = vld [vmem:[#allocation3 + $0x48] sm:$0xff]
        %v2175 = vld [vmem:[#allocation3 + $0x50] sm:$0xff]
        %v2176 = vld [vmem:[#allocation3 + $0x58] sm:$0xff]
        %v2177 = vld [vmem:[#allocation3 + $0x60] sm:$0xff]
        %v2178 = vld [vmem:[#allocation3 + $0x68] sm:$0xff]
        %v2179 = vld [vmem:[#allocation3 + $0x70] sm:$0xff]
        %v2180 = vld [vmem:[#allocation3 + $0x78] sm:$0xff]
        %v2181 = vld [vmem:[#allocation3 + $0x80] sm:$0xff]
        %2182 = vst [vmem:[#allocation4 + $0x10] sm:$0xff] %v2166
        %2183 = vst [vmem:[#allocation4 + $0x38] sm:$0xff] %v2167
        %2184 = vst [vmem:[#allocation4 + $0x60] sm:$0xff] %v2168
        %2185 = vst [vmem:[#allocation4 + $0x88] sm:$0xff] %v2169
        %2186 = vst [vmem:[#allocation4 + $0xb0] sm:$0xff] %v2170
        %2187 = vst [vmem:[#allocation4 + $0xd8] sm:$0xff] %v2171
        %2188 = vst [vmem:[#allocation4 + $0x100] sm:$0xff] %v2172
        %2189 = vst [vmem:[#allocation4 + $0x128] sm:$0xff] %v2173
        %2190 = vst [vmem:[#allocation4 + $0x150] sm:$0xff] %v2174
        %2191 = vst [vmem:[#allocation4 + $0x178] sm:$0xff] %v2175
        %2192 = vst [vmem:[#allocation4 + $0x1a0] sm:$0xff] %v2176
        %2193 = vst [vmem:[#allocation4 + $0x1c8] sm:$0xff] %v2177
        %2194 = vst [vmem:[#allocation4 + $0x1f0] sm:$0xff] %v2178
        %2195 = vst [vmem:[#allocation4 + $0x218] sm:$0xff] %v2179
        %2196 = vst [vmem:[#allocation4 + $0x240] sm:$0xff] %v2180
        %2197 = vst [vmem:[#allocation4 + $0x268] sm:$0xff] %v2181
        %v2198 = vld [vmem:[#allocation3 + $0x8] sm:$0xfe]
        %v2199 = vld [vmem:[#allocation3 + $0x10] sm:$0xff]
        %v2200 = vld [vmem:[#allocation3 + $0x18] sm:$0xff]
        %v2201 = vld [vmem:[#allocation3 + $0x20] sm:$0xff]
        %v2202 = vld [vmem:[#allocation3 + $0x28] sm:$0xff]
        %v2203 = vld [vmem:[#allocation3 + $0x30] sm:$0xff]
        %v2204 = vld [vmem:[#allocation3 + $0x38] sm:$0xff]
        %v2205 = vld [vmem:[#allocation3 + $0x40] sm:$0xff]
        %v2206 = vld [vmem:[#allocation3 + $0x48] sm:$0xff]
        %v2207 = vld [vmem:[#allocation3 + $0x50] sm:$0xff]
        %v2208 = vld [vmem:[#allocation3 + $0x58] sm:$0xff]
        %v2209 = vld [vmem:[#allocation3 + $0x60] sm:$0xff]
        %v2210 = vld [vmem:[#allocation3 + $0x68] sm:$0xff]
        %v2211 = vld [vmem:[#allocation3 + $0x70] sm:$0xff]
        %v2212 = vld [vmem:[#allocation3 + $0x78] sm:$0xff]
        %v2213 = vld [vmem:[#allocation3 + $0x80] sm:$0xff]
        %v2214 = vld [vmem:[#allocation3 + $0x88] sm:$0x1]
        %vm2232 = vcmask 1046528
        %v2233 = vrot.slane %v2198, 1
        %v2234 = vrot.slane %v2199, 1
        %v2235 = vsel %vm2232, %v2233, %v2234
        %v2236 = vrot.slane %v2200, 1
        %v2237 = vsel %vm2232, %v2234, %v2236
        %v2238 = vrot.slane %v2201, 1
        %v2239 = vsel %vm2232, %v2236, %v2238
        %v2240 = vrot.slane %v2202, 1
        %v2241 = vsel %vm2232, %v2238, %v2240
        %v2242 = vrot.slane %v2203, 1
        %v2243 = vsel %vm2232, %v2240, %v2242
        %v2244 = vrot.slane %v2204, 1
        %v2245 = vsel %vm2232, %v2242, %v2244
        %v2246 = vrot.slane %v2205, 1
        %v2247 = vsel %vm2232, %v2244, %v2246
        %v2248 = vrot.slane %v2206, 1
        %v2249 = vsel %vm2232, %v2246, %v2248
        %v2250 = vrot.slane %v2207, 1
        %v2251 = vsel %vm2232, %v2248, %v2250
        %v2252 = vrot.slane %v2208, 1
        %v2253 = vsel %vm2232, %v2250, %v2252
        %v2254 = vrot.slane %v2209, 1
        %v2255 = vsel %vm2232, %v2252, %v2254
        %v2256 = vrot.slane %v2210, 1
        %v2257 = vsel %vm2232, %v2254, %v2256
        %v2258 = vrot.slane %v2211, 1
        %v2259 = vsel %vm2232, %v2256, %v2258
        %v2260 = vrot.slane %v2212, 1
        %v2261 = vsel %vm2232, %v2258, %v2260
        %v2262 = vrot.slane %v2213, 1
        %v2263 = vsel %vm2232, %v2260, %v2262
        %v2264 = vrot.slane %v2214, 1
        %v2265 = vsel %vm2232, %v2262, %v2264
        %2282 = vst [vmem:[#allocation4 + $0x18] sm:$0xff] %v2235
        %2283 = vst [vmem:[#allocation4 + $0x40] sm:$0xff] %v2237
        %2284 = vst [vmem:[#allocation4 + $0x68] sm:$0xff] %v2239
        %2285 = vst [vmem:[#allocation4 + $0x90] sm:$0xff] %v2241
        %2286 = vst [vmem:[#allocation4 + $0xb8] sm:$0xff] %v2243
        %2287 = vst [vmem:[#allocation4 + $0xe0] sm:$0xff] %v2245
        %2288 = vst [vmem:[#allocation4 + $0x108] sm:$0xff] %v2247
        %2289 = vst [vmem:[#allocation4 + $0x130] sm:$0xff] %v2249
        %2290 = vst [vmem:[#allocation4 + $0x158] sm:$0xff] %v2251
        %2291 = vst [vmem:[#allocation4 + $0x180] sm:$0xff] %v2253
        %2292 = vst [vmem:[#allocation4 + $0x1a8] sm:$0xff] %v2255
        %2293 = vst [vmem:[#allocation4 + $0x1d0] sm:$0xff] %v2257
        %2294 = vst [vmem:[#allocation4 + $0x1f8] sm:$0xff] %v2259
        %2295 = vst [vmem:[#allocation4 + $0x220] sm:$0xff] %v2261
        %2296 = vst [vmem:[#allocation4 + $0x248] sm:$0xff] %v2263
        %2297 = vst [vmem:[#allocation4 + $0x270] sm:$0xff] %v2265
        %v2298 = vld [vmem:[#allocation3 + $0x8] sm:$0xfc]
        %v2299 = vld [vmem:[#allocation3 + $0x10] sm:$0xff]
        %v2300 = vld [vmem:[#allocation3 + $0x18] sm:$0xff]
        %v2301 = vld [vmem:[#allocation3 + $0x20] sm:$0xff]
        %v2302 = vld [vmem:[#allocation3 + $0x28] sm:$0xff]
        %v2303 = vld [vmem:[#allocation3 + $0x30] sm:$0xff]
        %v2304 = vld [vmem:[#allocation3 + $0x38] sm:$0xff]
        %v2305 = vld [vmem:[#allocation3 + $0x40] sm:$0xff]
        %v2306 = vld [vmem:[#allocation3 + $0x48] sm:$0xff]
        %v2307 = vld [vmem:[#allocation3 + $0x50] sm:$0xff]
        %v2308 = vld [vmem:[#allocation3 + $0x58] sm:$0xff]
        %v2309 = vld [vmem:[#allocation3 + $0x60] sm:$0xff]
        %v2310 = vld [vmem:[#allocation3 + $0x68] sm:$0xff]
        %v2311 = vld [vmem:[#allocation3 + $0x70] sm:$0xff]
        %v2312 = vld [vmem:[#allocation3 + $0x78] sm:$0xff]
        %v2313 = vld [vmem:[#allocation3 + $0x80] sm:$0xff]
        %v2314 = vld [vmem:[#allocation3 + $0x88] sm:$0x3]
        %vm2332 = vcmask 1045504
        %v2333 = vrot.slane %v2298, 2
        %v2334 = vrot.slane %v2299, 2
        %v2335 = vsel %vm2332, %v2333, %v2334
        %v2336 = vrot.slane %v2300, 2
        %v2337 = vsel %vm2332, %v2334, %v2336
        %v2338 = vrot.slane %v2301, 2
        %v2339 = vsel %vm2332, %v2336, %v2338
        %v2340 = vrot.slane %v2302, 2
        %v2341 = vsel %vm2332, %v2338, %v2340
        %v2342 = vrot.slane %v2303, 2
        %v2343 = vsel %vm2332, %v2340, %v2342
        %v2344 = vrot.slane %v2304, 2
        %v2345 = vsel %vm2332, %v2342, %v2344
        %v2346 = vrot.slane %v2305, 2
        %v2347 = vsel %vm2332, %v2344, %v2346
        %v2348 = vrot.slane %v2306, 2
        %v2349 = vsel %vm2332, %v2346, %v2348
        %v2350 = vrot.slane %v2307, 2
        %v2351 = vsel %vm2332, %v2348, %v2350
        %v2352 = vrot.slane %v2308, 2
        %v2353 = vsel %vm2332, %v2350, %v2352
        %v2354 = vrot.slane %v2309, 2
        %v2355 = vsel %vm2332, %v2352, %v2354
        %v2356 = vrot.slane %v2310, 2
        %v2357 = vsel %vm2332, %v2354, %v2356
        %v2358 = vrot.slane %v2311, 2
        %v2359 = vsel %vm2332, %v2356, %v2358
        %v2360 = vrot.slane %v2312, 2
        %v2361 = vsel %vm2332, %v2358, %v2360
        %v2362 = vrot.slane %v2313, 2
        %v2363 = vsel %vm2332, %v2360, %v2362
        %v2364 = vrot.slane %v2314, 2
        %v2365 = vsel %vm2332, %v2362, %v2364
        %2382 = vst [vmem:[#allocation4 + $0x20] sm:$0xff] %v2335
        %2383 = vst [vmem:[#allocation4 + $0x48] sm:$0xff] %v2337
        %2384 = vst [vmem:[#allocation4 + $0x70] sm:$0xff] %v2339
        %2385 = vst [vmem:[#allocation4 + $0x98] sm:$0xff] %v2341
        %2386 = vst [vmem:[#allocation4 + $0xc0] sm:$0xff] %v2343
        %2387 = vst [vmem:[#allocation4 + $0xe8] sm:$0xff] %v2345
        %2388 = vst [vmem:[#allocation4 + $0x110] sm:$0xff] %v2347
        %2389 = vst [vmem:[#allocation4 + $0x138] sm:$0xff] %v2349
        %2390 = vst [vmem:[#allocation4 + $0x160] sm:$0xff] %v2351
        %2391 = vst [vmem:[#allocation4 + $0x188] sm:$0xff] %v2353
        %2392 = vst [vmem:[#allocation4 + $0x1b0] sm:$0xff] %v2355
        %2393 = vst [vmem:[#allocation4 + $0x1d8] sm:$0xff] %v2357
        %2394 = vst [vmem:[#allocation4 + $0x200] sm:$0xff] %v2359
        %2395 = vst [vmem:[#allocation4 + $0x228] sm:$0xff] %v2361
        %2396 = vst [vmem:[#allocation4 + $0x250] sm:$0xff] %v2363
        %2397 = vst [vmem:[#allocation4 + $0x278] sm:$0xff] %v2365
        %v2398 = vld [vmem:[#allocation4] sm:$0xff]
        %v2399 = vld [vmem:[#allocation4 + $0x8] sm:$0xff]
        %v2400 = vld [vmem:[#allocation4 + $0x10] sm:$0xff]
        %v2401 = vld [vmem:[#allocation4 + $0x18] sm:$0xff]
        %v2402 = vld [vmem:[#allocation4 + $0x20] sm:$0xff]
        %v2403 = vld [vmem:[#allocation4 + $0x28] sm:$0xff]
        %v2404 = vld [vmem:[#allocation4 + $0x30] sm:$0xff]
        %v2405 = vld [vmem:[#allocation4 + $0x38] sm:$0xff]
        %v2406 = vld [vmem:[#allocation4 + $0x40] sm:$0xff]
        %v2407 = vld [vmem:[#allocation4 + $0x48] sm:$0xff]
        %v2408 = vld [vmem:[#allocation4 + $0x50] sm:$0xff]
        %v2409 = vld [vmem:[#allocation4 + $0x58] sm:$0xff]
        %v2410 = vld [vmem:[#allocation4 + $0x60] sm:$0xff]
        %v2411 = vld [vmem:[#allocation4 + $0x68] sm:$0xff]
        %v2412 = vld [vmem:[#allocation4 + $0x70] sm:$0xff]
        %v2413 = vld [vmem:[#allocation4 + $0x78] sm:$0xff]
        %v2414 = vld [vmem:[#allocation4 + $0x80] sm:$0xff]
        %v2415 = vld [vmem:[#allocation4 + $0x88] sm:$0xff]
        %v2416 = vld [vmem:[#allocation4 + $0x90] sm:$0xff]
        %v2417 = vld [vmem:[#allocation4 + $0x98] sm:$0xff]
        %v2418 = vld [vmem:[#allocation4 + $0xa0] sm:$0xff]
        %v2419 = vld [vmem:[#allocation4 + $0xa8] sm:$0xff]
        %v2420 = vld [vmem:[#allocation4 + $0xb0] sm:$0xff]
        %v2421 = vld [vmem:[#allocation4 + $0xb8] sm:$0xff]
        %v2422 = vld [vmem:[#allocation4 + $0xc0] sm:$0xff]
        %v2423 = vld [vmem:[#allocation4 + $0xc8] sm:$0xff]
        %v2424 = vld [vmem:[#allocation4 + $0xd0] sm:$0xff]
        %v2425 = vld [vmem:[#allocation4 + $0xd8] sm:$0xff]
        %v2426 = vld [vmem:[#allocation4 + $0xe0] sm:$0xff]
        %v2427 = vld [vmem:[#allocation4 + $0xe8] sm:$0xff]
        %v2428 = vld [vmem:[#allocation4 + $0xf0] sm:$0xff]
        %v2429 = vld [vmem:[#allocation4 + $0xf8] sm:$0xff]
        %v2430 = vld [vmem:[#allocation4 + $0x100] sm:$0xff]
        %v2431 = vld [vmem:[#allocation4 + $0x108] sm:$0xff]
        %v2432 = vld [vmem:[#allocation4 + $0x110] sm:$0xff]
        %v2433 = vld [vmem:[#allocation4 + $0x118] sm:$0xff]
        %v2434 = vld [vmem:[#allocation4 + $0x120] sm:$0xff]
        %v2435 = vld [vmem:[#allocation4 + $0x128] sm:$0xff]
        %v2436 = vld [vmem:[#allocation4 + $0x130] sm:$0xff]
        %v2437 = vld [vmem:[#allocation4 + $0x138] sm:$0xff]
        %v2438 = vld [vmem:[#allocation4 + $0x140] sm:$0xff]
        %v2439 = vld [vmem:[#allocation4 + $0x148] sm:$0xff]
        %v2440 = vld [vmem:[#allocation4 + $0x150] sm:$0xff]
        %v2441 = vld [vmem:[#allocation4 + $0x158] sm:$0xff]
        %v2442 = vld [vmem:[#allocation4 + $0x160] sm:$0xff]
        %v2443 = vld [vmem:[#allocation4 + $0x168] sm:$0xff]
        %v2444 = vld [vmem:[#allocation4 + $0x170] sm:$0xff]
        %v2445 = vld [vmem:[#allocation4 + $0x178] sm:$0xff]
        %v2446 = vld [vmem:[#allocation4 + $0x180] sm:$0xff]
        %v2447 = vld [vmem:[#allocation4 + $0x188] sm:$0xff]
        %v2448 = vld [vmem:[#allocation4 + $0x190] sm:$0xff]
        %v2449 = vld [vmem:[#allocation4 + $0x198] sm:$0xff]
        %v2450 = vld [vmem:[#allocation4 + $0x1a0] sm:$0xff]
        %v2451 = vld [vmem:[#allocation4 + $0x1a8] sm:$0xff]
        %v2452 = vld [vmem:[#allocation4 + $0x1b0] sm:$0xff]
        %v2453 = vld [vmem:[#allocation4 + $0x1b8] sm:$0xff]
        %v2454 = vld [vmem:[#allocation4 + $0x1c0] sm:$0xff]
        %v2455 = vld [vmem:[#allocation4 + $0x1c8] sm:$0xff]
        %v2456 = vld [vmem:[#allocation4 + $0x1d0] sm:$0xff]
        %v2457 = vld [vmem:[#allocation4 + $0x1d8] sm:$0xff]
        %v2458 = vld [vmem:[#allocation4 + $0x1e0] sm:$0xff]
        %v2459 = vld [vmem:[#allocation4 + $0x1e8] sm:$0xff]
        %v2460 = vld [vmem:[#allocation4 + $0x1f0] sm:$0xff]
        %v2461 = vld [vmem:[#allocation4 + $0x1f8] sm:$0xff]
        %v2462 = vld [vmem:[#allocation4 + $0x200] sm:$0xff]
        %v2463 = vld [vmem:[#allocation4 + $0x208] sm:$0xff]
        %v2464 = vld [vmem:[#allocation4 + $0x210] sm:$0xff]
        %v2465 = vld [vmem:[#allocation4 + $0x218] sm:$0xff]
        %v2466 = vld [vmem:[#allocation4 + $0x220] sm:$0xff]
        %v2467 = vld [vmem:[#allocation4 + $0x228] sm:$0xff]
        %v2468 = vld [vmem:[#allocation4 + $0x230] sm:$0xff]
        %v2469 = vld [vmem:[#allocation4 + $0x238] sm:$0xff]
        %v2470 = vld [vmem:[#allocation4 + $0x240] sm:$0xff]
        %v2471 = vld [vmem:[#allocation4 + $0x248] sm:$0xff]
        %v2472 = vld [vmem:[#allocation4 + $0x250] sm:$0xff]
        %v2473 = vld [vmem:[#allocation4 + $0x258] sm:$0xff]
        %v2474 = vld [vmem:[#allocation4 + $0x260] sm:$0xff]
        %v2475 = vld [vmem:[#allocation4 + $0x268] sm:$0xff]
        %v2476 = vld [vmem:[#allocation4 + $0x270] sm:$0xff]
        %v2477 = vld [vmem:[#allocation4 + $0x278] sm:$0xff]
        %v2478 = vld [vmem:[%s4] sm:$0xf]
        %v2479 = vld [vmem:[%s4 + $0x4] sm:$0xf]
        %v2480 = vld [vmem:[%s4 + $0x8] sm:$0xf]
        %v2481 = vld [vmem:[%s4 + $0xc] sm:$0xf]
        %v2482 = vld [vmem:[%s4 + $0x10] sm:$0xf]
        %v2483 = vld [vmem:[%s4 + $0x14] sm:$0xf]
        %v2484 = vld [vmem:[%s4 + $0x18] sm:$0xf]
        %v2485 = vld [vmem:[%s4 + $0x1c] sm:$0xf]
        %v2486 = vld [vmem:[%s4 + $0x20] sm:$0xf]
        %v2487 = vld [vmem:[%s4 + $0x24] sm:$0xf]
        %v2488 = vld [vmem:[%s4 + $0x28] sm:$0xf]
        %v2489 = vld [vmem:[%s4 + $0x2c] sm:$0xf]
        %v2490 = vld [vmem:[%s4 + $0x30] sm:$0xf]
        %v2491 = vld [vmem:[%s4 + $0x34] sm:$0xf]
        %v2492 = vld [vmem:[%s4 + $0x38] sm:$0xf]
        %v2493 = vld [vmem:[%s4 + $0x3c] sm:$0xf]
        %v2494 = vld [vmem:[%s4 + $0x40] sm:$0xf]
        %v2495 = vld [vmem:[%s4 + $0x44] sm:$0xf]
        %v2496 = vld [vmem:[%s4 + $0x48] sm:$0xf]
        %v2497 = vld [vmem:[%s4 + $0x4c] sm:$0xf]
        %v2498 = vld [vmem:[%s4 + $0x50] sm:$0xf]
        %v2499 = vld [vmem:[%s4 + $0x54] sm:$0xf]
        %v2500 = vld [vmem:[%s4 + $0x58] sm:$0xf]
        %v2501 = vld [vmem:[%s4 + $0x5c] sm:$0xf]
        %v2502 = vld [vmem:[%s4 + $0x60] sm:$0xf]
        %v2503 = vld [vmem:[%s4 + $0x64] sm:$0xf]
        %v2504 = vld [vmem:[%s4 + $0x68] sm:$0xf]
        %v2505 = vld [vmem:[%s4 + $0x6c] sm:$0xf]
        %v2506 = vld [vmem:[%s4 + $0x70] sm:$0xf]
        %v2507 = vld [vmem:[%s4 + $0x74] sm:$0xf]
        %v2508 = vld [vmem:[%s4 + $0x78] sm:$0xf]
        %v2509 = vld [vmem:[%s4 + $0x7c] sm:$0xf]
        %v2510 = vld [vmem:[%s4 + $0x80] sm:$0xf]
        %v2511 = vld [vmem:[%s4 + $0x84] sm:$0xf]
        %v2512 = vld [vmem:[%s4 + $0x88] sm:$0xf]
        %v2513 = vld [vmem:[%s4 + $0x8c] sm:$0xf]
        %v2514 = vld [vmem:[%s4 + $0x90] sm:$0xf]
        %v2515 = vld [vmem:[%s4 + $0x94] sm:$0xf]
        %v2516 = vld [vmem:[%s4 + $0x98] sm:$0xf]
        %v2517 = vld [vmem:[%s4 + $0x9c] sm:$0xf]
        %v2518 = vld [vmem:[%s4 + $0xa0] sm:$0xf]
        %v2519 = vld [vmem:[%s4 + $0xa4] sm:$0xf]
        %v2520 = vld [vmem:[%s4 + $0xa8] sm:$0xf]
        %v2521 = vld [vmem:[%s4 + $0xac] sm:$0xf]
        %v2522 = vld [vmem:[%s4 + $0xb0] sm:$0xf]
        %v2523 = vld [vmem:[%s4 + $0xb4] sm:$0xf]
        %v2524 = vld [vmem:[%s4 + $0xb8] sm:$0xf]
        %v2525 = vld [vmem:[%s4 + $0xbc] sm:$0xf]
        %v2526 = vld [vmem:[%s4 + $0xc0] sm:$0xf]
        %v2527 = vld [vmem:[%s4 + $0xc4] sm:$0xf]
        %v2528 = vld [vmem:[%s4 + $0xc8] sm:$0xf]
        %v2529 = vld [vmem:[%s4 + $0xcc] sm:$0xf]
        %v2530 = vld [vmem:[%s4 + $0xd0] sm:$0xf]
        %v2531 = vld [vmem:[%s4 + $0xd4] sm:$0xf]
        %v2532 = vld [vmem:[%s4 + $0xd8] sm:$0xf]
        %v2533 = vld [vmem:[%s4 + $0xdc] sm:$0xf]
        %v2534 = vld [vmem:[%s4 + $0xe0] sm:$0xf]
        %v2535 = vld [vmem:[%s4 + $0xe4] sm:$0xf]
        %v2536 = vld [vmem:[%s4 + $0xe8] sm:$0xf]
        %v2537 = vld [vmem:[%s4 + $0xec] sm:$0xf]
        %v2538 = vld [vmem:[%s4 + $0xf0] sm:$0xf]
        %v2539 = vld [vmem:[%s4 + $0xf4] sm:$0xf]
        %v2540 = vld [vmem:[%s4 + $0xf8] sm:$0xf]
        %v2541 = vld [vmem:[%s4 + $0xfc] sm:$0xf]
        %v2542 = vld [vmem:[%s4 + $0x100] sm:$0xf]
        %v2543 = vld [vmem:[%s4 + $0x104] sm:$0xf]
        %v2544 = vld [vmem:[%s4 + $0x108] sm:$0xf]
        %v2545 = vld [vmem:[%s4 + $0x10c] sm:$0xf]
        %v2546 = vld [vmem:[%s4 + $0x110] sm:$0xf]
        %v2547 = vld [vmem:[%s4 + $0x114] sm:$0xf]
        %v2548 = vld [vmem:[%s4 + $0x118] sm:$0xf]
        %v2549 = vld [vmem:[%s4 + $0x11c] sm:$0xf]
        %v2550 = vld [vmem:[%s4 + $0x120] sm:$0xf]
        %v2551 = vld [vmem:[%s4 + $0x124] sm:$0xf]
        %v2552 = vld [vmem:[%s4 + $0x128] sm:$0xf]
        %v2553 = vld [vmem:[%s4 + $0x12c] sm:$0xf]
        %v2554 = vld [vmem:[%s4 + $0x130] sm:$0xf]
        %v2555 = vld [vmem:[%s4 + $0x134] sm:$0xf]
        %v2556 = vld [vmem:[%s4 + $0x138] sm:$0xf]
        %v2557 = vld [vmem:[%s4 + $0x13c] sm:$0xf]
        %v2558 = vld [vmem:[%s5] sm:$0x1]
        %v2560 = vlaneseq
        %v2561 = vshrl.u32 %v2560, 7
        %v2562 = vsub.s32 0, %v2561
        %v2563 = vrot.slane %v2558, %v2562
        %v2645 = vunpack.c.l.b16 %v2478
        %v2646 = vunpack.c.l.b16 %v2479
        %v2647 = vunpack.c.l.b16 %v2480
        %v2648 = vunpack.c.l.b16 %v2481
        %v2649 = vunpack.c.l.b16 %v2482
        %v2650 = vunpack.c.l.b16 %v2483
        %v2651 = vunpack.c.l.b16 %v2484
        %v2652 = vunpack.c.l.b16 %v2485
        %v2653 = vunpack.c.l.b16 %v2486
        %v2654 = vunpack.c.l.b16 %v2487
        %v2655 = vunpack.c.l.b16 %v2488
        %v2656 = vunpack.c.l.b16 %v2489
        %v2657 = vunpack.c.l.b16 %v2490
        %v2658 = vunpack.c.l.b16 %v2491
        %v2659 = vunpack.c.l.b16 %v2492
        %v2660 = vunpack.c.l.b16 %v2493
        %v2661 = vunpack.c.l.b16 %v2494
        %v2662 = vunpack.c.l.b16 %v2495
        %v2663 = vunpack.c.l.b16 %v2496
        %v2664 = vunpack.c.l.b16 %v2497
        %v2665 = vunpack.c.l.b16 %v2498
        %v2666 = vunpack.c.l.b16 %v2499
        %v2667 = vunpack.c.l.b16 %v2500
        %v2668 = vunpack.c.l.b16 %v2501
        %v2669 = vunpack.c.l.b16 %v2502
        %v2670 = vunpack.c.l.b16 %v2503
        %v2671 = vunpack.c.l.b16 %v2504
        %v2672 = vunpack.c.l.b16 %v2505
        %v2673 = vunpack.c.l.b16 %v2506
        %v2674 = vunpack.c.l.b16 %v2507
        %v2675 = vunpack.c.l.b16 %v2508
        %v2676 = vunpack.c.l.b16 %v2509
        %v2677 = vunpack.c.l.b16 %v2510
        %v2678 = vunpack.c.l.b16 %v2511
        %v2679 = vunpack.c.l.b16 %v2512
        %v2680 = vunpack.c.l.b16 %v2513
        %v2681 = vunpack.c.l.b16 %v2514
        %v2682 = vunpack.c.l.b16 %v2515
        %v2683 = vunpack.c.l.b16 %v2516
        %v2684 = vunpack.c.l.b16 %v2517
        %v2685 = vunpack.c.l.b16 %v2518
        %v2686 = vunpack.c.l.b16 %v2519
        %v2687 = vunpack.c.l.b16 %v2520
        %v2688 = vunpack.c.l.b16 %v2521
        %v2689 = vunpack.c.l.b16 %v2522
        %v2690 = vunpack.c.l.b16 %v2523
        %v2691 = vunpack.c.l.b16 %v2524
        %v2692 = vunpack.c.l.b16 %v2525
        %v2693 = vunpack.c.l.b16 %v2526
        %v2694 = vunpack.c.l.b16 %v2527
        %v2695 = vunpack.c.l.b16 %v2528
        %v2696 = vunpack.c.l.b16 %v2529
        %v2697 = vunpack.c.l.b16 %v2530
        %v2698 = vunpack.c.l.b16 %v2531
        %v2699 = vunpack.c.l.b16 %v2532
        %v2700 = vunpack.c.l.b16 %v2533
        %v2701 = vunpack.c.l.b16 %v2534
        %v2702 = vunpack.c.l.b16 %v2535
        %v2703 = vunpack.c.l.b16 %v2536
        %v2704 = vunpack.c.l.b16 %v2537
        %v2705 = vunpack.c.l.b16 %v2538
        %v2706 = vunpack.c.l.b16 %v2539
        %v2707 = vunpack.c.l.b16 %v2540
        %v2708 = vunpack.c.l.b16 %v2541
        %v2709 = vunpack.c.l.b16 %v2542
        %v2710 = vunpack.c.l.b16 %v2543
        %v2711 = vunpack.c.l.b16 %v2544
        %v2712 = vunpack.c.l.b16 %v2545
        %v2713 = vunpack.c.l.b16 %v2546
        %v2714 = vunpack.c.l.b16 %v2547
        %v2715 = vunpack.c.l.b16 %v2548
        %v2716 = vunpack.c.l.b16 %v2549
        %v2717 = vunpack.c.l.b16 %v2550
        %v2718 = vunpack.c.l.b16 %v2551
        %v2719 = vunpack.c.l.b16 %v2552
        %v2720 = vunpack.c.l.b16 %v2553
        %v2721 = vunpack.c.l.b16 %v2554
        %v2722 = vunpack.c.l.b16 %v2555
        %v2723 = vunpack.c.l.b16 %v2556
        %v2724 = vunpack.c.l.b16 %v2557
        %v2725 = vpack.c.b16 %v2646, %v2645
        %v2726 = vpack.c.b16 %v2648, %v2647
        %v2727 = vpack.c.b16 %v2650, %v2649
        %v2728 = vpack.c.b16 %v2652, %v2651
        %v2729 = vpack.c.b16 %v2654, %v2653
        %v2730 = vpack.c.b16 %v2656, %v2655
        %v2731 = vpack.c.b16 %v2658, %v2657
        %v2732 = vpack.c.b16 %v2660, %v2659
        %v2733 = vpack.c.b16 %v2662, %v2661
        %v2734 = vpack.c.b16 %v2664, %v2663
        %v2735 = vpack.c.b16 %v2666, %v2665
        %v2736 = vpack.c.b16 %v2668, %v2667
        %v2737 = vpack.c.b16 %v2670, %v2669
        %v2738 = vpack.c.b16 %v2672, %v2671
        %v2739 = vpack.c.b16 %v2674, %v2673
        %v2740 = vpack.c.b16 %v2676, %v2675
        %v2741 = vpack.c.b16 %v2678, %v2677
        %v2742 = vpack.c.b16 %v2680, %v2679
        %v2743 = vpack.c.b16 %v2682, %v2681
        %v2744 = vpack.c.b16 %v2684, %v2683
        %v2745 = vpack.c.b16 %v2686, %v2685
        %v2746 = vpack.c.b16 %v2688, %v2687
        %v2747 = vpack.c.b16 %v2690, %v2689
        %v2748 = vpack.c.b16 %v2692, %v2691
        %v2749 = vpack.c.b16 %v2694, %v2693
        %v2750 = vpack.c.b16 %v2696, %v2695
        %v2751 = vpack.c.b16 %v2698, %v2697
        %v2752 = vpack.c.b16 %v2700, %v2699
        %v2753 = vpack.c.b16 %v2702, %v2701
        %v2754 = vpack.c.b16 %v2704, %v2703
        %v2755 = vpack.c.b16 %v2706, %v2705
        %v2756 = vpack.c.b16 %v2708, %v2707
        %v2757 = vpack.c.b16 %v2710, %v2709
        %v2758 = vpack.c.b16 %v2712, %v2711
        %v2759 = vpack.c.b16 %v2714, %v2713
        %v2760 = vpack.c.b16 %v2716, %v2715
        %v2761 = vpack.c.b16 %v2718, %v2717
        %v2762 = vpack.c.b16 %v2720, %v2719
        %v2763 = vpack.c.b16 %v2722, %v2721
        %v2764 = vpack.c.b16 %v2724, %v2723
        %2805 = vmatprep.subr.bf16.mxu0 0
        %2806 = vmatpush1.bf16.msra.mxu0 %v2725
        %2807 = vmatprep.subr.bf16.mxu0 0
        %2808 = vmatpush1.bf16.msra.mxu0 %v2726
        %2809 = vmatprep.subr.bf16.mxu0 0
        %2810 = vmatpush1.bf16.msra.mxu0 %v2727
        %2811 = vmatprep.subr.bf16.mxu0 0
        %2812 = vmatpush1.bf16.msra.mxu0 %v2728
        %2813 = vmatprep.subr.bf16.mxu0 0
        %2814 = vmatpush1.bf16.msra.mxu0 %v2729
        %2815 = vmatprep.subr.bf16.mxu0 0
        %2816 = vmatpush1.bf16.msra.mxu0 %v2730
        %2817 = vmatprep.subr.bf16.mxu0 0
        %2818 = vmatpush1.bf16.msra.mxu0 %v2731
        %2819 = vmatprep.subr.bf16.mxu0 0
        %2820 = vmatpush1.bf16.msra.mxu0 %v2732
        %2821 = vmatprep.subr.bf16.mxu0 0
        %2822 = vmatpush1.bf16.msra.mxu0 %v2733
        %2823 = vmatprep.subr.bf16.mxu0 0
        %2824 = vmatpush1.bf16.msra.mxu0 %v2734
        %2825 = vmatprep.subr.bf16.mxu0 0
        %2826 = vmatpush1.bf16.msra.mxu0 %v2735
        %2827 = vmatprep.subr.bf16.mxu0 0
        %2828 = vmatpush1.bf16.msra.mxu0 %v2736
        %2829 = vmatprep.subr.bf16.mxu0 0
        %2830 = vmatpush1.bf16.msra.mxu0 %v2737
        %2831 = vmatprep.subr.bf16.mxu0 0
        %2832 = vmatpush1.bf16.msra.mxu0 %v2738
        %2833 = vmatprep.subr.bf16.mxu0 0
        %2834 = vmatpush1.bf16.msra.mxu0 %v2739
        %2835 = vmatprep.subr.bf16.mxu0 0
        %2836 = vmatpush1.bf16.msra.mxu0 %v2740
        %2837 = vmatprep.mubr.bf16.mxu0 %v2399
        %2838 = vmatmul.mubr.bf16.gmra.mrb[0].mxu0 %v2398
        %v2839 = vpop.f32.mrb[0].mxu0
        %v2840 = vadd.f32 %v2563, %v2839
        %v2841 = vpop.f32.mrb[0].mxu0
        %v2842 = vpop.f32.mrb[0].mxu0
        %v2843 = vadd.f32 %v2563, %v2842
        %v2844 = vpop.f32.mrb[0].mxu0
        %2845 = vmatprep.mubr.bf16.mxu0 %v2404
        %2846 = vmatmul.mubr.bf16.gmra.mrb[0].mxu0 %v2403
        %v2847 = vpop.f32.mrb[0].mxu0
        %v2848 = vadd.f32 %v2563, %v2847
        %v2849 = vpop.f32.mrb[0].mxu0
        %v2850 = vpop.f32.mrb[0].mxu0
        %v2851 = vadd.f32 %v2563, %v2850
        %v2852 = vpop.f32.mrb[0].mxu0
        %2853 = vmatprep.mubr.bf16.mxu0 %v2409
        %2854 = vmatmul.mubr.bf16.gmra.mrb[0].mxu0 %v2408
        %v2855 = vpop.f32.mrb[0].mxu0
        %v2856 = vadd.f32 %v2563, %v2855
        %v2857 = vpop.f32.mrb[0].mxu0
        %v2858 = vpop.f32.mrb[0].mxu0
        %v2859 = vadd.f32 %v2563, %v2858
        %v2860 = vpop.f32.mrb[0].mxu0
        %2861 = vmatprep.mubr.bf16.mxu0 %v2414
        %2862 = vmatmul.mubr.bf16.gmra.mrb[0].mxu0 %v2413
        %v2863 = vpop.f32.mrb[0].mxu0
        %v2864 = vadd.f32 %v2563, %v2863
        %v2865 = vpop.f32.mrb[0].mxu0
        %v2866 = vpop.f32.mrb[0].mxu0
        %v2867 = vadd.f32 %v2563, %v2866
        %v2868 = vpop.f32.mrb[0].mxu0
        %2869 = vmatprep.mubr.bf16.mxu0 %v2419
        %2870 = vmatmul.mubr.bf16.gmra.mrb[0].mxu0 %v2418
        %v2871 = vpop.f32.mrb[0].mxu0
        %v2872 = vadd.f32 %v2563, %v2871
        %v2873 = vpop.f32.mrb[0].mxu0
        %v2874 = vpop.f32.mrb[0].mxu0
        %v2875 = vadd.f32 %v2563, %v2874
        %v2876 = vpop.f32.mrb[0].mxu0
        %2877 = vmatprep.mubr.bf16.mxu0 %v2424
        %2878 = vmatmul.mubr.bf16.gmra.mrb[0].mxu0 %v2423
        %v2879 = vpop.f32.mrb[0].mxu0
        %v2880 = vadd.f32 %v2563, %v2879
        %v2881 = vpop.f32.mrb[0].mxu0
        %v2882 = vpop.f32.mrb[0].mxu0
        %v2883 = vadd.f32 %v2563, %v2882
        %v2884 = vpop.f32.mrb[0].mxu0
        %2885 = vmatprep.mubr.bf16.mxu0 %v2429
        %2886 = vmatmul.mubr.bf16.gmra.mrb[0].mxu0 %v2428
        %v2887 = vpop.f32.mrb[0].mxu0
        %v2888 = vadd.f32 %v2563, %v2887
        %v2889 = vpop.f32.mrb[0].mxu0
        %v2890 = vpop.f32.mrb[0].mxu0
        %v2891 = vadd.f32 %v2563, %v2890
        %v2892 = vpop.f32.mrb[0].mxu0
        %2893 = vmatprep.mubr.bf16.mxu0 %v2434
        %2894 = vmatmul.mubr.bf16.gmra.mrb[0].mxu0 %v2433
        %v2895 = vpop.f32.mrb[0].mxu0
        %v2896 = vadd.f32 %v2563, %v2895
        %v2897 = vpop.f32.mrb[0].mxu0
        %v2898 = vpop.f32.mrb[0].mxu0
        %v2899 = vadd.f32 %v2563, %v2898
        %v2900 = vpop.f32.mrb[0].mxu0
        %2901 = vmatprep.mubr.bf16.mxu0 %v2439
        %2902 = vmatmul.mubr.bf16.gmra.mrb[0].mxu0 %v2438
        %v2903 = vpop.f32.mrb[0].mxu0
        %v2904 = vadd.f32 %v2563, %v2903
        %v2905 = vpop.f32.mrb[0].mxu0
        %v2906 = vpop.f32.mrb[0].mxu0
        %v2907 = vadd.f32 %v2563, %v2906
        %v2908 = vpop.f32.mrb[0].mxu0
        %2909 = vmatprep.mubr.bf16.mxu0 %v2444
        %2910 = vmatmul.mubr.bf16.gmra.mrb[0].mxu0 %v2443
        %v2911 = vpop.f32.mrb[0].mxu0
        %v2912 = vadd.f32 %v2563, %v2911
        %v2913 = vpop.f32.mrb[0].mxu0
        %v2914 = vpop.f32.mrb[0].mxu0
        %v2915 = vadd.f32 %v2563, %v2914
        %v2916 = vpop.f32.mrb[0].mxu0
        %2917 = vmatprep.mubr.bf16.mxu0 %v2449
        %2918 = vmatmul.mubr.bf16.gmra.mrb[0].mxu0 %v2448
        %v2919 = vpop.f32.mrb[0].mxu0
        %v2920 = vadd.f32 %v2563, %v2919
        %v2921 = vpop.f32.mrb[0].mxu0
        %v2922 = vpop.f32.mrb[0].mxu0
        %v2923 = vadd.f32 %v2563, %v2922
        %v2924 = vpop.f32.mrb[0].mxu0
        %2925 = vmatprep.mubr.bf16.mxu0 %v2454
        %2926 = vmatmul.mubr.bf16.gmra.mrb[0].mxu0 %v2453
        %v2927 = vpop.f32.mrb[0].mxu0
        %v2928 = vadd.f32 %v2563, %v2927
        %v2929 = vpop.f32.mrb[0].mxu0
        %v2930 = vpop.f32.mrb[0].mxu0
        %v2931 = vadd.f32 %v2563, %v2930
        %v2932 = vpop.f32.mrb[0].mxu0
        %2933 = vmatprep.mubr.bf16.mxu0 %v2459
        %2934 = vmatmul.mubr.bf16.gmra.mrb[0].mxu0 %v2458
        %v2935 = vpop.f32.mrb[0].mxu0
        %v2936 = vadd.f32 %v2563, %v2935
        %v2937 = vpop.f32.mrb[0].mxu0
        %v2938 = vpop.f32.mrb[0].mxu0
        %v2939 = vadd.f32 %v2563, %v2938
        %v2940 = vpop.f32.mrb[0].mxu0
        %2941 = vmatprep.mubr.bf16.mxu0 %v2464
        %2942 = vmatmul.mubr.bf16.gmra.mrb[0].mxu0 %v2463
        %v2943 = vpop.f32.mrb[0].mxu0
        %v2944 = vadd.f32 %v2563, %v2943
        %v2945 = vpop.f32.mrb[0].mxu0
        %v2946 = vpop.f32.mrb[0].mxu0
        %v2947 = vadd.f32 %v2563, %v2946
        %v2948 = vpop.f32.mrb[0].mxu0
        %2949 = vmatprep.mubr.bf16.mxu0 %v2469
        %2950 = vmatmul.mubr.bf16.gmra.mrb[0].mxu0 %v2468
        %v2951 = vpop.f32.mrb[0].mxu0
        %v2952 = vadd.f32 %v2563, %v2951
        %v2953 = vpop.f32.mrb[0].mxu0
        %v2954 = vpop.f32.mrb[0].mxu0
        %v2955 = vadd.f32 %v2563, %v2954
        %v2956 = vpop.f32.mrb[0].mxu0
        %2957 = vmatprep.mubr.bf16.mxu0 %v2474
        %2958 = vmatmul.mubr.bf16.gmra.mrb[0].mxu0 %v2473
        %v2959 = vpop.f32.mrb[0].mxu0
        %v2960 = vadd.f32 %v2563, %v2959
        %v2961 = vpop.f32.mrb[0].mxu0
        %v2962 = vpop.f32.mrb[0].mxu0
        %v2963 = vadd.f32 %v2563, %v2962
        %v2964 = vpop.f32.mrb[0].mxu0
        %2965 = vdwg.mxu0
        %2966 = vmatprep.subr.bf16.mxu0 0
        %2967 = vmatpush1.bf16.msra.mxu0 %v2741
        %2968 = vmatprep.subr.bf16.mxu0 0
        %2969 = vmatpush1.bf16.msra.mxu0 %v2742
        %2970 = vmatprep.subr.bf16.mxu0 0
        %2971 = vmatpush1.bf16.msra.mxu0 %v2743
        %2972 = vmatprep.subr.bf16.mxu0 0
        %2973 = vmatpush1.bf16.msra.mxu0 %v2744
        %2974 = vmatprep.subr.bf16.mxu0 0
        %2975 = vmatpush1.bf16.msra.mxu0 %v2745
        %2976 = vmatprep.subr.bf16.mxu0 0
        %2977 = vmatpush1.bf16.msra.mxu0 %v2746
        %2978 = vmatprep.subr.bf16.mxu0 0
        %2979 = vmatpush1.bf16.msra.mxu0 %v2747
        %2980 = vmatprep.subr.bf16.mxu0 0
        %2981 = vmatpush1.bf16.msra.mxu0 %v2748
        %2982 = vmatprep.subr.bf16.mxu0 0
        %2983 = vmatpush1.bf16.msra.mxu0 %v2749
        %2984 = vmatprep.subr.bf16.mxu0 0
        %2985 = vmatpush1.bf16.msra.mxu0 %v2750
        %2986 = vmatprep.subr.bf16.mxu0 0
        %2987 = vmatpush1.bf16.msra.mxu0 %v2751
        %2988 = vmatprep.subr.bf16.mxu0 0
        %2989 = vmatpush1.bf16.msra.mxu0 %v2752
        %2990 = vmatprep.subr.bf16.mxu0 0
        %2991 = vmatpush1.bf16.msra.mxu0 %v2753
        %2992 = vmatprep.subr.bf16.mxu0 0
        %2993 = vmatpush1.bf16.msra.mxu0 %v2754
        %2994 = vmatprep.subr.bf16.mxu0 0
        %2995 = vmatpush1.bf16.msra.mxu0 %v2755
        %2996 = vmatprep.subr.bf16.mxu0 0
        %2997 = vmatpush1.bf16.msra.mxu0 %v2756
        %2998 = vmatprep.mubr.bf16.mxu0 %v2401
        %2999 = vmatmul.mubr.bf16.gmra.mrb[0].mxu0 %v2400
        %v3000 = vpop.f32.mrb[0].mxu0
        %v3001 = vadd.f32 %v2840, %v3000
        %v3002 = vpop.f32.mrb[0].mxu0
        %v3003 = vpop.f32.mrb[0].mxu0
        %v3004 = vadd.f32 %v2843, %v3003
        %v3005 = vpop.f32.mrb[0].mxu0
        %3006 = vmatprep.mubr.bf16.mxu0 %v2406
        %3007 = vmatmul.mubr.bf16.gmra.mrb[0].mxu0 %v2405
        %v3008 = vpop.f32.mrb[0].mxu0
        %v3009 = vadd.f32 %v2848, %v3008
        %v3010 = vpop.f32.mrb[0].mxu0
        %v3011 = vpop.f32.mrb[0].mxu0
        %v3012 = vadd.f32 %v2851, %v3011
        %v3013 = vpop.f32.mrb[0].mxu0
        %3014 = vmatprep.mubr.bf16.mxu0 %v2411
        %3015 = vmatmul.mubr.bf16.gmra.mrb[0].mxu0 %v2410
        %v3016 = vpop.f32.mrb[0].mxu0
        %v3017 = vadd.f32 %v2856, %v3016
        %v3018 = vpop.f32.mrb[0].mxu0
        %v3019 = vpop.f32.mrb[0].mxu0
        %v3020 = vadd.f32 %v2859, %v3019
        %v3021 = vpop.f32.mrb[0].mxu0
        %3022 = vmatprep.mubr.bf16.mxu0 %v2416
        %3023 = vmatmul.mubr.bf16.gmra.mrb[0].mxu0 %v2415
        %v3024 = vpop.f32.mrb[0].mxu0
        %v3025 = vadd.f32 %v2864, %v3024
        %v3026 = vpop.f32.mrb[0].mxu0
        %v3027 = vpop.f32.mrb[0].mxu0
        %v3028 = vadd.f32 %v2867, %v3027
        %v3029 = vpop.f32.mrb[0].mxu0
        %3030 = vmatprep.mubr.bf16.mxu0 %v2421
        %3031 = vmatmul.mubr.bf16.gmra.mrb[0].mxu0 %v2420
        %v3032 = vpop.f32.mrb[0].mxu0
        %v3033 = vadd.f32 %v2872, %v3032
        %v3034 = vpop.f32.mrb[0].mxu0
        %v3035 = vpop.f32.mrb[0].mxu0
        %v3036 = vadd.f32 %v2875, %v3035
        %v3037 = vpop.f32.mrb[0].mxu0
        %3038 = vmatprep.mubr.bf16.mxu0 %v2426
        %3039 = vmatmul.mubr.bf16.gmra.mrb[0].mxu0 %v2425
        %v3040 = vpop.f32.mrb[0].mxu0
        %v3041 = vadd.f32 %v2880, %v3040
        %v3042 = vpop.f32.mrb[0].mxu0
        %v3043 = vpop.f32.mrb[0].mxu0
        %v3044 = vadd.f32 %v2883, %v3043
        %v3045 = vpop.f32.mrb[0].mxu0
        %3046 = vmatprep.mubr.bf16.mxu0 %v2431
        %3047 = vmatmul.mubr.bf16.gmra.mrb[0].mxu0 %v2430
        %v3048 = vpop.f32.mrb[0].mxu0
        %v3049 = vadd.f32 %v2888, %v3048
        %v3050 = vpop.f32.mrb[0].mxu0
        %v3051 = vpop.f32.mrb[0].mxu0
        %v3052 = vadd.f32 %v2891, %v3051
        %v3053 = vpop.f32.mrb[0].mxu0
        %3054 = vmatprep.mubr.bf16.mxu0 %v2436
        %3055 = vmatmul.mubr.bf16.gmra.mrb[0].mxu0 %v2435
        %v3056 = vpop.f32.mrb[0].mxu0
        %v3057 = vadd.f32 %v2896, %v3056
        %v3058 = vpop.f32.mrb[0].mxu0
        %v3059 = vpop.f32.mrb[0].mxu0
        %v3060 = vadd.f32 %v2899, %v3059
        %v3061 = vpop.f32.mrb[0].mxu0
        %3062 = vmatprep.mubr.bf16.mxu0 %v2441
        %3063 = vmatmul.mubr.bf16.gmra.mrb[0].mxu0 %v2440
        %v3064 = vpop.f32.mrb[0].mxu0
        %v3065 = vadd.f32 %v2904, %v3064
        %v3066 = vpop.f32.mrb[0].mxu0
        %v3067 = vpop.f32.mrb[0].mxu0
        %v3068 = vadd.f32 %v2907, %v3067
        %v3069 = vpop.f32.mrb[0].mxu0
        %3070 = vmatprep.mubr.bf16.mxu0 %v2446
        %3071 = vmatmul.mubr.bf16.gmra.mrb[0].mxu0 %v2445
        %v3072 = vpop.f32.mrb[0].mxu0
        %v3073 = vadd.f32 %v2912, %v3072
        %v3074 = vpop.f32.mrb[0].mxu0
        %v3075 = vpop.f32.mrb[0].mxu0
        %v3076 = vadd.f32 %v2915, %v3075
        %v3077 = vpop.f32.mrb[0].mxu0
        %3078 = vmatprep.mubr.bf16.mxu0 %v2451
        %3079 = vmatmul.mubr.bf16.gmra.mrb[0].mxu0 %v2450
        %v3080 = vpop.f32.mrb[0].mxu0
        %v3081 = vadd.f32 %v2920, %v3080
        %v3082 = vpop.f32.mrb[0].mxu0
        %v3083 = vpop.f32.mrb[0].mxu0
        %v3084 = vadd.f32 %v2923, %v3083
        %v3085 = vpop.f32.mrb[0].mxu0
        %3086 = vmatprep.mubr.bf16.mxu0 %v2456
        %3087 = vmatmul.mubr.bf16.gmra.mrb[0].mxu0 %v2455
        %v3088 = vpop.f32.mrb[0].mxu0
        %v3089 = vadd.f32 %v2928, %v3088
        %v3090 = vpop.f32.mrb[0].mxu0
        %v3091 = vpop.f32.mrb[0].mxu0
        %v3092 = vadd.f32 %v2931, %v3091
        %v3093 = vpop.f32.mrb[0].mxu0
        %3094 = vmatprep.mubr.bf16.mxu0 %v2461
        %3095 = vmatmul.mubr.bf16.gmra.mrb[0].mxu0 %v2460
        %v3096 = vpop.f32.mrb[0].mxu0
        %v3097 = vadd.f32 %v2936, %v3096
        %v3098 = vpop.f32.mrb[0].mxu0
        %v3099 = vpop.f32.mrb[0].mxu0
        %v3100 = vadd.f32 %v2939, %v3099
        %v3101 = vpop.f32.mrb[0].mxu0
        %3102 = vmatprep.mubr.bf16.mxu0 %v2466
        %3103 = vmatmul.mubr.bf16.gmra.mrb[0].mxu0 %v2465
        %v3104 = vpop.f32.mrb[0].mxu0
        %v3105 = vadd.f32 %v2944, %v3104
        %v3106 = vpop.f32.mrb[0].mxu0
        %v3107 = vpop.f32.mrb[0].mxu0
        %v3108 = vadd.f32 %v2947, %v3107
        %v3109 = vpop.f32.mrb[0].mxu0
        %3110 = vmatprep.mubr.bf16.mxu0 %v2471
        %3111 = vmatmul.mubr.bf16.gmra.mrb[0].mxu0 %v2470
        %v3112 = vpop.f32.mrb[0].mxu0
        %v3113 = vadd.f32 %v2952, %v3112
        %v3114 = vpop.f32.mrb[0].mxu0
        %v3115 = vpop.f32.mrb[0].mxu0
        %v3116 = vadd.f32 %v2955, %v3115
        %v3117 = vpop.f32.mrb[0].mxu0
        %3118 = vmatprep.mubr.bf16.mxu0 %v2476
        %3119 = vmatmul.mubr.bf16.gmra.mrb[0].mxu0 %v2475
        %v3120 = vpop.f32.mrb[0].mxu0
        %v3121 = vadd.f32 %v2960, %v3120
        %v3122 = vpop.f32.mrb[0].mxu0
        %v3123 = vpop.f32.mrb[0].mxu0
        %v3124 = vadd.f32 %v2963, %v3123
        %v3125 = vpop.f32.mrb[0].mxu0
        %3126 = vdwg.mxu0
        %3127 = vmatprep.subr.bf16.mxu0 0
        %3128 = vmatpush1.bf16.msra.mxu0 %v2757
        %3129 = vmatprep.subr.bf16.mxu0 0
        %3130 = vmatpush1.bf16.msra.mxu0 %v2758
        %3131 = vmatprep.subr.bf16.mxu0 0
        %3132 = vmatpush1.bf16.msra.mxu0 %v2759
        %3133 = vmatprep.subr.bf16.mxu0 0
        %3134 = vmatpush1.bf16.msra.mxu0 %v2760
        %3135 = vmatprep.subr.bf16.mxu0 0
        %3136 = vmatpush1.bf16.msra.mxu0 %v2761
        %3137 = vmatprep.subr.bf16.mxu0 0
        %3138 = vmatpush1.bf16.msra.mxu0 %v2762
        %3139 = vmatprep.subr.bf16.mxu0 0
        %3140 = vmatpush1.bf16.msra.mxu0 %v2763
        %3141 = vmatprep.subr.bf16.mxu0 0
        %3142 = vmatpush1.bf16.msra.mxu0 %v2764
        %3143 = vmatprep.subr.bf16.mxu0 0
        %3144 = vmatpush1.bf16.msra.mxu0 0
        %3145 = vmatprep.subr.bf16.mxu0 0
        %3146 = vmatpush1.bf16.msra.mxu0 0
        %3147 = vmatprep.subr.bf16.mxu0 0
        %3148 = vmatpush1.bf16.msra.mxu0 0
        %3149 = vmatprep.subr.bf16.mxu0 0
        %3150 = vmatpush1.bf16.msra.mxu0 0
        %3151 = vmatprep.subr.bf16.mxu0 0
        %3152 = vmatpush1.bf16.msra.mxu0 0
        %3153 = vmatprep.subr.bf16.mxu0 0
        %3154 = vmatpush1.bf16.msra.mxu0 0
        %3155 = vmatprep.subr.bf16.mxu0 0
        %3156 = vmatpush1.bf16.msra.mxu0 0
        %3157 = vmatprep.subr.bf16.mxu0 0
        %3158 = vmatpush1.bf16.msra.mxu0 0
        %3159 = vmatprep.mubr.bf16.mxu0 0
        %3160 = vmatmul.mubr.bf16.gmra.mrb[0].mxu0 %v2402
        %v3161 = vpop.f32.mrb[0].mxu0
        %v3162 = vadd.f32 %v3001, %v3161
        %v3163 = vpop.f32.mrb[0].mxu0
        %v3164 = vpop.f32.mrb[0].mxu0
        %v3165 = vadd.f32 %v3004, %v3164
        %v3166 = vpop.f32.mrb[0].mxu0
        %3167 = vmatprep.mubr.bf16.mxu0 0
        %3168 = vmatmul.mubr.bf16.gmra.mrb[0].mxu0 %v2407
        %v3169 = vpop.f32.mrb[0].mxu0
        %v3170 = vadd.f32 %v3009, %v3169
        %v3171 = vpop.f32.mrb[0].mxu0
        %v3172 = vpop.f32.mrb[0].mxu0
        %v3173 = vadd.f32 %v3012, %v3172
        %v3174 = vpop.f32.mrb[0].mxu0
        %3175 = vmatprep.mubr.bf16.mxu0 0
        %3176 = vmatmul.mubr.bf16.gmra.mrb[0].mxu0 %v2412
        %v3177 = vpop.f32.mrb[0].mxu0
        %v3178 = vadd.f32 %v3017, %v3177
        %v3179 = vpop.f32.mrb[0].mxu0
        %v3180 = vpop.f32.mrb[0].mxu0
        %v3181 = vadd.f32 %v3020, %v3180
        %v3182 = vpop.f32.mrb[0].mxu0
        %3183 = vmatprep.mubr.bf16.mxu0 0
        %3184 = vmatmul.mubr.bf16.gmra.mrb[0].mxu0 %v2417
        %v3185 = vpop.f32.mrb[0].mxu0
        %v3186 = vadd.f32 %v3025, %v3185
        %v3187 = vpop.f32.mrb[0].mxu0
        %v3188 = vpop.f32.mrb[0].mxu0
        %v3189 = vadd.f32 %v3028, %v3188
        %v3190 = vpop.f32.mrb[0].mxu0
        %3191 = vmatprep.mubr.bf16.mxu0 0
        %3192 = vmatmul.mubr.bf16.gmra.mrb[0].mxu0 %v2422
        %v3193 = vpop.f32.mrb[0].mxu0
        %v3194 = vadd.f32 %v3033, %v3193
        %v3195 = vpop.f32.mrb[0].mxu0
        %v3196 = vpop.f32.mrb[0].mxu0
        %v3197 = vadd.f32 %v3036, %v3196
        %v3198 = vpop.f32.mrb[0].mxu0
        %3199 = vmatprep.mubr.bf16.mxu0 0
        %3200 = vmatmul.mubr.bf16.gmra.mrb[0].mxu0 %v2427
        %v3201 = vpop.f32.mrb[0].mxu0
        %v3202 = vadd.f32 %v3041, %v3201
        %v3203 = vpop.f32.mrb[0].mxu0
        %v3204 = vpop.f32.mrb[0].mxu0
        %v3205 = vadd.f32 %v3044, %v3204
        %v3206 = vpop.f32.mrb[0].mxu0
        %3207 = vmatprep.mubr.bf16.mxu0 0
        %3208 = vmatmul.mubr.bf16.gmra.mrb[0].mxu0 %v2432
        %v3209 = vpop.f32.mrb[0].mxu0
        %v3210 = vadd.f32 %v3049, %v3209
        %v3211 = vpop.f32.mrb[0].mxu0
        %v3212 = vpop.f32.mrb[0].mxu0
        %v3213 = vadd.f32 %v3052, %v3212
        %v3214 = vpop.f32.mrb[0].mxu0
        %3215 = vmatprep.mubr.bf16.mxu0 0
        %3216 = vmatmul.mubr.bf16.gmra.mrb[0].mxu0 %v2437
        %v3217 = vpop.f32.mrb[0].mxu0
        %v3218 = vadd.f32 %v3057, %v3217
        %v3219 = vpop.f32.mrb[0].mxu0
        %v3220 = vpop.f32.mrb[0].mxu0
        %v3221 = vadd.f32 %v3060, %v3220
        %v3222 = vpop.f32.mrb[0].mxu0
        %3223 = vmatprep.mubr.bf16.mxu0 0
        %3224 = vmatmul.mubr.bf16.gmra.mrb[0].mxu0 %v2442
        %v3225 = vpop.f32.mrb[0].mxu0
        %v3226 = vadd.f32 %v3065, %v3225
        %v3227 = vpop.f32.mrb[0].mxu0
        %v3228 = vpop.f32.mrb[0].mxu0
        %v3229 = vadd.f32 %v3068, %v3228
        %v3230 = vpop.f32.mrb[0].mxu0
        %3231 = vmatprep.mubr.bf16.mxu0 0
        %3232 = vmatmul.mubr.bf16.gmra.mrb[0].mxu0 %v2447
        %v3233 = vpop.f32.mrb[0].mxu0
        %v3234 = vadd.f32 %v3073, %v3233
        %v3235 = vpop.f32.mrb[0].mxu0
        %v3236 = vpop.f32.mrb[0].mxu0
        %v3237 = vadd.f32 %v3076, %v3236
        %v3238 = vpop.f32.mrb[0].mxu0
        %3239 = vmatprep.mubr.bf16.mxu0 0
        %3240 = vmatmul.mubr.bf16.gmra.mrb[0].mxu0 %v2452
        %v3241 = vpop.f32.mrb[0].mxu0
        %v3242 = vadd.f32 %v3081, %v3241
        %v3243 = vpop.f32.mrb[0].mxu0
        %v3244 = vpop.f32.mrb[0].mxu0
        %v3245 = vadd.f32 %v3084, %v3244
        %v3246 = vpop.f32.mrb[0].mxu0
        %3247 = vmatprep.mubr.bf16.mxu0 0
        %3248 = vmatmul.mubr.bf16.gmra.mrb[0].mxu0 %v2457
        %v3249 = vpop.f32.mrb[0].mxu0
        %v3250 = vadd.f32 %v3089, %v3249
        %v3251 = vpop.f32.mrb[0].mxu0
        %v3252 = vpop.f32.mrb[0].mxu0
        %v3253 = vadd.f32 %v3092, %v3252
        %v3254 = vpop.f32.mrb[0].mxu0
        %3255 = vmatprep.mubr.bf16.mxu0 0
        %3256 = vmatmul.mubr.bf16.gmra.mrb[0].mxu0 %v2462
        %v3257 = vpop.f32.mrb[0].mxu0
        %v3258 = vadd.f32 %v3097, %v3257
        %v3259 = vpop.f32.mrb[0].mxu0
        %v3260 = vpop.f32.mrb[0].mxu0
        %v3261 = vadd.f32 %v3100, %v3260
        %v3262 = vpop.f32.mrb[0].mxu0
        %3263 = vmatprep.mubr.bf16.mxu0 0
        %3264 = vmatmul.mubr.bf16.gmra.mrb[0].mxu0 %v2467
        %v3265 = vpop.f32.mrb[0].mxu0
        %v3266 = vadd.f32 %v3105, %v3265
        %v3267 = vpop.f32.mrb[0].mxu0
        %v3268 = vpop.f32.mrb[0].mxu0
        %v3269 = vadd.f32 %v3108, %v3268
        %v3270 = vpop.f32.mrb[0].mxu0
        %3271 = vmatprep.mubr.bf16.mxu0 0
        %3272 = vmatmul.mubr.bf16.gmra.mrb[0].mxu0 %v2472
        %v3273 = vpop.f32.mrb[0].mxu0
        %v3274 = vadd.f32 %v3113, %v3273
        %v3275 = vpop.f32.mrb[0].mxu0
        %v3276 = vpop.f32.mrb[0].mxu0
        %v3277 = vadd.f32 %v3116, %v3276
        %v3278 = vpop.f32.mrb[0].mxu0
        %3279 = vmatprep.mubr.bf16.mxu0 0
        %3280 = vmatmul.mubr.bf16.gmra.mrb[0].mxu0 %v2477
        %v3281 = vpop.f32.mrb[0].mxu0
        %v3282 = vadd.f32 %v3121, %v3281
        %v3283 = vpop.f32.mrb[0].mxu0
        %v3284 = vpop.f32.mrb[0].mxu0
        %v3285 = vadd.f32 %v3124, %v3284
        %v3286 = vpop.f32.mrb[0].mxu0
        %3287 = vdwg.mxu0
        %v3288 = vmax.f32 %v3162, 0.0
        %v3289 = vmax.f32 %v3165, 0.0
        %v3290 = vmax.f32 %v3170, 0.0
        %v3291 = vmax.f32 %v3173, 0.0
        %v3292 = vmax.f32 %v3178, 0.0
        %v3293 = vmax.f32 %v3181, 0.0
        %v3294 = vmax.f32 %v3186, 0.0
        %v3295 = vmax.f32 %v3189, 0.0
        %v3296 = vmax.f32 %v3194, 0.0
        %v3297 = vmax.f32 %v3197, 0.0
        %v3298 = vmax.f32 %v3202, 0.0
        %v3299 = vmax.f32 %v3205, 0.0
        %v3300 = vmax.f32 %v3210, 0.0
        %v3301 = vmax.f32 %v3213, 0.0
        %v3302 = vmax.f32 %v3218, 0.0
        %v3303 = vmax.f32 %v3221, 0.0
        %v3304 = vmax.f32 %v3226, 0.0
        %v3305 = vmax.f32 %v3229, 0.0
        %v3306 = vmax.f32 %v3234, 0.0
        %v3307 = vmax.f32 %v3237, 0.0
        %v3308 = vmax.f32 %v3242, 0.0
        %v3309 = vmax.f32 %v3245, 0.0
        %v3310 = vmax.f32 %v3250, 0.0
        %v3311 = vmax.f32 %v3253, 0.0
        %v3312 = vmax.f32 %v3258, 0.0
        %v3313 = vmax.f32 %v3261, 0.0
        %v3314 = vmax.f32 %v3266, 0.0
        %v3315 = vmax.f32 %v3269, 0.0
        %v3316 = vmax.f32 %v3274, 0.0
        %v3317 = vmax.f32 %v3277, 0.0
        %v3318 = vmax.f32 %v3282, 0.0
        %v3319 = vmax.f32 %v3285, 0.0
        %v3320 = vpack.c.bf16 %v3289, %v3288
        %v3321 = vpack.c.bf16 %v3291, %v3290
        %v3322 = vpack.c.bf16 %v3293, %v3292
        %v3323 = vpack.c.bf16 %v3295, %v3294
        %v3324 = vpack.c.bf16 %v3297, %v3296
        %v3325 = vpack.c.bf16 %v3299, %v3298
        %v3326 = vpack.c.bf16 %v3301, %v3300
        %v3327 = vpack.c.bf16 %v3303, %v3302
        %v3328 = vpack.c.bf16 %v3305, %v3304
        %v3329 = vpack.c.bf16 %v3307, %v3306
        %v3330 = vpack.c.bf16 %v3309, %v3308
        %v3331 = vpack.c.bf16 %v3311, %v3310
        %v3332 = vpack.c.bf16 %v3313, %v3312
        %v3333 = vpack.c.bf16 %v3315, %v3314
        %v3334 = vpack.c.bf16 %v3317, %v3316
        %v3335 = vpack.c.bf16 %v3319, %v3318
        %3336 = vst [vmem:[#allocation3 + $0x8] sm:$0xff] %v3320
        %3337 = vst [vmem:[#allocation3 + $0x10] sm:$0xff] %v3321
        %3338 = vst [vmem:[#allocation3 + $0x18] sm:$0xff] %v3322
        %3339 = vst [vmem:[#allocation3 + $0x20] sm:$0xff] %v3323
        %3340 = vst [vmem:[#allocation3 + $0x28] sm:$0xff] %v3324
        %3341 = vst [vmem:[#allocation3 + $0x30] sm:$0xff] %v3325
        %3342 = vst [vmem:[#allocation3 + $0x38] sm:$0xff] %v3326
        %3343 = vst [vmem:[#allocation3 + $0x40] sm:$0xff] %v3327
        %3344 = vst [vmem:[#allocation3 + $0x48] sm:$0xff] %v3328
        %3345 = vst [vmem:[#allocation3 + $0x50] sm:$0xff] %v3329
        %3346 = vst [vmem:[#allocation3 + $0x58] sm:$0xff] %v3330
        %3347 = vst [vmem:[#allocation3 + $0x60] sm:$0xff] %v3331
        %3348 = vst [vmem:[#allocation3 + $0x68] sm:$0xff] %v3332
        %3349 = vst [vmem:[#allocation3 + $0x70] sm:$0xff] %v3333
        %3350 = vst [vmem:[#allocation3 + $0x78] sm:$0xff] %v3334
        %3351 = vst [vmem:[#allocation3 + $0x80] sm:$0xff] %v3335
        %v3352 = vld [vmem:[#allocation3] sm:$0xf0]
        %v3353 = vld [vmem:[#allocation3 + $0x8] sm:$0xff]
        %v3354 = vld [vmem:[#allocation3 + $0x10] sm:$0xff]
        %v3355 = vld [vmem:[#allocation3 + $0x18] sm:$0xff]
        %v3356 = vld [vmem:[#allocation3 + $0x20] sm:$0xff]
        %v3357 = vld [vmem:[#allocation3 + $0x28] sm:$0xff]
        %v3358 = vld [vmem:[#allocation3 + $0x30] sm:$0xff]
        %v3359 = vld [vmem:[#allocation3 + $0x38] sm:$0xff]
        %v3360 = vld [vmem:[#allocation3 + $0x40] sm:$0xff]
        %v3361 = vld [vmem:[#allocation3 + $0x48] sm:$0xff]
        %v3362 = vld [vmem:[#allocation3 + $0x50] sm:$0xff]
        %v3363 = vld [vmem:[#allocation3 + $0x58] sm:$0xff]
        %v3364 = vld [vmem:[#allocation3 + $0x60] sm:$0xff]
        %v3365 = vld [vmem:[#allocation3 + $0x68] sm:$0xff]
        %v3366 = vld [vmem:[#allocation3 + $0x70] sm:$0xff]
        %v3367 = vld [vmem:[#allocation3 + $0x78] sm:$0xff]
        %v3368 = vld [vmem:[#allocation3 + $0x80] sm:$0xf]
        %v3386 = vrot.slane %v3352, 4
        %v3387 = vrot.slane %v3353, 4
        %v3388 = vsel %vm722, %v3386, %v3387
        %v3389 = vrot.slane %v3354, 4
        %v3390 = vsel %vm722, %v3387, %v3389
        %v3391 = vrot.slane %v3355, 4
        %v3392 = vsel %vm722, %v3389, %v3391
        %v3393 = vrot.slane %v3356, 4
        %v3394 = vsel %vm722, %v3391, %v3393
        %v3395 = vrot.slane %v3357, 4
        %v3396 = vsel %vm722, %v3393, %v3395
        %v3397 = vrot.slane %v3358, 4
        %v3398 = vsel %vm722, %v3395, %v3397
        %v3399 = vrot.slane %v3359, 4
        %v3400 = vsel %vm722, %v3397, %v3399
        %v3401 = vrot.slane %v3360, 4
        %v3402 = vsel %vm722, %v3399, %v3401
        %v3403 = vrot.slane %v3361, 4
        %v3404 = vsel %vm722, %v3401, %v3403
        %v3405 = vrot.slane %v3362, 4
        %v3406 = vsel %vm722, %v3403, %v3405
        %v3407 = vrot.slane %v3363, 4
        %v3408 = vsel %vm722, %v3405, %v3407
        %v3409 = vrot.slane %v3364, 4
        %v3410 = vsel %vm722, %v3407, %v3409
        %v3411 = vrot.slane %v3365, 4
        %v3412 = vsel %vm722, %v3409, %v3411
        %v3413 = vrot.slane %v3366, 4
        %v3414 = vsel %vm722, %v3411, %v3413
        %v3415 = vrot.slane %v3367, 4
        %v3416 = vsel %vm722, %v3413, %v3415
        %v3417 = vrot.slane %v3368, 4
        %v3418 = vsel %vm722, %v3415, %v3417
        %3435 = vst [vmem:[#allocation4] sm:$0xff] %v3388
        %3436 = vst [vmem:[#allocation4 + $0x28] sm:$0xff] %v3390
        %3437 = vst [vmem:[#allocation4 + $0x50] sm:$0xff] %v3392
        %3438 = vst [vmem:[#allocation4 + $0x78] sm:$0xff] %v3394
        %3439 = vst [vmem:[#allocation4 + $0xa0] sm:$0xff] %v3396
        %3440 = vst [vmem:[#allocation4 + $0xc8] sm:$0xff] %v3398
        %3441 = vst [vmem:[#allocation4 + $0xf0] sm:$0xff] %v3400
        %3442 = vst [vmem:[#allocation4 + $0x118] sm:$0xff] %v3402
        %3443 = vst [vmem:[#allocation4 + $0x140] sm:$0xff] %v3404
        %3444 = vst [vmem:[#allocation4 + $0x168] sm:$0xff] %v3406
        %3445 = vst [vmem:[#allocation4 + $0x190] sm:$0xff] %v3408
        %3446 = vst [vmem:[#allocation4 + $0x1b8] sm:$0xff] %v3410
        %3447 = vst [vmem:[#allocation4 + $0x1e0] sm:$0xff] %v3412
        %3448 = vst [vmem:[#allocation4 + $0x208] sm:$0xff] %v3414
        %3449 = vst [vmem:[#allocation4 + $0x230] sm:$0xff] %v3416
        %3450 = vst [vmem:[#allocation4 + $0x258] sm:$0xff] %v3418
        %v3451 = vld [vmem:[#allocation3] sm:$0xc0]
        %v3452 = vld [vmem:[#allocation3 + $0x8] sm:$0xff]
        %v3453 = vld [vmem:[#allocation3 + $0x10] sm:$0xff]
        %v3454 = vld [vmem:[#allocation3 + $0x18] sm:$0xff]
        %v3455 = vld [vmem:[#allocation3 + $0x20] sm:$0xff]
        %v3456 = vld [vmem:[#allocation3 + $0x28] sm:$0xff]
        %v3457 = vld [vmem:[#allocation3 + $0x30] sm:$0xff]
        %v3458 = vld [vmem:[#allocation3 + $0x38] sm:$0xff]
        %v3459 = vld [vmem:[#allocation3 + $0x40] sm:$0xff]
        %v3460 = vld [vmem:[#allocation3 + $0x48] sm:$0xff]
        %v3461 = vld [vmem:[#allocation3 + $0x50] sm:$0xff]
        %v3462 = vld [vmem:[#allocation3 + $0x58] sm:$0xff]
        %v3463 = vld [vmem:[#allocation3 + $0x60] sm:$0xff]
        %v3464 = vld [vmem:[#allocation3 + $0x68] sm:$0xff]
        %v3465 = vld [vmem:[#allocation3 + $0x70] sm:$0xff]
        %v3466 = vld [vmem:[#allocation3 + $0x78] sm:$0xff]
        %v3467 = vld [vmem:[#allocation3 + $0x80] sm:$0x3f]
        %v3485 = vrot.slane %v3451, 6
        %v3486 = vrot.slane %v3452, 6
        %v3487 = vsel %vm2000, %v3485, %v3486
        %v3488 = vrot.slane %v3453, 6
        %v3489 = vsel %vm2000, %v3486, %v3488
        %v3490 = vrot.slane %v3454, 6
        %v3491 = vsel %vm2000, %v3488, %v3490
        %v3492 = vrot.slane %v3455, 6
        %v3493 = vsel %vm2000, %v3490, %v3492
        %v3494 = vrot.slane %v3456, 6
        %v3495 = vsel %vm2000, %v3492, %v3494
        %v3496 = vrot.slane %v3457, 6
        %v3497 = vsel %vm2000, %v3494, %v3496
        %v3498 = vrot.slane %v3458, 6
        %v3499 = vsel %vm2000, %v3496, %v3498
        %v3500 = vrot.slane %v3459, 6
        %v3501 = vsel %vm2000, %v3498, %v3500
        %v3502 = vrot.slane %v3460, 6
        %v3503 = vsel %vm2000, %v3500, %v3502
        %v3504 = vrot.slane %v3461, 6
        %v3505 = vsel %vm2000, %v3502, %v3504
        %v3506 = vrot.slane %v3462, 6
        %v3507 = vsel %vm2000, %v3504, %v3506
        %v3508 = vrot.slane %v3463, 6
        %v3509 = vsel %vm2000, %v3506, %v3508
        %v3510 = vrot.slane %v3464, 6
        %v3511 = vsel %vm2000, %v3508, %v3510
        %v3512 = vrot.slane %v3465, 6
        %v3513 = vsel %vm2000, %v3510, %v3512
        %v3514 = vrot.slane %v3466, 6
        %v3515 = vsel %vm2000, %v3512, %v3514
        %v3516 = vrot.slane %v3467, 6
        %v3517 = vsel %vm2000, %v3514, %v3516
        %3534 = vst [vmem:[#allocation4 + $0x8] sm:$0xff] %v3487
        %3535 = vst [vmem:[#allocation4 + $0x30] sm:$0xff] %v3489
        %3536 = vst [vmem:[#allocation4 + $0x58] sm:$0xff] %v3491
        %3537 = vst [vmem:[#allocation4 + $0x80] sm:$0xff] %v3493
        %3538 = vst [vmem:[#allocation4 + $0xa8] sm:$0xff] %v3495
        %3539 = vst [vmem:[#allocation4 + $0xd0] sm:$0xff] %v3497
        %3540 = vst [vmem:[#allocation4 + $0xf8] sm:$0xff] %v3499
        %3541 = vst [vmem:[#allocation4 + $0x120] sm:$0xff] %v3501
        %3542 = vst [vmem:[#allocation4 + $0x148] sm:$0xff] %v3503
        %3543 = vst [vmem:[#allocation4 + $0x170] sm:$0xff] %v3505
        %3544 = vst [vmem:[#allocation4 + $0x198] sm:$0xff] %v3507
        %3545 = vst [vmem:[#allocation4 + $0x1c0] sm:$0xff] %v3509
        %3546 = vst [vmem:[#allocation4 + $0x1e8] sm:$0xff] %v3511
        %3547 = vst [vmem:[#allocation4 + $0x210] sm:$0xff] %v3513
        %3548 = vst [vmem:[#allocation4 + $0x238] sm:$0xff] %v3515
        %3549 = vst [vmem:[#allocation4 + $0x260] sm:$0xff] %v3517
        %v3550 = vld [vmem:[#allocation3 + $0x8] sm:$0xff]
        %v3551 = vld [vmem:[#allocation3 + $0x10] sm:$0xff]
        %v3552 = vld [vmem:[#allocation3 + $0x18] sm:$0xff]
        %v3553 = vld [vmem:[#allocation3 + $0x20] sm:$0xff]
        %v3554 = vld [vmem:[#allocation3 + $0x28] sm:$0xff]
        %v3555 = vld [vmem:[#allocation3 + $0x30] sm:$0xff]
        %v3556 = vld [vmem:[#allocation3 + $0x38] sm:$0xff]
        %v3557 = vld [vmem:[#allocation3 + $0x40] sm:$0xff]
        %v3558 = vld [vmem:[#allocation3 + $0x48] sm:$0xff]
        %v3559 = vld [vmem:[#allocation3 + $0x50] sm:$0xff]
        %v3560 = vld [vmem:[#allocation3 + $0x58] sm:$0xff]
        %v3561 = vld [vmem:[#allocation3 + $0x60] sm:$0xff]
        %v3562 = vld [vmem:[#allocation3 + $0x68] sm:$0xff]
        %v3563 = vld [vmem:[#allocation3 + $0x70] sm:$0xff]
        %v3564 = vld [vmem:[#allocation3 + $0x78] sm:$0xff]
        %v3565 = vld [vmem:[#allocation3 + $0x80] sm:$0xff]
        %3566 = vst [vmem:[#allocation4 + $0x10] sm:$0xff] %v3550
        %3567 = vst [vmem:[#allocation4 + $0x38] sm:$0xff] %v3551
        %3568 = vst [vmem:[#allocation4 + $0x60] sm:$0xff] %v3552
        %3569 = vst [vmem:[#allocation4 + $0x88] sm:$0xff] %v3553
        %3570 = vst [vmem:[#allocation4 + $0xb0] sm:$0xff] %v3554
        %3571 = vst [vmem:[#allocation4 + $0xd8] sm:$0xff] %v3555
        %3572 = vst [vmem:[#allocation4 + $0x100] sm:$0xff] %v3556
        %3573 = vst [vmem:[#allocation4 + $0x128] sm:$0xff] %v3557
        %3574 = vst [vmem:[#allocation4 + $0x150] sm:$0xff] %v3558
        %3575 = vst [vmem:[#allocation4 + $0x178] sm:$0xff] %v3559
        %3576 = vst [vmem:[#allocation4 + $0x1a0] sm:$0xff] %v3560
        %3577 = vst [vmem:[#allocation4 + $0x1c8] sm:$0xff] %v3561
        %3578 = vst [vmem:[#allocation4 + $0x1f0] sm:$0xff] %v3562
        %3579 = vst [vmem:[#allocation4 + $0x218] sm:$0xff] %v3563
        %3580 = vst [vmem:[#allocation4 + $0x240] sm:$0xff] %v3564
        %3581 = vst [vmem:[#allocation4 + $0x268] sm:$0xff] %v3565
        %v3582 = vld [vmem:[#allocation3 + $0x8] sm:$0xfc]
        %v3583 = vld [vmem:[#allocation3 + $0x10] sm:$0xff]
        %v3584 = vld [vmem:[#allocation3 + $0x18] sm:$0xff]
        %v3585 = vld [vmem:[#allocation3 + $0x20] sm:$0xff]
        %v3586 = vld [vmem:[#allocation3 + $0x28] sm:$0xff]
        %v3587 = vld [vmem:[#allocation3 + $0x30] sm:$0xff]
        %v3588 = vld [vmem:[#allocation3 + $0x38] sm:$0xff]
        %v3589 = vld [vmem:[#allocation3 + $0x40] sm:$0xff]
        %v3590 = vld [vmem:[#allocation3 + $0x48] sm:$0xff]
        %v3591 = vld [vmem:[#allocation3 + $0x50] sm:$0xff]
        %v3592 = vld [vmem:[#allocation3 + $0x58] sm:$0xff]
        %v3593 = vld [vmem:[#allocation3 + $0x60] sm:$0xff]
        %v3594 = vld [vmem:[#allocation3 + $0x68] sm:$0xff]
        %v3595 = vld [vmem:[#allocation3 + $0x70] sm:$0xff]
        %v3596 = vld [vmem:[#allocation3 + $0x78] sm:$0xff]
        %v3597 = vld [vmem:[#allocation3 + $0x80] sm:$0xff]
        %v3598 = vld [vmem:[#allocation3 + $0x88] sm:$0x3]
        %v3616 = vrot.slane %v3582, 2
        %v3617 = vrot.slane %v3583, 2
        %v3618 = vsel %vm2332, %v3616, %v3617
        %v3619 = vrot.slane %v3584, 2
        %v3620 = vsel %vm2332, %v3617, %v3619
        %v3621 = vrot.slane %v3585, 2
        %v3622 = vsel %vm2332, %v3619, %v3621
        %v3623 = vrot.slane %v3586, 2
        %v3624 = vsel %vm2332, %v3621, %v3623
        %v3625 = vrot.slane %v3587, 2
        %v3626 = vsel %vm2332, %v3623, %v3625
        %v3627 = vrot.slane %v3588, 2
        %v3628 = vsel %vm2332, %v3625, %v3627
        %v3629 = vrot.slane %v3589, 2
        %v3630 = vsel %vm2332, %v3627, %v3629
        %v3631 = vrot.slane %v3590, 2
        %v3632 = vsel %vm2332, %v3629, %v3631
        %v3633 = vrot.slane %v3591, 2
        %v3634 = vsel %vm2332, %v3631, %v3633
        %v3635 = vrot.slane %v3592, 2
        %v3636 = vsel %vm2332, %v3633, %v3635
        %v3637 = vrot.slane %v3593, 2
        %v3638 = vsel %vm2332, %v3635, %v3637
        %v3639 = vrot.slane %v3594, 2
        %v3640 = vsel %vm2332, %v3637, %v3639
        %v3641 = vrot.slane %v3595, 2
        %v3642 = vsel %vm2332, %v3639, %v3641
        %v3643 = vrot.slane %v3596, 2
        %v3644 = vsel %vm2332, %v3641, %v3643
        %v3645 = vrot.slane %v3597, 2
        %v3646 = vsel %vm2332, %v3643, %v3645
        %v3647 = vrot.slane %v3598, 2
        %v3648 = vsel %vm2332, %v3645, %v3647
        %3665 = vst [vmem:[#allocation4 + $0x18] sm:$0xff] %v3618
        %3666 = vst [vmem:[#allocation4 + $0x40] sm:$0xff] %v3620
        %3667 = vst [vmem:[#allocation4 + $0x68] sm:$0xff] %v3622
        %3668 = vst [vmem:[#allocation4 + $0x90] sm:$0xff] %v3624
        %3669 = vst [vmem:[#allocation4 + $0xb8] sm:$0xff] %v3626
        %3670 = vst [vmem:[#allocation4 + $0xe0] sm:$0xff] %v3628
        %3671 = vst [vmem:[#allocation4 + $0x108] sm:$0xff] %v3630
        %3672 = vst [vmem:[#allocation4 + $0x130] sm:$0xff] %v3632
        %3673 = vst [vmem:[#allocation4 + $0x158] sm:$0xff] %v3634
        %3674 = vst [vmem:[#allocation4 + $0x180] sm:$0xff] %v3636
        %3675 = vst [vmem:[#allocation4 + $0x1a8] sm:$0xff] %v3638
        %3676 = vst [vmem:[#allocation4 + $0x1d0] sm:$0xff] %v3640
        %3677 = vst [vmem:[#allocation4 + $0x1f8] sm:$0xff] %v3642
        %3678 = vst [vmem:[#allocation4 + $0x220] sm:$0xff] %v3644
        %3679 = vst [vmem:[#allocation4 + $0x248] sm:$0xff] %v3646
        %3680 = vst [vmem:[#allocation4 + $0x270] sm:$0xff] %v3648
        %v3681 = vld [vmem:[#allocation3 + $0x8] sm:$0xf0]
        %v3682 = vld [vmem:[#allocation3 + $0x10] sm:$0xff]
        %v3683 = vld [vmem:[#allocation3 + $0x18] sm:$0xff]
        %v3684 = vld [vmem:[#allocation3 + $0x20] sm:$0xff]
        %v3685 = vld [vmem:[#allocation3 + $0x28] sm:$0xff]
        %v3686 = vld [vmem:[#allocation3 + $0x30] sm:$0xff]
        %v3687 = vld [vmem:[#allocation3 + $0x38] sm:$0xff]
        %v3688 = vld [vmem:[#allocation3 + $0x40] sm:$0xff]
        %v3689 = vld [vmem:[#allocation3 + $0x48] sm:$0xff]
        %v3690 = vld [vmem:[#allocation3 + $0x50] sm:$0xff]
        %v3691 = vld [vmem:[#allocation3 + $0x58] sm:$0xff]
        %v3692 = vld [vmem:[#allocation3 + $0x60] sm:$0xff]
        %v3693 = vld [vmem:[#allocation3 + $0x68] sm:$0xff]
        %v3694 = vld [vmem:[#allocation3 + $0x70] sm:$0xff]
        %v3695 = vld [vmem:[#allocation3 + $0x78] sm:$0xff]
        %v3696 = vld [vmem:[#allocation3 + $0x80] sm:$0xff]
        %v3697 = vld [vmem:[#allocation3 + $0x88] sm:$0xf]
        %v3715 = vrot.slane %v3681, 4
        %v3716 = vrot.slane %v3682, 4
        %v3717 = vsel %vm722, %v3715, %v3716
        %v3718 = vrot.slane %v3683, 4
        %v3719 = vsel %vm722, %v3716, %v3718
        %v3720 = vrot.slane %v3684, 4
        %v3721 = vsel %vm722, %v3718, %v3720
        %v3722 = vrot.slane %v3685, 4
        %v3723 = vsel %vm722, %v3720, %v3722
        %v3724 = vrot.slane %v3686, 4
        %v3725 = vsel %vm722, %v3722, %v3724
        %v3726 = vrot.slane %v3687, 4
        %v3727 = vsel %vm722, %v3724, %v3726
        %v3728 = vrot.slane %v3688, 4
        %v3729 = vsel %vm722, %v3726, %v3728
        %v3730 = vrot.slane %v3689, 4
        %v3731 = vsel %vm722, %v3728, %v3730
        %v3732 = vrot.slane %v3690, 4
        %v3733 = vsel %vm722, %v3730, %v3732
        %v3734 = vrot.slane %v3691, 4
        %v3735 = vsel %vm722, %v3732, %v3734
        %v3736 = vrot.slane %v3692, 4
        %v3737 = vsel %vm722, %v3734, %v3736
        %v3738 = vrot.slane %v3693, 4
        %v3739 = vsel %vm722, %v3736, %v3738
        %v3740 = vrot.slane %v3694, 4
        %v3741 = vsel %vm722, %v3738, %v3740
        %v3742 = vrot.slane %v3695, 4
        %v3743 = vsel %vm722, %v3740, %v3742
        %v3744 = vrot.slane %v3696, 4
        %v3745 = vsel %vm722, %v3742, %v3744
        %v3746 = vrot.slane %v3697, 4
        %v3747 = vsel %vm722, %v3744, %v3746
        %3764 = vst [vmem:[#allocation4 + $0x20] sm:$0xff] %v3717
        %3765 = vst [vmem:[#allocation4 + $0x48] sm:$0xff] %v3719
        %3766 = vst [vmem:[#allocation4 + $0x70] sm:$0xff] %v3721
        %3767 = vst [vmem:[#allocation4 + $0x98] sm:$0xff] %v3723
        %3768 = vst [vmem:[#allocation4 + $0xc0] sm:$0xff] %v3725
        %3769 = vst [vmem:[#allocation4 + $0xe8] sm:$0xff] %v3727
        %3770 = vst [vmem:[#allocation4 + $0x110] sm:$0xff] %v3729
        %3771 = vst [vmem:[#allocation4 + $0x138] sm:$0xff] %v3731
        %3772 = vst [vmem:[#allocation4 + $0x160] sm:$0xff] %v3733
        %3773 = vst [vmem:[#allocation4 + $0x188] sm:$0xff] %v3735
        %3774 = vst [vmem:[#allocation4 + $0x1b0] sm:$0xff] %v3737
        %3775 = vst [vmem:[#allocation4 + $0x1d8] sm:$0xff] %v3739
        %3776 = vst [vmem:[#allocation4 + $0x200] sm:$0xff] %v3741
        %3777 = vst [vmem:[#allocation4 + $0x228] sm:$0xff] %v3743
        %3778 = vst [vmem:[#allocation4 + $0x250] sm:$0xff] %v3745
        %3779 = vst [vmem:[#allocation4 + $0x278] sm:$0xff] %v3747
        %v3780 = vld [vmem:[#allocation4] sm:$0xff]
        %v3781 = vld [vmem:[#allocation4 + $0x8] sm:$0xff]
        %v3782 = vld [vmem:[#allocation4 + $0x10] sm:$0xff]
        %v3783 = vld [vmem:[#allocation4 + $0x18] sm:$0xff]
        %v3784 = vld [vmem:[#allocation4 + $0x20] sm:$0xff]
        %v3785 = vld [vmem:[#allocation4 + $0x28] sm:$0xff]
        %v3786 = vld [vmem:[#allocation4 + $0x30] sm:$0xff]
        %v3787 = vld [vmem:[#allocation4 + $0x38] sm:$0xff]
        %v3788 = vld [vmem:[#allocation4 + $0x40] sm:$0xff]
        %v3789 = vld [vmem:[#allocation4 + $0x48] sm:$0xff]
        %v3790 = vld [vmem:[#allocation4 + $0x50] sm:$0xff]
        %v3791 = vld [vmem:[#allocation4 + $0x58] sm:$0xff]
        %v3792 = vld [vmem:[#allocation4 + $0x60] sm:$0xff]
        %v3793 = vld [vmem:[#allocation4 + $0x68] sm:$0xff]
        %v3794 = vld [vmem:[#allocation4 + $0x70] sm:$0xff]
        %v3795 = vld [vmem:[#allocation4 + $0x78] sm:$0xff]
        %v3796 = vld [vmem:[#allocation4 + $0x80] sm:$0xff]
        %v3797 = vld [vmem:[#allocation4 + $0x88] sm:$0xff]
        %v3798 = vld [vmem:[#allocation4 + $0x90] sm:$0xff]
        %v3799 = vld [vmem:[#allocation4 + $0x98] sm:$0xff]
        %v3800 = vld [vmem:[#allocation4 + $0xa0] sm:$0xff]
        %v3801 = vld [vmem:[#allocation4 + $0xa8] sm:$0xff]
        %v3802 = vld [vmem:[#allocation4 + $0xb0] sm:$0xff]
        %v3803 = vld [vmem:[#allocation4 + $0xb8] sm:$0xff]
        %v3804 = vld [vmem:[#allocation4 + $0xc0] sm:$0xff]
        %v3805 = vld [vmem:[#allocation4 + $0xc8] sm:$0xff]
        %v3806 = vld [vmem:[#allocation4 + $0xd0] sm:$0xff]
        %v3807 = vld [vmem:[#allocation4 + $0xd8] sm:$0xff]
        %v3808 = vld [vmem:[#allocation4 + $0xe0] sm:$0xff]
        %v3809 = vld [vmem:[#allocation4 + $0xe8] sm:$0xff]
        %v3810 = vld [vmem:[#allocation4 + $0xf0] sm:$0xff]
        %v3811 = vld [vmem:[#allocation4 + $0xf8] sm:$0xff]
        %v3812 = vld [vmem:[#allocation4 + $0x100] sm:$0xff]
        %v3813 = vld [vmem:[#allocation4 + $0x108] sm:$0xff]
        %v3814 = vld [vmem:[#allocation4 + $0x110] sm:$0xff]
        %v3815 = vld [vmem:[#allocation4 + $0x118] sm:$0xff]
        %v3816 = vld [vmem:[#allocation4 + $0x120] sm:$0xff]
        %v3817 = vld [vmem:[#allocation4 + $0x128] sm:$0xff]
        %v3818 = vld [vmem:[#allocation4 + $0x130] sm:$0xff]
        %v3819 = vld [vmem:[#allocation4 + $0x138] sm:$0xff]
        %v3820 = vld [vmem:[#allocation4 + $0x140] sm:$0xff]
        %v3821 = vld [vmem:[#allocation4 + $0x148] sm:$0xff]
        %v3822 = vld [vmem:[#allocation4 + $0x150] sm:$0xff]
        %v3823 = vld [vmem:[#allocation4 + $0x158] sm:$0xff]
        %v3824 = vld [vmem:[#allocation4 + $0x160] sm:$0xff]
        %v3825 = vld [vmem:[#allocation4 + $0x168] sm:$0xff]
        %v3826 = vld [vmem:[#allocation4 + $0x170] sm:$0xff]
        %v3827 = vld [vmem:[#allocation4 + $0x178] sm:$0xff]
        %v3828 = vld [vmem:[#allocation4 + $0x180] sm:$0xff]
        %v3829 = vld [vmem:[#allocation4 + $0x188] sm:$0xff]
        %v3830 = vld [vmem:[#allocation4 + $0x190] sm:$0xff]
        %v3831 = vld [vmem:[#allocation4 + $0x198] sm:$0xff]
        %v3832 = vld [vmem:[#allocation4 + $0x1a0] sm:$0xff]
        %v3833 = vld [vmem:[#allocation4 + $0x1a8] sm:$0xff]
        %v3834 = vld [vmem:[#allocation4 + $0x1b0] sm:$0xff]
        %v3835 = vld [vmem:[#allocation4 + $0x1b8] sm:$0xff]
        %v3836 = vld [vmem:[#allocation4 + $0x1c0] sm:$0xff]
        %v3837 = vld [vmem:[#allocation4 + $0x1c8] sm:$0xff]
        %v3838 = vld [vmem:[#allocation4 + $0x1d0] sm:$0xff]
        %v3839 = vld [vmem:[#allocation4 + $0x1d8] sm:$0xff]
        %v3840 = vld [vmem:[#allocation4 + $0x1e0] sm:$0xff]
        %v3841 = vld [vmem:[#allocation4 + $0x1e8] sm:$0xff]
        %v3842 = vld [vmem:[#allocation4 + $0x1f0] sm:$0xff]
        %v3843 = vld [vmem:[#allocation4 + $0x1f8] sm:$0xff]
        %v3844 = vld [vmem:[#allocation4 + $0x200] sm:$0xff]
        %v3845 = vld [vmem:[#allocation4 + $0x208] sm:$0xff]
        %v3846 = vld [vmem:[#allocation4 + $0x210] sm:$0xff]
        %v3847 = vld [vmem:[#allocation4 + $0x218] sm:$0xff]
        %v3848 = vld [vmem:[#allocation4 + $0x220] sm:$0xff]
        %v3849 = vld [vmem:[#allocation4 + $0x228] sm:$0xff]
        %v3850 = vld [vmem:[#allocation4 + $0x230] sm:$0xff]
        %v3851 = vld [vmem:[#allocation4 + $0x238] sm:$0xff]
        %v3852 = vld [vmem:[#allocation4 + $0x240] sm:$0xff]
        %v3853 = vld [vmem:[#allocation4 + $0x248] sm:$0xff]
        %v3854 = vld [vmem:[#allocation4 + $0x250] sm:$0xff]
        %v3855 = vld [vmem:[#allocation4 + $0x258] sm:$0xff]
        %v3856 = vld [vmem:[#allocation4 + $0x260] sm:$0xff]
        %v3857 = vld [vmem:[#allocation4 + $0x268] sm:$0xff]
        %v3858 = vld [vmem:[#allocation4 + $0x270] sm:$0xff]
        %v3859 = vld [vmem:[#allocation4 + $0x278] sm:$0xff]
        %v3860 = vld [vmem:[#allocation5] sm:$0xf]
        %v3861 = vld [vmem:[#allocation5 + $0x4] sm:$0xf]
        %v3862 = vld [vmem:[#allocation5 + $0x8] sm:$0xf]
        %v3863 = vld [vmem:[#allocation5 + $0xc] sm:$0xf]
        %v3864 = vld [vmem:[#allocation5 + $0x10] sm:$0xf]
        %v3865 = vld [vmem:[#allocation5 + $0x14] sm:$0xf]
        %v3866 = vld [vmem:[#allocation5 + $0x18] sm:$0xf]
        %v3867 = vld [vmem:[#allocation5 + $0x1c] sm:$0xf]
        %v3868 = vld [vmem:[#allocation5 + $0x20] sm:$0xf]
        %v3869 = vld [vmem:[#allocation5 + $0x24] sm:$0xf]
        %v3870 = vld [vmem:[#allocation5 + $0x28] sm:$0xf]
        %v3871 = vld [vmem:[#allocation5 + $0x2c] sm:$0xf]
        %v3872 = vld [vmem:[#allocation5 + $0x30] sm:$0xf]
        %v3873 = vld [vmem:[#allocation5 + $0x34] sm:$0xf]
        %v3874 = vld [vmem:[#allocation5 + $0x38] sm:$0xf]
        %v3875 = vld [vmem:[#allocation5 + $0x3c] sm:$0xf]
        %v3876 = vld [vmem:[#allocation5 + $0x40] sm:$0xf]
        %v3877 = vld [vmem:[#allocation5 + $0x44] sm:$0xf]
        %v3878 = vld [vmem:[#allocation5 + $0x48] sm:$0xf]
        %v3879 = vld [vmem:[#allocation5 + $0x4c] sm:$0xf]
        %v3880 = vld [vmem:[#allocation5 + $0x50] sm:$0xf]
        %v3881 = vld [vmem:[#allocation5 + $0x54] sm:$0xf]
        %v3882 = vld [vmem:[#allocation5 + $0x58] sm:$0xf]
        %v3883 = vld [vmem:[#allocation5 + $0x5c] sm:$0xf]
        %v3884 = vld [vmem:[#allocation5 + $0x60] sm:$0xf]
        %v3885 = vld [vmem:[#allocation5 + $0x64] sm:$0xf]
        %v3886 = vld [vmem:[#allocation5 + $0x68] sm:$0xf]
        %v3887 = vld [vmem:[#allocation5 + $0x6c] sm:$0xf]
        %v3888 = vld [vmem:[#allocation5 + $0x70] sm:$0xf]
        %v3889 = vld [vmem:[#allocation5 + $0x74] sm:$0xf]
        %v3890 = vld [vmem:[#allocation5 + $0x78] sm:$0xf]
        %v3891 = vld [vmem:[#allocation5 + $0x7c] sm:$0xf]
        %v3892 = vld [vmem:[#allocation5 + $0x80] sm:$0xf]
        %v3893 = vld [vmem:[#allocation5 + $0x84] sm:$0xf]
        %v3894 = vld [vmem:[#allocation5 + $0x88] sm:$0xf]
        %v3895 = vld [vmem:[#allocation5 + $0x8c] sm:$0xf]
        %v3896 = vld [vmem:[#allocation5 + $0x90] sm:$0xf]
        %v3897 = vld [vmem:[#allocation5 + $0x94] sm:$0xf]
        %v3898 = vld [vmem:[#allocation5 + $0x98] sm:$0xf]
        %v3899 = vld [vmem:[#allocation5 + $0x9c] sm:$0xf]
        %v3900 = vld [vmem:[#allocation5 + $0xa0] sm:$0xf]
        %v3901 = vld [vmem:[#allocation5 + $0xa4] sm:$0xf]
        %v3902 = vld [vmem:[#allocation5 + $0xa8] sm:$0xf]
        %v3903 = vld [vmem:[#allocation5 + $0xac] sm:$0xf]
        %v3904 = vld [vmem:[#allocation5 + $0xb0] sm:$0xf]
        %v3905 = vld [vmem:[#allocation5 + $0xb4] sm:$0xf]
        %v3906 = vld [vmem:[#allocation5 + $0xb8] sm:$0xf]
        %v3907 = vld [vmem:[#allocation5 + $0xbc] sm:$0xf]
        %v3908 = vld [vmem:[#allocation5 + $0xc0] sm:$0xf]
        %v3909 = vld [vmem:[#allocation5 + $0xc4] sm:$0xf]
        %v3910 = vld [vmem:[#allocation5 + $0xc8] sm:$0xf]
        %v3911 = vld [vmem:[#allocation5 + $0xcc] sm:$0xf]
        %v3912 = vld [vmem:[#allocation5 + $0xd0] sm:$0xf]
        %v3913 = vld [vmem:[#allocation5 + $0xd4] sm:$0xf]
        %v3914 = vld [vmem:[#allocation5 + $0xd8] sm:$0xf]
        %v3915 = vld [vmem:[#allocation5 + $0xdc] sm:$0xf]
        %v3916 = vld [vmem:[#allocation5 + $0xe0] sm:$0xf]
        %v3917 = vld [vmem:[#allocation5 + $0xe4] sm:$0xf]
        %v3918 = vld [vmem:[#allocation5 + $0xe8] sm:$0xf]
        %v3919 = vld [vmem:[#allocation5 + $0xec] sm:$0xf]
        %v3920 = vld [vmem:[#allocation5 + $0xf0] sm:$0xf]
        %v3921 = vld [vmem:[#allocation5 + $0xf4] sm:$0xf]
        %v3922 = vld [vmem:[#allocation5 + $0xf8] sm:$0xf]
        %v3923 = vld [vmem:[#allocation5 + $0xfc] sm:$0xf]
        %v3924 = vld [vmem:[#allocation5 + $0x100] sm:$0xf]
        %v3925 = vld [vmem:[#allocation5 + $0x104] sm:$0xf]
        %v3926 = vld [vmem:[#allocation5 + $0x108] sm:$0xf]
        %v3927 = vld [vmem:[#allocation5 + $0x10c] sm:$0xf]
        %v3928 = vld [vmem:[#allocation5 + $0x110] sm:$0xf]
        %v3929 = vld [vmem:[#allocation5 + $0x114] sm:$0xf]
        %v3930 = vld [vmem:[#allocation5 + $0x118] sm:$0xf]
        %v3931 = vld [vmem:[#allocation5 + $0x11c] sm:$0xf]
        %v3932 = vld [vmem:[#allocation5 + $0x120] sm:$0xf]
        %v3933 = vld [vmem:[#allocation5 + $0x124] sm:$0xf]
        %v3934 = vld [vmem:[#allocation5 + $0x128] sm:$0xf]
        %v3935 = vld [vmem:[#allocation5 + $0x12c] sm:$0xf]
        %v3936 = vld [vmem:[#allocation5 + $0x130] sm:$0xf]
        %v3937 = vld [vmem:[#allocation5 + $0x134] sm:$0xf]
        %v3938 = vld [vmem:[#allocation5 + $0x138] sm:$0xf]
        %v3939 = vld [vmem:[#allocation5 + $0x13c] sm:$0xf]
        %v3940 = vld [vmem:[%s7] sm:$0x1]
        %v3942 = vlaneseq
        %v3943 = vshrl.u32 %v3942, 7
        %v3944 = vsub.s32 0, %v3943
        %v3945 = vrot.slane %v3940, %v3944
        %v4027 = vunpack.c.l.b16 %v3860
        %v4028 = vunpack.c.l.b16 %v3861
        %v4029 = vunpack.c.l.b16 %v3862
        %v4030 = vunpack.c.l.b16 %v3863
        %v4031 = vunpack.c.l.b16 %v3864
        %v4032 = vunpack.c.l.b16 %v3865
        %v4033 = vunpack.c.l.b16 %v3866
        %v4034 = vunpack.c.l.b16 %v3867
        %v4035 = vunpack.c.l.b16 %v3868
        %v4036 = vunpack.c.l.b16 %v3869
        %v4037 = vunpack.c.l.b16 %v3870
        %v4038 = vunpack.c.l.b16 %v3871
        %v4039 = vunpack.c.l.b16 %v3872
        %v4040 = vunpack.c.l.b16 %v3873
        %v4041 = vunpack.c.l.b16 %v3874
        %v4042 = vunpack.c.l.b16 %v3875
        %v4043 = vunpack.c.l.b16 %v3876
        %v4044 = vunpack.c.l.b16 %v3877
        %v4045 = vunpack.c.l.b16 %v3878
        %v4046 = vunpack.c.l.b16 %v3879
        %v4047 = vunpack.c.l.b16 %v3880
        %v4048 = vunpack.c.l.b16 %v3881
        %v4049 = vunpack.c.l.b16 %v3882
        %v4050 = vunpack.c.l.b16 %v3883
        %v4051 = vunpack.c.l.b16 %v3884
        %v4052 = vunpack.c.l.b16 %v3885
        %v4053 = vunpack.c.l.b16 %v3886
        %v4054 = vunpack.c.l.b16 %v3887
        %v4055 = vunpack.c.l.b16 %v3888
        %v4056 = vunpack.c.l.b16 %v3889
        %v4057 = vunpack.c.l.b16 %v3890
        %v4058 = vunpack.c.l.b16 %v3891
        %v4059 = vunpack.c.l.b16 %v3892
        %v4060 = vunpack.c.l.b16 %v3893
        %v4061 = vunpack.c.l.b16 %v3894
        %v4062 = vunpack.c.l.b16 %v3895
        %v4063 = vunpack.c.l.b16 %v3896
        %v4064 = vunpack.c.l.b16 %v3897
        %v4065 = vunpack.c.l.b16 %v3898
        %v4066 = vunpack.c.l.b16 %v3899
        %v4067 = vunpack.c.l.b16 %v3900
        %v4068 = vunpack.c.l.b16 %v3901
        %v4069 = vunpack.c.l.b16 %v3902
        %v4070 = vunpack.c.l.b16 %v3903
        %v4071 = vunpack.c.l.b16 %v3904
        %v4072 = vunpack.c.l.b16 %v3905
        %v4073 = vunpack.c.l.b16 %v3906
        %v4074 = vunpack.c.l.b16 %v3907
        %v4075 = vunpack.c.l.b16 %v3908
        %v4076 = vunpack.c.l.b16 %v3909
        %v4077 = vunpack.c.l.b16 %v3910
        %v4078 = vunpack.c.l.b16 %v3911
        %v4079 = vunpack.c.l.b16 %v3912
        %v4080 = vunpack.c.l.b16 %v3913
        %v4081 = vunpack.c.l.b16 %v3914
        %v4082 = vunpack.c.l.b16 %v3915
        %v4083 = vunpack.c.l.b16 %v3916
        %v4084 = vunpack.c.l.b16 %v3917
        %v4085 = vunpack.c.l.b16 %v3918
        %v4086 = vunpack.c.l.b16 %v3919
        %v4087 = vunpack.c.l.b16 %v3920
        %v4088 = vunpack.c.l.b16 %v3921
        %v4089 = vunpack.c.l.b16 %v3922
        %v4090 = vunpack.c.l.b16 %v3923
        %v4091 = vunpack.c.l.b16 %v3924
        %v4092 = vunpack.c.l.b16 %v3925
        %v4093 = vunpack.c.l.b16 %v3926
        %v4094 = vunpack.c.l.b16 %v3927
        %v4095 = vunpack.c.l.b16 %v3928
        %v4096 = vunpack.c.l.b16 %v3929
        %v4097 = vunpack.c.l.b16 %v3930
        %v4098 = vunpack.c.l.b16 %v3931
        %v4099 = vunpack.c.l.b16 %v3932
        %v4100 = vunpack.c.l.b16 %v3933
        %v4101 = vunpack.c.l.b16 %v3934
        %v4102 = vunpack.c.l.b16 %v3935
        %v4103 = vunpack.c.l.b16 %v3936
        %v4104 = vunpack.c.l.b16 %v3937
        %v4105 = vunpack.c.l.b16 %v3938
        %v4106 = vunpack.c.l.b16 %v3939
        %v4107 = vpack.c.b16 %v4028, %v4027
        %v4108 = vpack.c.b16 %v4030, %v4029
        %v4109 = vpack.c.b16 %v4032, %v4031
        %v4110 = vpack.c.b16 %v4034, %v4033
        %v4111 = vpack.c.b16 %v4036, %v4035
        %v4112 = vpack.c.b16 %v4038, %v4037
        %v4113 = vpack.c.b16 %v4040, %v4039
        %v4114 = vpack.c.b16 %v4042, %v4041
        %v4115 = vpack.c.b16 %v4044, %v4043
        %v4116 = vpack.c.b16 %v4046, %v4045
        %v4117 = vpack.c.b16 %v4048, %v4047
        %v4118 = vpack.c.b16 %v4050, %v4049
        %v4119 = vpack.c.b16 %v4052, %v4051
        %v4120 = vpack.c.b16 %v4054, %v4053
        %v4121 = vpack.c.b16 %v4056, %v4055
        %v4122 = vpack.c.b16 %v4058, %v4057
        %v4123 = vpack.c.b16 %v4060, %v4059
        %v4124 = vpack.c.b16 %v4062, %v4061
        %v4125 = vpack.c.b16 %v4064, %v4063
        %v4126 = vpack.c.b16 %v4066, %v4065
        %v4127 = vpack.c.b16 %v4068, %v4067
        %v4128 = vpack.c.b16 %v4070, %v4069
        %v4129 = vpack.c.b16 %v4072, %v4071
        %v4130 = vpack.c.b16 %v4074, %v4073
        %v4131 = vpack.c.b16 %v4076, %v4075
        %v4132 = vpack.c.b16 %v4078, %v4077
        %v4133 = vpack.c.b16 %v4080, %v4079
        %v4134 = vpack.c.b16 %v4082, %v4081
        %v4135 = vpack.c.b16 %v4084, %v4083
        %v4136 = vpack.c.b16 %v4086, %v4085
        %v4137 = vpack.c.b16 %v4088, %v4087
        %v4138 = vpack.c.b16 %v4090, %v4089
        %v4139 = vpack.c.b16 %v4092, %v4091
        %v4140 = vpack.c.b16 %v4094, %v4093
        %v4141 = vpack.c.b16 %v4096, %v4095
        %v4142 = vpack.c.b16 %v4098, %v4097
        %v4143 = vpack.c.b16 %v4100, %v4099
        %v4144 = vpack.c.b16 %v4102, %v4101
        %v4145 = vpack.c.b16 %v4104, %v4103
        %v4146 = vpack.c.b16 %v4106, %v4105
        %4187 = vmatprep.subr.bf16.mxu0 0
        %4188 = vmatpush1.bf16.msra.mxu0 %v4107
        %4189 = vmatprep.subr.bf16.mxu0 0
        %4190 = vmatpush1.bf16.msra.mxu0 %v4108
        %4191 = vmatprep.subr.bf16.mxu0 0
        %4192 = vmatpush1.bf16.msra.mxu0 %v4109
        %4193 = vmatprep.subr.bf16.mxu0 0
        %4194 = vmatpush1.bf16.msra.mxu0 %v4110
        %4195 = vmatprep.subr.bf16.mxu0 0
        %4196 = vmatpush1.bf16.msra.mxu0 %v4111
        %4197 = vmatprep.subr.bf16.mxu0 0
        %4198 = vmatpush1.bf16.msra.mxu0 %v4112
        %4199 = vmatprep.subr.bf16.mxu0 0
        %4200 = vmatpush1.bf16.msra.mxu0 %v4113
        %4201 = vmatprep.subr.bf16.mxu0 0
        %4202 = vmatpush1.bf16.msra.mxu0 %v4114
        %4203 = vmatprep.subr.bf16.mxu0 0
        %4204 = vmatpush1.bf16.msra.mxu0 %v4115
        %4205 = vmatprep.subr.bf16.mxu0 0
        %4206 = vmatpush1.bf16.msra.mxu0 %v4116
        %4207 = vmatprep.subr.bf16.mxu0 0
        %4208 = vmatpush1.bf16.msra.mxu0 %v4117
        %4209 = vmatprep.subr.bf16.mxu0 0
        %4210 = vmatpush1.bf16.msra.mxu0 %v4118
        %4211 = vmatprep.subr.bf16.mxu0 0
        %4212 = vmatpush1.bf16.msra.mxu0 %v4119
        %4213 = vmatprep.subr.bf16.mxu0 0
        %4214 = vmatpush1.bf16.msra.mxu0 %v4120
        %4215 = vmatprep.subr.bf16.mxu0 0
        %4216 = vmatpush1.bf16.msra.mxu0 %v4121
        %4217 = vmatprep.subr.bf16.mxu0 0
        %4218 = vmatpush1.bf16.msra.mxu0 %v4122
        %4219 = vmatprep.mubr.bf16.mxu0 %v3781
        %4220 = vmatmul.mubr.bf16.gmra.mrb[0].mxu0 %v3780
        %v4221 = vpop.f32.mrb[0].mxu0
        %v4222 = vadd.f32 %v3945, %v4221
        %v4223 = vpop.f32.mrb[0].mxu0
        %v4224 = vpop.f32.mrb[0].mxu0
        %v4225 = vadd.f32 %v3945, %v4224
        %v4226 = vpop.f32.mrb[0].mxu0
        %4227 = vmatprep.mubr.bf16.mxu0 %v3786
        %4228 = vmatmul.mubr.bf16.gmra.mrb[0].mxu0 %v3785
        %v4229 = vpop.f32.mrb[0].mxu0
        %v4230 = vadd.f32 %v3945, %v4229
        %v4231 = vpop.f32.mrb[0].mxu0
        %v4232 = vpop.f32.mrb[0].mxu0
        %v4233 = vadd.f32 %v3945, %v4232
        %v4234 = vpop.f32.mrb[0].mxu0
        %4235 = vmatprep.mubr.bf16.mxu0 %v3791
        %4236 = vmatmul.mubr.bf16.gmra.mrb[0].mxu0 %v3790
        %v4237 = vpop.f32.mrb[0].mxu0
        %v4238 = vadd.f32 %v3945, %v4237
        %v4239 = vpop.f32.mrb[0].mxu0
        %v4240 = vpop.f32.mrb[0].mxu0
        %v4241 = vadd.f32 %v3945, %v4240
        %v4242 = vpop.f32.mrb[0].mxu0
        %4243 = vmatprep.mubr.bf16.mxu0 %v3796
        %4244 = vmatmul.mubr.bf16.gmra.mrb[0].mxu0 %v3795
        %v4245 = vpop.f32.mrb[0].mxu0
        %v4246 = vadd.f32 %v3945, %v4245
        %v4247 = vpop.f32.mrb[0].mxu0
        %v4248 = vpop.f32.mrb[0].mxu0
        %v4249 = vadd.f32 %v3945, %v4248
        %v4250 = vpop.f32.mrb[0].mxu0
        %4251 = vmatprep.mubr.bf16.mxu0 %v3801
        %4252 = vmatmul.mubr.bf16.gmra.mrb[0].mxu0 %v3800
        %v4253 = vpop.f32.mrb[0].mxu0
        %v4254 = vadd.f32 %v3945, %v4253
        %v4255 = vpop.f32.mrb[0].mxu0
        %v4256 = vpop.f32.mrb[0].mxu0
        %v4257 = vadd.f32 %v3945, %v4256
        %v4258 = vpop.f32.mrb[0].mxu0
        %4259 = vmatprep.mubr.bf16.mxu0 %v3806
        %4260 = vmatmul.mubr.bf16.gmra.mrb[0].mxu0 %v3805
        %v4261 = vpop.f32.mrb[0].mxu0
        %v4262 = vadd.f32 %v3945, %v4261
        %v4263 = vpop.f32.mrb[0].mxu0
        %v4264 = vpop.f32.mrb[0].mxu0
        %v4265 = vadd.f32 %v3945, %v4264
        %v4266 = vpop.f32.mrb[0].mxu0
        %4267 = vmatprep.mubr.bf16.mxu0 %v3811
        %4268 = vmatmul.mubr.bf16.gmra.mrb[0].mxu0 %v3810
        %v4269 = vpop.f32.mrb[0].mxu0
        %v4270 = vadd.f32 %v3945, %v4269
        %v4271 = vpop.f32.mrb[0].mxu0
        %v4272 = vpop.f32.mrb[0].mxu0
        %v4273 = vadd.f32 %v3945, %v4272
        %v4274 = vpop.f32.mrb[0].mxu0
        %4275 = vmatprep.mubr.bf16.mxu0 %v3816
        %4276 = vmatmul.mubr.bf16.gmra.mrb[0].mxu0 %v3815
        %v4277 = vpop.f32.mrb[0].mxu0
        %v4278 = vadd.f32 %v3945, %v4277
        %v4279 = vpop.f32.mrb[0].mxu0
        %v4280 = vpop.f32.mrb[0].mxu0
        %v4281 = vadd.f32 %v3945, %v4280
        %v4282 = vpop.f32.mrb[0].mxu0
        %4283 = vmatprep.mubr.bf16.mxu0 %v3821
        %4284 = vmatmul.mubr.bf16.gmra.mrb[0].mxu0 %v3820
        %v4285 = vpop.f32.mrb[0].mxu0
        %v4286 = vadd.f32 %v3945, %v4285
        %v4287 = vpop.f32.mrb[0].mxu0
        %v4288 = vpop.f32.mrb[0].mxu0
        %v4289 = vadd.f32 %v3945, %v4288
        %v4290 = vpop.f32.mrb[0].mxu0
        %4291 = vmatprep.mubr.bf16.mxu0 %v3826
        %4292 = vmatmul.mubr.bf16.gmra.mrb[0].mxu0 %v3825
        %v4293 = vpop.f32.mrb[0].mxu0
        %v4294 = vadd.f32 %v3945, %v4293
        %v4295 = vpop.f32.mrb[0].mxu0
        %v4296 = vpop.f32.mrb[0].mxu0
        %v4297 = vadd.f32 %v3945, %v4296
        %v4298 = vpop.f32.mrb[0].mxu0
        %4299 = vmatprep.mubr.bf16.mxu0 %v3831
        %4300 = vmatmul.mubr.bf16.gmra.mrb[0].mxu0 %v3830
        %v4301 = vpop.f32.mrb[0].mxu0
        %v4302 = vadd.f32 %v3945, %v4301
        %v4303 = vpop.f32.mrb[0].mxu0
        %v4304 = vpop.f32.mrb[0].mxu0
        %v4305 = vadd.f32 %v3945, %v4304
        %v4306 = vpop.f32.mrb[0].mxu0
        %4307 = vmatprep.mubr.bf16.mxu0 %v3836
        %4308 = vmatmul.mubr.bf16.gmra.mrb[0].mxu0 %v3835
        %v4309 = vpop.f32.mrb[0].mxu0
        %v4310 = vadd.f32 %v3945, %v4309
        %v4311 = vpop.f32.mrb[0].mxu0
        %v4312 = vpop.f32.mrb[0].mxu0
        %v4313 = vadd.f32 %v3945, %v4312
        %v4314 = vpop.f32.mrb[0].mxu0
        %4315 = vmatprep.mubr.bf16.mxu0 %v3841
        %4316 = vmatmul.mubr.bf16.gmra.mrb[0].mxu0 %v3840
        %v4317 = vpop.f32.mrb[0].mxu0
        %v4318 = vadd.f32 %v3945, %v4317
        %v4319 = vpop.f32.mrb[0].mxu0
        %v4320 = vpop.f32.mrb[0].mxu0
        %v4321 = vadd.f32 %v3945, %v4320
        %v4322 = vpop.f32.mrb[0].mxu0
        %4323 = vmatprep.mubr.bf16.mxu0 %v3846
        %4324 = vmatmul.mubr.bf16.gmra.mrb[0].mxu0 %v3845
        %v4325 = vpop.f32.mrb[0].mxu0
        %v4326 = vadd.f32 %v3945, %v4325
        %v4327 = vpop.f32.mrb[0].mxu0
        %v4328 = vpop.f32.mrb[0].mxu0
        %v4329 = vadd.f32 %v3945, %v4328
        %v4330 = vpop.f32.mrb[0].mxu0
        %4331 = vmatprep.mubr.bf16.mxu0 %v3851
        %4332 = vmatmul.mubr.bf16.gmra.mrb[0].mxu0 %v3850
        %v4333 = vpop.f32.mrb[0].mxu0
        %v4334 = vadd.f32 %v3945, %v4333
        %v4335 = vpop.f32.mrb[0].mxu0
        %v4336 = vpop.f32.mrb[0].mxu0
        %v4337 = vadd.f32 %v3945, %v4336
        %v4338 = vpop.f32.mrb[0].mxu0
        %4339 = vmatprep.mubr.bf16.mxu0 %v3856
        %4340 = vmatmul.mubr.bf16.gmra.mrb[0].mxu0 %v3855
        %v4341 = vpop.f32.mrb[0].mxu0
        %v4342 = vadd.f32 %v3945, %v4341
        %v4343 = vpop.f32.mrb[0].mxu0
        %v4344 = vpop.f32.mrb[0].mxu0
        %v4345 = vadd.f32 %v3945, %v4344
        %v4346 = vpop.f32.mrb[0].mxu0
        %4347 = vdwg.mxu0
        %4348 = vmatprep.subr.bf16.mxu0 0
        %4349 = vmatpush1.bf16.msra.mxu0 %v4123
        %4350 = vmatprep.subr.bf16.mxu0 0
        %4351 = vmatpush1.bf16.msra.mxu0 %v4124
        %4352 = vmatprep.subr.bf16.mxu0 0
        %4353 = vmatpush1.bf16.msra.mxu0 %v4125
        %4354 = vmatprep.subr.bf16.mxu0 0
        %4355 = vmatpush1.bf16.msra.mxu0 %v4126
        %4356 = vmatprep.subr.bf16.mxu0 0
        %4357 = vmatpush1.bf16.msra.mxu0 %v4127
        %4358 = vmatprep.subr.bf16.mxu0 0
        %4359 = vmatpush1.bf16.msra.mxu0 %v4128
        %4360 = vmatprep.subr.bf16.mxu0 0
        %4361 = vmatpush1.bf16.msra.mxu0 %v4129
        %4362 = vmatprep.subr.bf16.mxu0 0
        %4363 = vmatpush1.bf16.msra.mxu0 %v4130
        %4364 = vmatprep.subr.bf16.mxu0 0
        %4365 = vmatpush1.bf16.msra.mxu0 %v4131
        %4366 = vmatprep.subr.bf16.mxu0 0
        %4367 = vmatpush1.bf16.msra.mxu0 %v4132
        %4368 = vmatprep.subr.bf16.mxu0 0
        %4369 = vmatpush1.bf16.msra.mxu0 %v4133
        %4370 = vmatprep.subr.bf16.mxu0 0
        %4371 = vmatpush1.bf16.msra.mxu0 %v4134
        %4372 = vmatprep.subr.bf16.mxu0 0
        %4373 = vmatpush1.bf16.msra.mxu0 %v4135
        %4374 = vmatprep.subr.bf16.mxu0 0
        %4375 = vmatpush1.bf16.msra.mxu0 %v4136
        %4376 = vmatprep.subr.bf16.mxu0 0
        %4377 = vmatpush1.bf16.msra.mxu0 %v4137
        %4378 = vmatprep.subr.bf16.mxu0 0
        %4379 = vmatpush1.bf16.msra.mxu0 %v4138
        %4380 = vmatprep.mubr.bf16.mxu0 %v3783
        %4381 = vmatmul.mubr.bf16.gmra.mrb[0].mxu0 %v3782
        %v4382 = vpop.f32.mrb[0].mxu0
        %v4383 = vadd.f32 %v4222, %v4382
        %v4384 = vpop.f32.mrb[0].mxu0
        %v4385 = vpop.f32.mrb[0].mxu0
        %v4386 = vadd.f32 %v4225, %v4385
        %v4387 = vpop.f32.mrb[0].mxu0
        %4388 = vmatprep.mubr.bf16.mxu0 %v3788
        %4389 = vmatmul.mubr.bf16.gmra.mrb[0].mxu0 %v3787
        %v4390 = vpop.f32.mrb[0].mxu0
        %v4391 = vadd.f32 %v4230, %v4390
        %v4392 = vpop.f32.mrb[0].mxu0
        %v4393 = vpop.f32.mrb[0].mxu0
        %v4394 = vadd.f32 %v4233, %v4393
        %v4395 = vpop.f32.mrb[0].mxu0
        %4396 = vmatprep.mubr.bf16.mxu0 %v3793
        %4397 = vmatmul.mubr.bf16.gmra.mrb[0].mxu0 %v3792
        %v4398 = vpop.f32.mrb[0].mxu0
        %v4399 = vadd.f32 %v4238, %v4398
        %v4400 = vpop.f32.mrb[0].mxu0
        %v4401 = vpop.f32.mrb[0].mxu0
        %v4402 = vadd.f32 %v4241, %v4401
        %v4403 = vpop.f32.mrb[0].mxu0
        %4404 = vmatprep.mubr.bf16.mxu0 %v3798
        %4405 = vmatmul.mubr.bf16.gmra.mrb[0].mxu0 %v3797
        %v4406 = vpop.f32.mrb[0].mxu0
        %v4407 = vadd.f32 %v4246, %v4406
        %v4408 = vpop.f32.mrb[0].mxu0
        %v4409 = vpop.f32.mrb[0].mxu0
        %v4410 = vadd.f32 %v4249, %v4409
        %v4411 = vpop.f32.mrb[0].mxu0
        %4412 = vmatprep.mubr.bf16.mxu0 %v3803
        %4413 = vmatmul.mubr.bf16.gmra.mrb[0].mxu0 %v3802
        %v4414 = vpop.f32.mrb[0].mxu0
        %v4415 = vadd.f32 %v4254, %v4414
        %v4416 = vpop.f32.mrb[0].mxu0
        %v4417 = vpop.f32.mrb[0].mxu0
        %v4418 = vadd.f32 %v4257, %v4417
        %v4419 = vpop.f32.mrb[0].mxu0
        %4420 = vmatprep.mubr.bf16.mxu0 %v3808
        %4421 = vmatmul.mubr.bf16.gmra.mrb[0].mxu0 %v3807
        %v4422 = vpop.f32.mrb[0].mxu0
        %v4423 = vadd.f32 %v4262, %v4422
        %v4424 = vpop.f32.mrb[0].mxu0
        %v4425 = vpop.f32.mrb[0].mxu0
        %v4426 = vadd.f32 %v4265, %v4425
        %v4427 = vpop.f32.mrb[0].mxu0
        %4428 = vmatprep.mubr.bf16.mxu0 %v3813
        %4429 = vmatmul.mubr.bf16.gmra.mrb[0].mxu0 %v3812
        %v4430 = vpop.f32.mrb[0].mxu0
        %v4431 = vadd.f32 %v4270, %v4430
        %v4432 = vpop.f32.mrb[0].mxu0
        %v4433 = vpop.f32.mrb[0].mxu0
        %v4434 = vadd.f32 %v4273, %v4433
        %v4435 = vpop.f32.mrb[0].mxu0
        %4436 = vmatprep.mubr.bf16.mxu0 %v3818
        %4437 = vmatmul.mubr.bf16.gmra.mrb[0].mxu0 %v3817
        %v4438 = vpop.f32.mrb[0].mxu0
        %v4439 = vadd.f32 %v4278, %v4438
        %v4440 = vpop.f32.mrb[0].mxu0
        %v4441 = vpop.f32.mrb[0].mxu0
        %v4442 = vadd.f32 %v4281, %v4441
        %v4443 = vpop.f32.mrb[0].mxu0
        %4444 = vmatprep.mubr.bf16.mxu0 %v3823
        %4445 = vmatmul.mubr.bf16.gmra.mrb[0].mxu0 %v3822
        %v4446 = vpop.f32.mrb[0].mxu0
        %v4447 = vadd.f32 %v4286, %v4446
        %v4448 = vpop.f32.mrb[0].mxu0
        %v4449 = vpop.f32.mrb[0].mxu0
        %v4450 = vadd.f32 %v4289, %v4449
        %v4451 = vpop.f32.mrb[0].mxu0
        %4452 = vmatprep.mubr.bf16.mxu0 %v3828
        %4453 = vmatmul.mubr.bf16.gmra.mrb[0].mxu0 %v3827
        %v4454 = vpop.f32.mrb[0].mxu0
        %v4455 = vadd.f32 %v4294, %v4454
        %v4456 = vpop.f32.mrb[0].mxu0
        %v4457 = vpop.f32.mrb[0].mxu0
        %v4458 = vadd.f32 %v4297, %v4457
        %v4459 = vpop.f32.mrb[0].mxu0
        %4460 = vmatprep.mubr.bf16.mxu0 %v3833
        %4461 = vmatmul.mubr.bf16.gmra.mrb[0].mxu0 %v3832
        %v4462 = vpop.f32.mrb[0].mxu0
        %v4463 = vadd.f32 %v4302, %v4462
        %v4464 = vpop.f32.mrb[0].mxu0
        %v4465 = vpop.f32.mrb[0].mxu0
        %v4466 = vadd.f32 %v4305, %v4465
        %v4467 = vpop.f32.mrb[0].mxu0
        %4468 = vmatprep.mubr.bf16.mxu0 %v3838
        %4469 = vmatmul.mubr.bf16.gmra.mrb[0].mxu0 %v3837
        %v4470 = vpop.f32.mrb[0].mxu0
        %v4471 = vadd.f32 %v4310, %v4470
        %v4472 = vpop.f32.mrb[0].mxu0
        %v4473 = vpop.f32.mrb[0].mxu0
        %v4474 = vadd.f32 %v4313, %v4473
        %v4475 = vpop.f32.mrb[0].mxu0
        %4476 = vmatprep.mubr.bf16.mxu0 %v3843
        %4477 = vmatmul.mubr.bf16.gmra.mrb[0].mxu0 %v3842
        %v4478 = vpop.f32.mrb[0].mxu0
        %v4479 = vadd.f32 %v4318, %v4478
        %v4480 = vpop.f32.mrb[0].mxu0
        %v4481 = vpop.f32.mrb[0].mxu0
        %v4482 = vadd.f32 %v4321, %v4481
        %v4483 = vpop.f32.mrb[0].mxu0
        %4484 = vmatprep.mubr.bf16.mxu0 %v3848
        %4485 = vmatmul.mubr.bf16.gmra.mrb[0].mxu0 %v3847
        %v4486 = vpop.f32.mrb[0].mxu0
        %v4487 = vadd.f32 %v4326, %v4486
        %v4488 = vpop.f32.mrb[0].mxu0
        %v4489 = vpop.f32.mrb[0].mxu0
        %v4490 = vadd.f32 %v4329, %v4489
        %v4491 = vpop.f32.mrb[0].mxu0
        %4492 = vmatprep.mubr.bf16.mxu0 %v3853
        %4493 = vmatmul.mubr.bf16.gmra.mrb[0].mxu0 %v3852
        %v4494 = vpop.f32.mrb[0].mxu0
        %v4495 = vadd.f32 %v4334, %v4494
        %v4496 = vpop.f32.mrb[0].mxu0
        %v4497 = vpop.f32.mrb[0].mxu0
        %v4498 = vadd.f32 %v4337, %v4497
        %v4499 = vpop.f32.mrb[0].mxu0
        %4500 = vmatprep.mubr.bf16.mxu0 %v3858
        %4501 = vmatmul.mubr.bf16.gmra.mrb[0].mxu0 %v3857
        %v4502 = vpop.f32.mrb[0].mxu0
        %v4503 = vadd.f32 %v4342, %v4502
        %v4504 = vpop.f32.mrb[0].mxu0
        %v4505 = vpop.f32.mrb[0].mxu0
        %v4506 = vadd.f32 %v4345, %v4505
        %v4507 = vpop.f32.mrb[0].mxu0
        %4508 = vdwg.mxu0
        %4509 = vmatprep.subr.bf16.mxu0 0
        %4510 = vmatpush1.bf16.msra.mxu0 %v4139
        %4511 = vmatprep.subr.bf16.mxu0 0
        %4512 = vmatpush1.bf16.msra.mxu0 %v4140
        %4513 = vmatprep.subr.bf16.mxu0 0
        %4514 = vmatpush1.bf16.msra.mxu0 %v4141
        %4515 = vmatprep.subr.bf16.mxu0 0
        %4516 = vmatpush1.bf16.msra.mxu0 %v4142
        %4517 = vmatprep.subr.bf16.mxu0 0
        %4518 = vmatpush1.bf16.msra.mxu0 %v4143
        %4519 = vmatprep.subr.bf16.mxu0 0
        %4520 = vmatpush1.bf16.msra.mxu0 %v4144
        %4521 = vmatprep.subr.bf16.mxu0 0
        %4522 = vmatpush1.bf16.msra.mxu0 %v4145
        %4523 = vmatprep.subr.bf16.mxu0 0
        %4524 = vmatpush1.bf16.msra.mxu0 %v4146
        %4525 = vmatprep.subr.bf16.mxu0 0
        %4526 = vmatpush1.bf16.msra.mxu0 0
        %4527 = vmatprep.subr.bf16.mxu0 0
        %4528 = vmatpush1.bf16.msra.mxu0 0
        %4529 = vmatprep.subr.bf16.mxu0 0
        %4530 = vmatpush1.bf16.msra.mxu0 0
        %4531 = vmatprep.subr.bf16.mxu0 0
        %4532 = vmatpush1.bf16.msra.mxu0 0
        %4533 = vmatprep.subr.bf16.mxu0 0
        %4534 = vmatpush1.bf16.msra.mxu0 0
        %4535 = vmatprep.subr.bf16.mxu0 0
        %4536 = vmatpush1.bf16.msra.mxu0 0
        %4537 = vmatprep.subr.bf16.mxu0 0
        %4538 = vmatpush1.bf16.msra.mxu0 0
        %4539 = vmatprep.subr.bf16.mxu0 0
        %4540 = vmatpush1.bf16.msra.mxu0 0
        %4541 = vmatprep.mubr.bf16.mxu0 0
        %4542 = vmatmul.mubr.bf16.gmra.mrb[0].mxu0 %v3784
        %v4543 = vpop.f32.mrb[0].mxu0
        %v4544 = vadd.f32 %v4383, %v4543
        %v4545 = vpop.f32.mrb[0].mxu0
        %v4546 = vpop.f32.mrb[0].mxu0
        %v4547 = vadd.f32 %v4386, %v4546
        %v4548 = vpop.f32.mrb[0].mxu0
        %4549 = vmatprep.mubr.bf16.mxu0 0
        %4550 = vmatmul.mubr.bf16.gmra.mrb[0].mxu0 %v3789
        %v4551 = vpop.f32.mrb[0].mxu0
        %v4552 = vadd.f32 %v4391, %v4551
        %v4553 = vpop.f32.mrb[0].mxu0
        %v4554 = vpop.f32.mrb[0].mxu0
        %v4555 = vadd.f32 %v4394, %v4554
        %v4556 = vpop.f32.mrb[0].mxu0
        %4557 = vmatprep.mubr.bf16.mxu0 0
        %4558 = vmatmul.mubr.bf16.gmra.mrb[0].mxu0 %v3794
        %v4559 = vpop.f32.mrb[0].mxu0
        %v4560 = vadd.f32 %v4399, %v4559
        %v4561 = vpop.f32.mrb[0].mxu0
        %v4562 = vpop.f32.mrb[0].mxu0
        %v4563 = vadd.f32 %v4402, %v4562
        %v4564 = vpop.f32.mrb[0].mxu0
        %4565 = vmatprep.mubr.bf16.mxu0 0
        %4566 = vmatmul.mubr.bf16.gmra.mrb[0].mxu0 %v3799
        %v4567 = vpop.f32.mrb[0].mxu0
        %v4568 = vadd.f32 %v4407, %v4567
        %v4569 = vpop.f32.mrb[0].mxu0
        %v4570 = vpop.f32.mrb[0].mxu0
        %v4571 = vadd.f32 %v4410, %v4570
        %v4572 = vpop.f32.mrb[0].mxu0
        %4573 = vmatprep.mubr.bf16.mxu0 0
        %4574 = vmatmul.mubr.bf16.gmra.mrb[0].mxu0 %v3804
        %v4575 = vpop.f32.mrb[0].mxu0
        %v4576 = vadd.f32 %v4415, %v4575
        %v4577 = vpop.f32.mrb[0].mxu0
        %v4578 = vpop.f32.mrb[0].mxu0
        %v4579 = vadd.f32 %v4418, %v4578
        %v4580 = vpop.f32.mrb[0].mxu0
        %4581 = vmatprep.mubr.bf16.mxu0 0
        %4582 = vmatmul.mubr.bf16.gmra.mrb[0].mxu0 %v3809
        %v4583 = vpop.f32.mrb[0].mxu0
        %v4584 = vadd.f32 %v4423, %v4583
        %v4585 = vpop.f32.mrb[0].mxu0
        %v4586 = vpop.f32.mrb[0].mxu0
        %v4587 = vadd.f32 %v4426, %v4586
        %v4588 = vpop.f32.mrb[0].mxu0
        %4589 = vmatprep.mubr.bf16.mxu0 0
        %4590 = vmatmul.mubr.bf16.gmra.mrb[0].mxu0 %v3814
        %v4591 = vpop.f32.mrb[0].mxu0
        %v4592 = vadd.f32 %v4431, %v4591
        %v4593 = vpop.f32.mrb[0].mxu0
        %v4594 = vpop.f32.mrb[0].mxu0
        %v4595 = vadd.f32 %v4434, %v4594
        %v4596 = vpop.f32.mrb[0].mxu0
        %4597 = vmatprep.mubr.bf16.mxu0 0
        %4598 = vmatmul.mubr.bf16.gmra.mrb[0].mxu0 %v3819
        %v4599 = vpop.f32.mrb[0].mxu0
        %v4600 = vadd.f32 %v4439, %v4599
        %v4601 = vpop.f32.mrb[0].mxu0
        %v4602 = vpop.f32.mrb[0].mxu0
        %v4603 = vadd.f32 %v4442, %v4602
        %v4604 = vpop.f32.mrb[0].mxu0
        %4605 = vmatprep.mubr.bf16.mxu0 0
        %4606 = vmatmul.mubr.bf16.gmra.mrb[0].mxu0 %v3824
        %v4607 = vpop.f32.mrb[0].mxu0
        %v4608 = vadd.f32 %v4447, %v4607
        %v4609 = vpop.f32.mrb[0].mxu0
        %v4610 = vpop.f32.mrb[0].mxu0
        %v4611 = vadd.f32 %v4450, %v4610
        %v4612 = vpop.f32.mrb[0].mxu0
        %4613 = vmatprep.mubr.bf16.mxu0 0
        %4614 = vmatmul.mubr.bf16.gmra.mrb[0].mxu0 %v3829
        %v4615 = vpop.f32.mrb[0].mxu0
        %v4616 = vadd.f32 %v4455, %v4615
        %v4617 = vpop.f32.mrb[0].mxu0
        %v4618 = vpop.f32.mrb[0].mxu0
        %v4619 = vadd.f32 %v4458, %v4618
        %v4620 = vpop.f32.mrb[0].mxu0
        %4621 = vmatprep.mubr.bf16.mxu0 0
        %4622 = vmatmul.mubr.bf16.gmra.mrb[0].mxu0 %v3834
        %v4623 = vpop.f32.mrb[0].mxu0
        %v4624 = vadd.f32 %v4463, %v4623
        %v4625 = vpop.f32.mrb[0].mxu0
        %v4626 = vpop.f32.mrb[0].mxu0
        %v4627 = vadd.f32 %v4466, %v4626
        %v4628 = vpop.f32.mrb[0].mxu0
        %4629 = vmatprep.mubr.bf16.mxu0 0
        %4630 = vmatmul.mubr.bf16.gmra.mrb[0].mxu0 %v3839
        %v4631 = vpop.f32.mrb[0].mxu0
        %v4632 = vadd.f32 %v4471, %v4631
        %v4633 = vpop.f32.mrb[0].mxu0
        %v4634 = vpop.f32.mrb[0].mxu0
        %v4635 = vadd.f32 %v4474, %v4634
        %v4636 = vpop.f32.mrb[0].mxu0
        %4637 = vmatprep.mubr.bf16.mxu0 0
        %4638 = vmatmul.mubr.bf16.gmra.mrb[0].mxu0 %v3844
        %v4639 = vpop.f32.mrb[0].mxu0
        %v4640 = vadd.f32 %v4479, %v4639
        %v4641 = vpop.f32.mrb[0].mxu0
        %v4642 = vpop.f32.mrb[0].mxu0
        %v4643 = vadd.f32 %v4482, %v4642
        %v4644 = vpop.f32.mrb[0].mxu0
        %4645 = vmatprep.mubr.bf16.mxu0 0
        %4646 = vmatmul.mubr.bf16.gmra.mrb[0].mxu0 %v3849
        %v4647 = vpop.f32.mrb[0].mxu0
        %v4648 = vadd.f32 %v4487, %v4647
        %v4649 = vpop.f32.mrb[0].mxu0
        %v4650 = vpop.f32.mrb[0].mxu0
        %v4651 = vadd.f32 %v4490, %v4650
        %v4652 = vpop.f32.mrb[0].mxu0
        %4653 = vmatprep.mubr.bf16.mxu0 0
        %4654 = vmatmul.mubr.bf16.gmra.mrb[0].mxu0 %v3854
        %v4655 = vpop.f32.mrb[0].mxu0
        %v4656 = vadd.f32 %v4495, %v4655
        %v4657 = vpop.f32.mrb[0].mxu0
        %v4658 = vpop.f32.mrb[0].mxu0
        %v4659 = vadd.f32 %v4498, %v4658
        %v4660 = vpop.f32.mrb[0].mxu0
        %4661 = vmatprep.mubr.bf16.mxu0 0
        %4662 = vmatmul.mubr.bf16.gmra.mrb[0].mxu0 %v3859
        %v4663 = vpop.f32.mrb[0].mxu0
        %v4664 = vadd.f32 %v4503, %v4663
        %v4665 = vpop.f32.mrb[0].mxu0
        %v4666 = vpop.f32.mrb[0].mxu0
        %v4667 = vadd.f32 %v4506, %v4666
        %v4668 = vpop.f32.mrb[0].mxu0
        %4669 = vdwg.mxu0
        %v4670 = vmax.f32 %v4544, 0.0
        %v4671 = vmax.f32 %v4547, 0.0
        %v4672 = vmax.f32 %v4552, 0.0
        %v4673 = vmax.f32 %v4555, 0.0
        %v4674 = vmax.f32 %v4560, 0.0
        %v4675 = vmax.f32 %v4563, 0.0
        %v4676 = vmax.f32 %v4568, 0.0
        %v4677 = vmax.f32 %v4571, 0.0
        %v4678 = vmax.f32 %v4576, 0.0
        %v4679 = vmax.f32 %v4579, 0.0
        %v4680 = vmax.f32 %v4584, 0.0
        %v4681 = vmax.f32 %v4587, 0.0
        %v4682 = vmax.f32 %v4592, 0.0
        %v4683 = vmax.f32 %v4595, 0.0
        %v4684 = vmax.f32 %v4600, 0.0
        %v4685 = vmax.f32 %v4603, 0.0
        %v4686 = vmax.f32 %v4608, 0.0
        %v4687 = vmax.f32 %v4611, 0.0
        %v4688 = vmax.f32 %v4616, 0.0
        %v4689 = vmax.f32 %v4619, 0.0
        %v4690 = vmax.f32 %v4624, 0.0
        %v4691 = vmax.f32 %v4627, 0.0
        %v4692 = vmax.f32 %v4632, 0.0
        %v4693 = vmax.f32 %v4635, 0.0
        %v4694 = vmax.f32 %v4640, 0.0
        %v4695 = vmax.f32 %v4643, 0.0
        %v4696 = vmax.f32 %v4648, 0.0
        %v4697 = vmax.f32 %v4651, 0.0
        %v4698 = vmax.f32 %v4656, 0.0
        %v4699 = vmax.f32 %v4659, 0.0
        %v4700 = vmax.f32 %v4664, 0.0
        %v4701 = vmax.f32 %v4667, 0.0
        %v4702 = vpack.c.bf16 %v4671, %v4670
        %v4703 = vpack.c.bf16 %v4673, %v4672
        %v4704 = vpack.c.bf16 %v4675, %v4674
        %v4705 = vpack.c.bf16 %v4677, %v4676
        %v4706 = vpack.c.bf16 %v4679, %v4678
        %v4707 = vpack.c.bf16 %v4681, %v4680
        %v4708 = vpack.c.bf16 %v4683, %v4682
        %v4709 = vpack.c.bf16 %v4685, %v4684
        %v4710 = vpack.c.bf16 %v4687, %v4686
        %v4711 = vpack.c.bf16 %v4689, %v4688
        %v4712 = vpack.c.bf16 %v4691, %v4690
        %v4713 = vpack.c.bf16 %v4693, %v4692
        %v4714 = vpack.c.bf16 %v4695, %v4694
        %v4715 = vpack.c.bf16 %v4697, %v4696
        %v4716 = vpack.c.bf16 %v4699, %v4698
        %v4717 = vpack.c.bf16 %v4701, %v4700
        %4718 = vst [vmem:[#allocation3 + $0x8] sm:$0xff] %v4702
        %4719 = vst [vmem:[#allocation3 + $0x10] sm:$0xff] %v4703
        %4720 = vst [vmem:[#allocation3 + $0x18] sm:$0xff] %v4704
        %4721 = vst [vmem:[#allocation3 + $0x20] sm:$0xff] %v4705
        %4722 = vst [vmem:[#allocation3 + $0x28] sm:$0xff] %v4706
        %4723 = vst [vmem:[#allocation3 + $0x30] sm:$0xff] %v4707
        %4724 = vst [vmem:[#allocation3 + $0x38] sm:$0xff] %v4708
        %4725 = vst [vmem:[#allocation3 + $0x40] sm:$0xff] %v4709
        %4726 = vst [vmem:[#allocation3 + $0x48] sm:$0xff] %v4710
        %4727 = vst [vmem:[#allocation3 + $0x50] sm:$0xff] %v4711
        %4728 = vst [vmem:[#allocation3 + $0x58] sm:$0xff] %v4712
        %4729 = vst [vmem:[#allocation3 + $0x60] sm:$0xff] %v4713
        %4730 = vst [vmem:[#allocation3 + $0x68] sm:$0xff] %v4714
        %4731 = vst [vmem:[#allocation3 + $0x70] sm:$0xff] %v4715
        %4732 = vst [vmem:[#allocation3 + $0x78] sm:$0xff] %v4716
        %4733 = vst [vmem:[#allocation3 + $0x80] sm:$0xff] %v4717
        %v4734 = vld [vmem:[#allocation3] sm:$0xff]
        %v4735 = vld [vmem:[#allocation3 + $0x8] sm:$0xff]
        %v4736 = vld [vmem:[#allocation3 + $0x10] sm:$0xff]
        %v4737 = vld [vmem:[#allocation3 + $0x18] sm:$0xff]
        %v4738 = vld [vmem:[#allocation3 + $0x20] sm:$0xff]
        %v4739 = vld [vmem:[#allocation3 + $0x28] sm:$0xff]
        %v4740 = vld [vmem:[#allocation3 + $0x30] sm:$0xff]
        %v4741 = vld [vmem:[#allocation3 + $0x38] sm:$0xff]
        %v4742 = vld [vmem:[#allocation3 + $0x40] sm:$0xff]
        %v4743 = vld [vmem:[#allocation3 + $0x48] sm:$0xff]
        %v4744 = vld [vmem:[#allocation3 + $0x50] sm:$0xff]
        %v4745 = vld [vmem:[#allocation3 + $0x58] sm:$0xff]
        %v4746 = vld [vmem:[#allocation3 + $0x60] sm:$0xff]
        %v4747 = vld [vmem:[#allocation3 + $0x68] sm:$0xff]
        %v4748 = vld [vmem:[#allocation3 + $0x70] sm:$0xff]
        %v4749 = vld [vmem:[#allocation3 + $0x78] sm:$0xff]
        %4750 = vst [vmem:[#allocation4] sm:$0xff] %v4734
        %4751 = vst [vmem:[#allocation4 + $0x28] sm:$0xff] %v4735
        %4752 = vst [vmem:[#allocation4 + $0x50] sm:$0xff] %v4736
        %4753 = vst [vmem:[#allocation4 + $0x78] sm:$0xff] %v4737
        %4754 = vst [vmem:[#allocation4 + $0xa0] sm:$0xff] %v4738
        %4755 = vst [vmem:[#allocation4 + $0xc8] sm:$0xff] %v4739
        %4756 = vst [vmem:[#allocation4 + $0xf0] sm:$0xff] %v4740
        %4757 = vst [vmem:[#allocation4 + $0x118] sm:$0xff] %v4741
        %4758 = vst [vmem:[#allocation4 + $0x140] sm:$0xff] %v4742
        %4759 = vst [vmem:[#allocation4 + $0x168] sm:$0xff] %v4743
        %4760 = vst [vmem:[#allocation4 + $0x190] sm:$0xff] %v4744
        %4761 = vst [vmem:[#allocation4 + $0x1b8] sm:$0xff] %v4745
        %4762 = vst [vmem:[#allocation4 + $0x1e0] sm:$0xff] %v4746
        %4763 = vst [vmem:[#allocation4 + $0x208] sm:$0xff] %v4747
        %4764 = vst [vmem:[#allocation4 + $0x230] sm:$0xff] %v4748
        %4765 = vst [vmem:[#allocation4 + $0x258] sm:$0xff] %v4749
        %v4766 = vld [vmem:[#allocation3] sm:$0xf0]
        %v4767 = vld [vmem:[#allocation3 + $0x8] sm:$0xff]
        %v4768 = vld [vmem:[#allocation3 + $0x10] sm:$0xff]
        %v4769 = vld [vmem:[#allocation3 + $0x18] sm:$0xff]
        %v4770 = vld [vmem:[#allocation3 + $0x20] sm:$0xff]
        %v4771 = vld [vmem:[#allocation3 + $0x28] sm:$0xff]
        %v4772 = vld [vmem:[#allocation3 + $0x30] sm:$0xff]
        %v4773 = vld [vmem:[#allocation3 + $0x38] sm:$0xff]
        %v4774 = vld [vmem:[#allocation3 + $0x40] sm:$0xff]
        %v4775 = vld [vmem:[#allocation3 + $0x48] sm:$0xff]
        %v4776 = vld [vmem:[#allocation3 + $0x50] sm:$0xff]
        %v4777 = vld [vmem:[#allocation3 + $0x58] sm:$0xff]
        %v4778 = vld [vmem:[#allocation3 + $0x60] sm:$0xff]
        %v4779 = vld [vmem:[#allocation3 + $0x68] sm:$0xff]
        %v4780 = vld [vmem:[#allocation3 + $0x70] sm:$0xff]
        %v4781 = vld [vmem:[#allocation3 + $0x78] sm:$0xff]
        %v4782 = vld [vmem:[#allocation3 + $0x80] sm:$0xf]
        %v4800 = vrot.slane %v4766, 4
        %v4801 = vrot.slane %v4767, 4
        %v4802 = vsel %vm722, %v4800, %v4801
        %v4803 = vrot.slane %v4768, 4
        %v4804 = vsel %vm722, %v4801, %v4803
        %v4805 = vrot.slane %v4769, 4
        %v4806 = vsel %vm722, %v4803, %v4805
        %v4807 = vrot.slane %v4770, 4
        %v4808 = vsel %vm722, %v4805, %v4807
        %v4809 = vrot.slane %v4771, 4
        %v4810 = vsel %vm722, %v4807, %v4809
        %v4811 = vrot.slane %v4772, 4
        %v4812 = vsel %vm722, %v4809, %v4811
        %v4813 = vrot.slane %v4773, 4
        %v4814 = vsel %vm722, %v4811, %v4813
        %v4815 = vrot.slane %v4774, 4
        %v4816 = vsel %vm722, %v4813, %v4815
        %v4817 = vrot.slane %v4775, 4
        %v4818 = vsel %vm722, %v4815, %v4817
        %v4819 = vrot.slane %v4776, 4
        %v4820 = vsel %vm722, %v4817, %v4819
        %v4821 = vrot.slane %v4777, 4
        %v4822 = vsel %vm722, %v4819, %v4821
        %v4823 = vrot.slane %v4778, 4
        %v4824 = vsel %vm722, %v4821, %v4823
        %v4825 = vrot.slane %v4779, 4
        %v4826 = vsel %vm722, %v4823, %v4825
        %v4827 = vrot.slane %v4780, 4
        %v4828 = vsel %vm722, %v4825, %v4827
        %v4829 = vrot.slane %v4781, 4
        %v4830 = vsel %vm722, %v4827, %v4829
        %v4831 = vrot.slane %v4782, 4
        %v4832 = vsel %vm722, %v4829, %v4831
        %4849 = vst [vmem:[#allocation4 + $0x8] sm:$0xff] %v4802
        %4850 = vst [vmem:[#allocation4 + $0x30] sm:$0xff] %v4804
        %4851 = vst [vmem:[#allocation4 + $0x58] sm:$0xff] %v4806
        %4852 = vst [vmem:[#allocation4 + $0x80] sm:$0xff] %v4808
        %4853 = vst [vmem:[#allocation4 + $0xa8] sm:$0xff] %v4810
        %4854 = vst [vmem:[#allocation4 + $0xd0] sm:$0xff] %v4812
        %4855 = vst [vmem:[#allocation4 + $0xf8] sm:$0xff] %v4814
        %4856 = vst [vmem:[#allocation4 + $0x120] sm:$0xff] %v4816
        %4857 = vst [vmem:[#allocation4 + $0x148] sm:$0xff] %v4818
        %4858 = vst [vmem:[#allocation4 + $0x170] sm:$0xff] %v4820
        %4859 = vst [vmem:[#allocation4 + $0x198] sm:$0xff] %v4822
        %4860 = vst [vmem:[#allocation4 + $0x1c0] sm:$0xff] %v4824
        %4861 = vst [vmem:[#allocation4 + $0x1e8] sm:$0xff] %v4826
        %4862 = vst [vmem:[#allocation4 + $0x210] sm:$0xff] %v4828
        %4863 = vst [vmem:[#allocation4 + $0x238] sm:$0xff] %v4830
        %4864 = vst [vmem:[#allocation4 + $0x260] sm:$0xff] %v4832
        %v4865 = vld [vmem:[#allocation3 + $0x8] sm:$0xff]
        %v4866 = vld [vmem:[#allocation3 + $0x10] sm:$0xff]
        %v4867 = vld [vmem:[#allocation3 + $0x18] sm:$0xff]
        %v4868 = vld [vmem:[#allocation3 + $0x20] sm:$0xff]
        %v4869 = vld [vmem:[#allocation3 + $0x28] sm:$0xff]
        %v4870 = vld [vmem:[#allocation3 + $0x30] sm:$0xff]
        %v4871 = vld [vmem:[#allocation3 + $0x38] sm:$0xff]
        %v4872 = vld [vmem:[#allocation3 + $0x40] sm:$0xff]
        %v4873 = vld [vmem:[#allocation3 + $0x48] sm:$0xff]
        %v4874 = vld [vmem:[#allocation3 + $0x50] sm:$0xff]
        %v4875 = vld [vmem:[#allocation3 + $0x58] sm:$0xff]
        %v4876 = vld [vmem:[#allocation3 + $0x60] sm:$0xff]
        %v4877 = vld [vmem:[#allocation3 + $0x68] sm:$0xff]
        %v4878 = vld [vmem:[#allocation3 + $0x70] sm:$0xff]
        %v4879 = vld [vmem:[#allocation3 + $0x78] sm:$0xff]
        %v4880 = vld [vmem:[#allocation3 + $0x80] sm:$0xff]
        %4881 = vst [vmem:[#allocation4 + $0x10] sm:$0xff] %v4865
        %4882 = vst [vmem:[#allocation4 + $0x38] sm:$0xff] %v4866
        %4883 = vst [vmem:[#allocation4 + $0x60] sm:$0xff] %v4867
        %4884 = vst [vmem:[#allocation4 + $0x88] sm:$0xff] %v4868
        %4885 = vst [vmem:[#allocation4 + $0xb0] sm:$0xff] %v4869
        %4886 = vst [vmem:[#allocation4 + $0xd8] sm:$0xff] %v4870
        %4887 = vst [vmem:[#allocation4 + $0x100] sm:$0xff] %v4871
        %4888 = vst [vmem:[#allocation4 + $0x128] sm:$0xff] %v4872
        %4889 = vst [vmem:[#allocation4 + $0x150] sm:$0xff] %v4873
        %4890 = vst [vmem:[#allocation4 + $0x178] sm:$0xff] %v4874
        %4891 = vst [vmem:[#allocation4 + $0x1a0] sm:$0xff] %v4875
        %4892 = vst [vmem:[#allocation4 + $0x1c8] sm:$0xff] %v4876
        %4893 = vst [vmem:[#allocation4 + $0x1f0] sm:$0xff] %v4877
        %4894 = vst [vmem:[#allocation4 + $0x218] sm:$0xff] %v4878
        %4895 = vst [vmem:[#allocation4 + $0x240] sm:$0xff] %v4879
        %4896 = vst [vmem:[#allocation4 + $0x268] sm:$0xff] %v4880
        %v4897 = vld [vmem:[#allocation3 + $0x8] sm:$0xf0]
        %v4898 = vld [vmem:[#allocation3 + $0x10] sm:$0xff]
        %v4899 = vld [vmem:[#allocation3 + $0x18] sm:$0xff]
        %v4900 = vld [vmem:[#allocation3 + $0x20] sm:$0xff]
        %v4901 = vld [vmem:[#allocation3 + $0x28] sm:$0xff]
        %v4902 = vld [vmem:[#allocation3 + $0x30] sm:$0xff]
        %v4903 = vld [vmem:[#allocation3 + $0x38] sm:$0xff]
        %v4904 = vld [vmem:[#allocation3 + $0x40] sm:$0xff]
        %v4905 = vld [vmem:[#allocation3 + $0x48] sm:$0xff]
        %v4906 = vld [vmem:[#allocation3 + $0x50] sm:$0xff]
        %v4907 = vld [vmem:[#allocation3 + $0x58] sm:$0xff]
        %v4908 = vld [vmem:[#allocation3 + $0x60] sm:$0xff]
        %v4909 = vld [vmem:[#allocation3 + $0x68] sm:$0xff]
        %v4910 = vld [vmem:[#allocation3 + $0x70] sm:$0xff]
        %v4911 = vld [vmem:[#allocation3 + $0x78] sm:$0xff]
        %v4912 = vld [vmem:[#allocation3 + $0x80] sm:$0xff]
        %v4913 = vld [vmem:[#allocation3 + $0x88] sm:$0xf]
        %v4931 = vrot.slane %v4897, 4
        %v4932 = vrot.slane %v4898, 4
        %v4933 = vsel %vm722, %v4931, %v4932
        %v4934 = vrot.slane %v4899, 4
        %v4935 = vsel %vm722, %v4932, %v4934
        %v4936 = vrot.slane %v4900, 4
        %v4937 = vsel %vm722, %v4934, %v4936
        %v4938 = vrot.slane %v4901, 4
        %v4939 = vsel %vm722, %v4936, %v4938
        %v4940 = vrot.slane %v4902, 4
        %v4941 = vsel %vm722, %v4938, %v4940
        %v4942 = vrot.slane %v4903, 4
        %v4943 = vsel %vm722, %v4940, %v4942
        %v4944 = vrot.slane %v4904, 4
        %v4945 = vsel %vm722, %v4942, %v4944
        %v4946 = vrot.slane %v4905, 4
        %v4947 = vsel %vm722, %v4944, %v4946
        %v4948 = vrot.slane %v4906, 4
        %v4949 = vsel %vm722, %v4946, %v4948
        %v4950 = vrot.slane %v4907, 4
        %v4951 = vsel %vm722, %v4948, %v4950
        %v4952 = vrot.slane %v4908, 4
        %v4953 = vsel %vm722, %v4950, %v4952
        %v4954 = vrot.slane %v4909, 4
        %v4955 = vsel %vm722, %v4952, %v4954
        %v4956 = vrot.slane %v4910, 4
        %v4957 = vsel %vm722, %v4954, %v4956
        %v4958 = vrot.slane %v4911, 4
        %v4959 = vsel %vm722, %v4956, %v4958
        %v4960 = vrot.slane %v4912, 4
        %v4961 = vsel %vm722, %v4958, %v4960
        %v4962 = vrot.slane %v4913, 4
        %v4963 = vsel %vm722, %v4960, %v4962
        %4980 = vst [vmem:[#allocation4 + $0x18] sm:$0xff] %v4933
        %4981 = vst [vmem:[#allocation4 + $0x40] sm:$0xff] %v4935
        %4982 = vst [vmem:[#allocation4 + $0x68] sm:$0xff] %v4937
        %4983 = vst [vmem:[#allocation4 + $0x90] sm:$0xff] %v4939
        %4984 = vst [vmem:[#allocation4 + $0xb8] sm:$0xff] %v4941
        %4985 = vst [vmem:[#allocation4 + $0xe0] sm:$0xff] %v4943
        %4986 = vst [vmem:[#allocation4 + $0x108] sm:$0xff] %v4945
        %4987 = vst [vmem:[#allocation4 + $0x130] sm:$0xff] %v4947
        %4988 = vst [vmem:[#allocation4 + $0x158] sm:$0xff] %v4949
        %4989 = vst [vmem:[#allocation4 + $0x180] sm:$0xff] %v4951
        %4990 = vst [vmem:[#allocation4 + $0x1a8] sm:$0xff] %v4953
        %4991 = vst [vmem:[#allocation4 + $0x1d0] sm:$0xff] %v4955
        %4992 = vst [vmem:[#allocation4 + $0x1f8] sm:$0xff] %v4957
        %4993 = vst [vmem:[#allocation4 + $0x220] sm:$0xff] %v4959
        %4994 = vst [vmem:[#allocation4 + $0x248] sm:$0xff] %v4961
        %4995 = vst [vmem:[#allocation4 + $0x270] sm:$0xff] %v4963
        %v4996 = vld [vmem:[#allocation3 + $0x10] sm:$0xff]
        %v4997 = vld [vmem:[#allocation3 + $0x18] sm:$0xff]
        %v4998 = vld [vmem:[#allocation3 + $0x20] sm:$0xff]
        %v4999 = vld [vmem:[#allocation3 + $0x28] sm:$0xff]
        %v5000 = vld [vmem:[#allocation3 + $0x30] sm:$0xff]
        %v5001 = vld [vmem:[#allocation3 + $0x38] sm:$0xff]
        %v5002 = vld [vmem:[#allocation3 + $0x40] sm:$0xff]
        %v5003 = vld [vmem:[#allocation3 + $0x48] sm:$0xff]
        %v5004 = vld [vmem:[#allocation3 + $0x50] sm:$0xff]
        %v5005 = vld [vmem:[#allocation3 + $0x58] sm:$0xff]
        %v5006 = vld [vmem:[#allocation3 + $0x60] sm:$0xff]
        %v5007 = vld [vmem:[#allocation3 + $0x68] sm:$0xff]
        %v5008 = vld [vmem:[#allocation3 + $0x70] sm:$0xff]
        %v5009 = vld [vmem:[#allocation3 + $0x78] sm:$0xff]
        %v5010 = vld [vmem:[#allocation3 + $0x80] sm:$0xff]
        %v5011 = vld [vmem:[#allocation3 + $0x88] sm:$0xff]
        %5012 = vst [vmem:[#allocation4 + $0x20] sm:$0xff] %v4996
        %5013 = vst [vmem:[#allocation4 + $0x48] sm:$0xff] %v4997
        %5014 = vst [vmem:[#allocation4 + $0x70] sm:$0xff] %v4998
        %5015 = vst [vmem:[#allocation4 + $0x98] sm:$0xff] %v4999
        %5016 = vst [vmem:[#allocation4 + $0xc0] sm:$0xff] %v5000
        %5017 = vst [vmem:[#allocation4 + $0xe8] sm:$0xff] %v5001
        %5018 = vst [vmem:[#allocation4 + $0x110] sm:$0xff] %v5002
        %5019 = vst [vmem:[#allocation4 + $0x138] sm:$0xff] %v5003
        %5020 = vst [vmem:[#allocation4 + $0x160] sm:$0xff] %v5004
        %5021 = vst [vmem:[#allocation4 + $0x188] sm:$0xff] %v5005
        %5022 = vst [vmem:[#allocation4 + $0x1b0] sm:$0xff] %v5006
        %5023 = vst [vmem:[#allocation4 + $0x1d8] sm:$0xff] %v5007
        %5024 = vst [vmem:[#allocation4 + $0x200] sm:$0xff] %v5008
        %5025 = vst [vmem:[#allocation4 + $0x228] sm:$0xff] %v5009
        %5026 = vst [vmem:[#allocation4 + $0x250] sm:$0xff] %v5010
        %5027 = vst [vmem:[#allocation4 + $0x278] sm:$0xff] %v5011
        %v5028 = vld [vmem:[#allocation4] sm:$0xff]
        %v5029 = vld [vmem:[#allocation4 + $0x8] sm:$0xff]
        %v5030 = vld [vmem:[#allocation4 + $0x10] sm:$0xff]
        %v5031 = vld [vmem:[#allocation4 + $0x18] sm:$0xff]
        %v5032 = vld [vmem:[#allocation4 + $0x20] sm:$0xff]
        %v5033 = vld [vmem:[#allocation4 + $0x28] sm:$0xff]
        %v5034 = vld [vmem:[#allocation4 + $0x30] sm:$0xff]
        %v5035 = vld [vmem:[#allocation4 + $0x38] sm:$0xff]
        %v5036 = vld [vmem:[#allocation4 + $0x40] sm:$0xff]
        %v5037 = vld [vmem:[#allocation4 + $0x48] sm:$0xff]
        %v5038 = vld [vmem:[#allocation4 + $0x50] sm:$0xff]
        %v5039 = vld [vmem:[#allocation4 + $0x58] sm:$0xff]
        %v5040 = vld [vmem:[#allocation4 + $0x60] sm:$0xff]
        %v5041 = vld [vmem:[#allocation4 + $0x68] sm:$0xff]
        %v5042 = vld [vmem:[#allocation4 + $0x70] sm:$0xff]
        %v5043 = vld [vmem:[#allocation4 + $0x78] sm:$0xff]
        %v5044 = vld [vmem:[#allocation4 + $0x80] sm:$0xff]
        %v5045 = vld [vmem:[#allocation4 + $0x88] sm:$0xff]
        %v5046 = vld [vmem:[#allocation4 + $0x90] sm:$0xff]
        %v5047 = vld [vmem:[#allocation4 + $0x98] sm:$0xff]
        %v5048 = vld [vmem:[#allocation4 + $0xa0] sm:$0xff]
        %v5049 = vld [vmem:[#allocation4 + $0xa8] sm:$0xff]
        %v5050 = vld [vmem:[#allocation4 + $0xb0] sm:$0xff]
        %v5051 = vld [vmem:[#allocation4 + $0xb8] sm:$0xff]
        %v5052 = vld [vmem:[#allocation4 + $0xc0] sm:$0xff]
        %v5053 = vld [vmem:[#allocation4 + $0xc8] sm:$0xff]
        %v5054 = vld [vmem:[#allocation4 + $0xd0] sm:$0xff]
        %v5055 = vld [vmem:[#allocation4 + $0xd8] sm:$0xff]
        %v5056 = vld [vmem:[#allocation4 + $0xe0] sm:$0xff]
        %v5057 = vld [vmem:[#allocation4 + $0xe8] sm:$0xff]
        %v5058 = vld [vmem:[#allocation4 + $0xf0] sm:$0xff]
        %v5059 = vld [vmem:[#allocation4 + $0xf8] sm:$0xff]
        %v5060 = vld [vmem:[#allocation4 + $0x100] sm:$0xff]
        %v5061 = vld [vmem:[#allocation4 + $0x108] sm:$0xff]
        %v5062 = vld [vmem:[#allocation4 + $0x110] sm:$0xff]
        %v5063 = vld [vmem:[#allocation4 + $0x118] sm:$0xff]
        %v5064 = vld [vmem:[#allocation4 + $0x120] sm:$0xff]
        %v5065 = vld [vmem:[#allocation4 + $0x128] sm:$0xff]
        %v5066 = vld [vmem:[#allocation4 + $0x130] sm:$0xff]
        %v5067 = vld [vmem:[#allocation4 + $0x138] sm:$0xff]
        %v5068 = vld [vmem:[#allocation4 + $0x140] sm:$0xff]
        %v5069 = vld [vmem:[#allocation4 + $0x148] sm:$0xff]
        %v5070 = vld [vmem:[#allocation4 + $0x150] sm:$0xff]
        %v5071 = vld [vmem:[#allocation4 + $0x158] sm:$0xff]
        %v5072 = vld [vmem:[#allocation4 + $0x160] sm:$0xff]
        %v5073 = vld [vmem:[#allocation4 + $0x168] sm:$0xff]
        %v5074 = vld [vmem:[#allocation4 + $0x170] sm:$0xff]
        %v5075 = vld [vmem:[#allocation4 + $0x178] sm:$0xff]
        %v5076 = vld [vmem:[#allocation4 + $0x180] sm:$0xff]
        %v5077 = vld [vmem:[#allocation4 + $0x188] sm:$0xff]
        %v5078 = vld [vmem:[#allocation4 + $0x190] sm:$0xff]
        %v5079 = vld [vmem:[#allocation4 + $0x198] sm:$0xff]
        %v5080 = vld [vmem:[#allocation4 + $0x1a0] sm:$0xff]
        %v5081 = vld [vmem:[#allocation4 + $0x1a8] sm:$0xff]
        %v5082 = vld [vmem:[#allocation4 + $0x1b0] sm:$0xff]
        %v5083 = vld [vmem:[#allocation4 + $0x1b8] sm:$0xff]
        %v5084 = vld [vmem:[#allocation4 + $0x1c0] sm:$0xff]
        %v5085 = vld [vmem:[#allocation4 + $0x1c8] sm:$0xff]
        %v5086 = vld [vmem:[#allocation4 + $0x1d0] sm:$0xff]
        %v5087 = vld [vmem:[#allocation4 + $0x1d8] sm:$0xff]
        %v5088 = vld [vmem:[#allocation4 + $0x1e0] sm:$0xff]
        %v5089 = vld [vmem:[#allocation4 + $0x1e8] sm:$0xff]
        %v5090 = vld [vmem:[#allocation4 + $0x1f0] sm:$0xff]
        %v5091 = vld [vmem:[#allocation4 + $0x1f8] sm:$0xff]
        %v5092 = vld [vmem:[#allocation4 + $0x200] sm:$0xff]
        %v5093 = vld [vmem:[#allocation4 + $0x208] sm:$0xff]
        %v5094 = vld [vmem:[#allocation4 + $0x210] sm:$0xff]
        %v5095 = vld [vmem:[#allocation4 + $0x218] sm:$0xff]
        %v5096 = vld [vmem:[#allocation4 + $0x220] sm:$0xff]
        %v5097 = vld [vmem:[#allocation4 + $0x228] sm:$0xff]
        %v5098 = vld [vmem:[#allocation4 + $0x230] sm:$0xff]
        %v5099 = vld [vmem:[#allocation4 + $0x238] sm:$0xff]
        %v5100 = vld [vmem:[#allocation4 + $0x240] sm:$0xff]
        %v5101 = vld [vmem:[#allocation4 + $0x248] sm:$0xff]
        %v5102 = vld [vmem:[#allocation4 + $0x250] sm:$0xff]
        %v5103 = vld [vmem:[#allocation4 + $0x258] sm:$0xff]
        %v5104 = vld [vmem:[#allocation4 + $0x260] sm:$0xff]
        %v5105 = vld [vmem:[#allocation4 + $0x268] sm:$0xff]
        %v5106 = vld [vmem:[#allocation4 + $0x270] sm:$0xff]
        %v5107 = vld [vmem:[#allocation4 + $0x278] sm:$0xff]
        %v5108 = vld [vmem:[#allocation8] sm:$0xff]
        %v5109 = vld [vmem:[#allocation8 + $0x8] sm:$0xff]
        %v5110 = vld [vmem:[#allocation8 + $0x10] sm:$0xff]
        %v5111 = vld [vmem:[#allocation8 + $0x18] sm:$0xff]
        %v5112 = vld [vmem:[#allocation8 + $0x20] sm:$0xff]
        %v5113 = vld [vmem:[#allocation8 + $0x28] sm:$0xff]
        %v5114 = vld [vmem:[#allocation8 + $0x30] sm:$0xff]
        %v5115 = vld [vmem:[#allocation8 + $0x38] sm:$0xff]
        %v5116 = vld [vmem:[#allocation8 + $0x40] sm:$0xff]
        %v5117 = vld [vmem:[#allocation8 + $0x48] sm:$0xff]
        %v5118 = vld [vmem:[#allocation8 + $0x50] sm:$0xff]
        %v5119 = vld [vmem:[#allocation8 + $0x58] sm:$0xff]
        %v5120 = vld [vmem:[#allocation8 + $0x60] sm:$0xff]
        %v5121 = vld [vmem:[#allocation8 + $0x68] sm:$0xff]
        %v5122 = vld [vmem:[#allocation8 + $0x70] sm:$0xff]
        %v5123 = vld [vmem:[#allocation8 + $0x78] sm:$0xff]
        %v5124 = vld [vmem:[#allocation8 + $0x80] sm:$0xff]
        %v5125 = vld [vmem:[#allocation8 + $0x88] sm:$0xff]
        %v5126 = vld [vmem:[#allocation8 + $0x90] sm:$0xff]
        %v5127 = vld [vmem:[#allocation8 + $0x98] sm:$0xff]
        %v5128 = vld [vmem:[#allocation8 + $0xa0] sm:$0xff]
        %v5129 = vld [vmem:[#allocation8 + $0xa8] sm:$0xff]
        %v5130 = vld [vmem:[#allocation8 + $0xb0] sm:$0xff]
        %v5131 = vld [vmem:[#allocation8 + $0xb8] sm:$0xff]
        %v5132 = vld [vmem:[#allocation8 + $0xc0] sm:$0xff]
        %v5133 = vld [vmem:[#allocation8 + $0xc8] sm:$0xff]
        %v5134 = vld [vmem:[#allocation8 + $0xd0] sm:$0xff]
        %v5135 = vld [vmem:[#allocation8 + $0xd8] sm:$0xff]
        %v5136 = vld [vmem:[#allocation8 + $0xe0] sm:$0xff]
        %v5137 = vld [vmem:[#allocation8 + $0xe8] sm:$0xff]
        %v5138 = vld [vmem:[#allocation8 + $0xf0] sm:$0xff]
        %v5139 = vld [vmem:[#allocation8 + $0xf8] sm:$0xff]
        %v5140 = vld [vmem:[#allocation8 + $0x100] sm:$0xff]
        %v5141 = vld [vmem:[#allocation8 + $0x108] sm:$0xff]
        %v5142 = vld [vmem:[#allocation8 + $0x110] sm:$0xff]
        %v5143 = vld [vmem:[#allocation8 + $0x118] sm:$0xff]
        %v5144 = vld [vmem:[#allocation8 + $0x120] sm:$0xff]
        %v5145 = vld [vmem:[#allocation8 + $0x128] sm:$0xff]
        %v5146 = vld [vmem:[#allocation8 + $0x130] sm:$0xff]
        %v5147 = vld [vmem:[#allocation8 + $0x138] sm:$0xff]
        %v5148 = vld [vmem:[#allocation8 + $0x140] sm:$0xff]
        %v5149 = vld [vmem:[#allocation8 + $0x148] sm:$0xff]
        %v5150 = vld [vmem:[#allocation8 + $0x150] sm:$0xff]
        %v5151 = vld [vmem:[#allocation8 + $0x158] sm:$0xff]
        %v5152 = vld [vmem:[#allocation8 + $0x160] sm:$0xff]
        %v5153 = vld [vmem:[#allocation8 + $0x168] sm:$0xff]
        %v5154 = vld [vmem:[#allocation8 + $0x170] sm:$0xff]
        %v5155 = vld [vmem:[#allocation8 + $0x178] sm:$0xff]
        %v5156 = vld [vmem:[#allocation8 + $0x180] sm:$0xff]
        %v5157 = vld [vmem:[#allocation8 + $0x188] sm:$0xff]
        %v5158 = vld [vmem:[#allocation8 + $0x190] sm:$0xff]
        %v5159 = vld [vmem:[#allocation8 + $0x198] sm:$0xff]
        %v5160 = vld [vmem:[#allocation8 + $0x1a0] sm:$0xff]
        %v5161 = vld [vmem:[#allocation8 + $0x1a8] sm:$0xff]
        %v5162 = vld [vmem:[#allocation8 + $0x1b0] sm:$0xff]
        %v5163 = vld [vmem:[#allocation8 + $0x1b8] sm:$0xff]
        %v5164 = vld [vmem:[#allocation8 + $0x1c0] sm:$0xff]
        %v5165 = vld [vmem:[#allocation8 + $0x1c8] sm:$0xff]
        %v5166 = vld [vmem:[#allocation8 + $0x1d0] sm:$0xff]
        %v5167 = vld [vmem:[#allocation8 + $0x1d8] sm:$0xff]
        %v5168 = vld [vmem:[#allocation8 + $0x1e0] sm:$0xff]
        %v5169 = vld [vmem:[#allocation8 + $0x1e8] sm:$0xff]
        %v5170 = vld [vmem:[#allocation8 + $0x1f0] sm:$0xff]
        %v5171 = vld [vmem:[#allocation8 + $0x1f8] sm:$0xff]
        %v5172 = vld [vmem:[#allocation8 + $0x200] sm:$0xff]
        %v5173 = vld [vmem:[#allocation8 + $0x208] sm:$0xff]
        %v5174 = vld [vmem:[#allocation8 + $0x210] sm:$0xff]
        %v5175 = vld [vmem:[#allocation8 + $0x218] sm:$0xff]
        %v5176 = vld [vmem:[#allocation8 + $0x220] sm:$0xff]
        %v5177 = vld [vmem:[#allocation8 + $0x228] sm:$0xff]
        %v5178 = vld [vmem:[#allocation8 + $0x230] sm:$0xff]
        %v5179 = vld [vmem:[#allocation8 + $0x238] sm:$0xff]
        %v5180 = vld [vmem:[#allocation8 + $0x240] sm:$0xff]
        %v5181 = vld [vmem:[#allocation8 + $0x248] sm:$0xff]
        %v5182 = vld [vmem:[#allocation8 + $0x250] sm:$0xff]
        %v5183 = vld [vmem:[#allocation8 + $0x258] sm:$0xff]
        %v5184 = vld [vmem:[#allocation8 + $0x260] sm:$0xff]
        %v5185 = vld [vmem:[#allocation8 + $0x268] sm:$0xff]
        %v5186 = vld [vmem:[#allocation8 + $0x270] sm:$0xff]
        %v5187 = vld [vmem:[#allocation8 + $0x278] sm:$0xff]
        %v5188 = vld [vmem:[%s9] sm:$0x3]
        %v5190 = vlaneseq
        %v5191 = vshrl.u32 %v5190, 7
        %v5192 = vsub.s32 0, %v5191
        %v5193 = vrot.slane %v5188, %v5192
        %v5194 = vlaneseq
        %v5195 = vshrl.u32 %v5194, 7
        %v5196 = vsub.s32 1, %v5195
        %v5197 = vrot.slane %v5188, %v5196
        %v5280 = vunpack.c.l.b16 %v5108
        %v5281 = vunpack.c.h.b16 %v5108
        %v5282 = vunpack.c.l.b16 %v5109
        %v5283 = vunpack.c.h.b16 %v5109
        %v5284 = vunpack.c.l.b16 %v5110
        %v5285 = vunpack.c.h.b16 %v5110
        %v5286 = vunpack.c.l.b16 %v5111
        %v5287 = vunpack.c.h.b16 %v5111
        %v5288 = vunpack.c.l.b16 %v5112
        %v5289 = vunpack.c.h.b16 %v5112
        %v5290 = vunpack.c.l.b16 %v5113
        %v5291 = vunpack.c.h.b16 %v5113
        %v5292 = vunpack.c.l.b16 %v5114
        %v5293 = vunpack.c.h.b16 %v5114
        %v5294 = vunpack.c.l.b16 %v5115
        %v5295 = vunpack.c.h.b16 %v5115
        %v5296 = vunpack.c.l.b16 %v5116
        %v5297 = vunpack.c.h.b16 %v5116
        %v5298 = vunpack.c.l.b16 %v5117
        %v5299 = vunpack.c.h.b16 %v5117
        %v5300 = vunpack.c.l.b16 %v5118
        %v5301 = vunpack.c.h.b16 %v5118
        %v5302 = vunpack.c.l.b16 %v5119
        %v5303 = vunpack.c.h.b16 %v5119
        %v5304 = vunpack.c.l.b16 %v5120
        %v5305 = vunpack.c.h.b16 %v5120
        %v5306 = vunpack.c.l.b16 %v5121
        %v5307 = vunpack.c.h.b16 %v5121
        %v5308 = vunpack.c.l.b16 %v5122
        %v5309 = vunpack.c.h.b16 %v5122
        %v5310 = vunpack.c.l.b16 %v5123
        %v5311 = vunpack.c.h.b16 %v5123
        %v5312 = vunpack.c.l.b16 %v5124
        %v5313 = vunpack.c.h.b16 %v5124
        %v5314 = vunpack.c.l.b16 %v5125
        %v5315 = vunpack.c.h.b16 %v5125
        %v5316 = vunpack.c.l.b16 %v5126
        %v5317 = vunpack.c.h.b16 %v5126
        %v5318 = vunpack.c.l.b16 %v5127
        %v5319 = vunpack.c.h.b16 %v5127
        %v5320 = vunpack.c.l.b16 %v5128
        %v5321 = vunpack.c.h.b16 %v5128
        %v5322 = vunpack.c.l.b16 %v5129
        %v5323 = vunpack.c.h.b16 %v5129
        %v5324 = vunpack.c.l.b16 %v5130
        %v5325 = vunpack.c.h.b16 %v5130
        %v5326 = vunpack.c.l.b16 %v5131
        %v5327 = vunpack.c.h.b16 %v5131
        %v5328 = vunpack.c.l.b16 %v5132
        %v5329 = vunpack.c.h.b16 %v5132
        %v5330 = vunpack.c.l.b16 %v5133
        %v5331 = vunpack.c.h.b16 %v5133
        %v5332 = vunpack.c.l.b16 %v5134
        %v5333 = vunpack.c.h.b16 %v5134
        %v5334 = vunpack.c.l.b16 %v5135
        %v5335 = vunpack.c.h.b16 %v5135
        %v5336 = vunpack.c.l.b16 %v5136
        %v5337 = vunpack.c.h.b16 %v5136
        %v5338 = vunpack.c.l.b16 %v5137
        %v5339 = vunpack.c.h.b16 %v5137
        %v5340 = vunpack.c.l.b16 %v5138
        %v5341 = vunpack.c.h.b16 %v5138
        %v5342 = vunpack.c.l.b16 %v5139
        %v5343 = vunpack.c.h.b16 %v5139
        %v5344 = vunpack.c.l.b16 %v5140
        %v5345 = vunpack.c.h.b16 %v5140
        %v5346 = vunpack.c.l.b16 %v5141
        %v5347 = vunpack.c.h.b16 %v5141
        %v5348 = vunpack.c.l.b16 %v5142
        %v5349 = vunpack.c.h.b16 %v5142
        %v5350 = vunpack.c.l.b16 %v5143
        %v5351 = vunpack.c.h.b16 %v5143
        %v5352 = vunpack.c.l.b16 %v5144
        %v5353 = vunpack.c.h.b16 %v5144
        %v5354 = vunpack.c.l.b16 %v5145
        %v5355 = vunpack.c.h.b16 %v5145
        %v5356 = vunpack.c.l.b16 %v5146
        %v5357 = vunpack.c.h.b16 %v5146
        %v5358 = vunpack.c.l.b16 %v5147
        %v5359 = vunpack.c.h.b16 %v5147
        %v5360 = vunpack.c.l.b16 %v5148
        %v5361 = vunpack.c.h.b16 %v5148
        %v5362 = vunpack.c.l.b16 %v5149
        %v5363 = vunpack.c.h.b16 %v5149
        %v5364 = vunpack.c.l.b16 %v5150
        %v5365 = vunpack.c.h.b16 %v5150
        %v5366 = vunpack.c.l.b16 %v5151
        %v5367 = vunpack.c.h.b16 %v5151
        %v5368 = vunpack.c.l.b16 %v5152
        %v5369 = vunpack.c.h.b16 %v5152
        %v5370 = vunpack.c.l.b16 %v5153
        %v5371 = vunpack.c.h.b16 %v5153
        %v5372 = vunpack.c.l.b16 %v5154
        %v5373 = vunpack.c.h.b16 %v5154
        %v5374 = vunpack.c.l.b16 %v5155
        %v5375 = vunpack.c.h.b16 %v5155
        %v5376 = vunpack.c.l.b16 %v5156
        %v5377 = vunpack.c.h.b16 %v5156
        %v5378 = vunpack.c.l.b16 %v5157
        %v5379 = vunpack.c.h.b16 %v5157
        %v5380 = vunpack.c.l.b16 %v5158
        %v5381 = vunpack.c.h.b16 %v5158
        %v5382 = vunpack.c.l.b16 %v5159
        %v5383 = vunpack.c.h.b16 %v5159
        %v5384 = vunpack.c.l.b16 %v5160
        %v5385 = vunpack.c.h.b16 %v5160
        %v5386 = vunpack.c.l.b16 %v5161
        %v5387 = vunpack.c.h.b16 %v5161
        %v5388 = vunpack.c.l.b16 %v5162
        %v5389 = vunpack.c.h.b16 %v5162
        %v5390 = vunpack.c.l.b16 %v5163
        %v5391 = vunpack.c.h.b16 %v5163
        %v5392 = vunpack.c.l.b16 %v5164
        %v5393 = vunpack.c.h.b16 %v5164
        %v5394 = vunpack.c.l.b16 %v5165
        %v5395 = vunpack.c.h.b16 %v5165
        %v5396 = vunpack.c.l.b16 %v5166
        %v5397 = vunpack.c.h.b16 %v5166
        %v5398 = vunpack.c.l.b16 %v5167
        %v5399 = vunpack.c.h.b16 %v5167
        %v5400 = vunpack.c.l.b16 %v5168
        %v5401 = vunpack.c.h.b16 %v5168
        %v5402 = vunpack.c.l.b16 %v5169
        %v5403 = vunpack.c.h.b16 %v5169
        %v5404 = vunpack.c.l.b16 %v5170
        %v5405 = vunpack.c.h.b16 %v5170
        %v5406 = vunpack.c.l.b16 %v5171
        %v5407 = vunpack.c.h.b16 %v5171
        %v5408 = vunpack.c.l.b16 %v5172
        %v5409 = vunpack.c.h.b16 %v5172
        %v5410 = vunpack.c.l.b16 %v5173
        %v5411 = vunpack.c.h.b16 %v5173
        %v5412 = vunpack.c.l.b16 %v5174
        %v5413 = vunpack.c.h.b16 %v5174
        %v5414 = vunpack.c.l.b16 %v5175
        %v5415 = vunpack.c.h.b16 %v5175
        %v5416 = vunpack.c.l.b16 %v5176
        %v5417 = vunpack.c.h.b16 %v5176
        %v5418 = vunpack.c.l.b16 %v5177
        %v5419 = vunpack.c.h.b16 %v5177
        %v5420 = vunpack.c.l.b16 %v5178
        %v5421 = vunpack.c.h.b16 %v5178
        %v5422 = vunpack.c.l.b16 %v5179
        %v5423 = vunpack.c.h.b16 %v5179
        %v5424 = vunpack.c.l.b16 %v5180
        %v5425 = vunpack.c.h.b16 %v5180
        %v5426 = vunpack.c.l.b16 %v5181
        %v5427 = vunpack.c.h.b16 %v5181
        %v5428 = vunpack.c.l.b16 %v5182
        %v5429 = vunpack.c.h.b16 %v5182
        %v5430 = vunpack.c.l.b16 %v5183
        %v5431 = vunpack.c.h.b16 %v5183
        %v5432 = vunpack.c.l.b16 %v5184
        %v5433 = vunpack.c.h.b16 %v5184
        %v5434 = vunpack.c.l.b16 %v5185
        %v5435 = vunpack.c.h.b16 %v5185
        %v5436 = vunpack.c.l.b16 %v5186
        %v5437 = vunpack.c.h.b16 %v5186
        %v5438 = vunpack.c.l.b16 %v5187
        %v5439 = vunpack.c.h.b16 %v5187
        %v5440 = vpack.c.b16 %v5282, %v5280
        %v5441 = vpack.c.b16 %v5283, %v5281
        %v5442 = vpack.c.b16 %v5286, %v5284
        %v5443 = vpack.c.b16 %v5287, %v5285
        %v5444 = vpack.c.b16 %v5290, %v5288
        %v5445 = vpack.c.b16 %v5291, %v5289
        %v5446 = vpack.c.b16 %v5294, %v5292
        %v5447 = vpack.c.b16 %v5295, %v5293
        %v5448 = vpack.c.b16 %v5298, %v5296
        %v5449 = vpack.c.b16 %v5299, %v5297
        %v5450 = vpack.c.b16 %v5302, %v5300
        %v5451 = vpack.c.b16 %v5303, %v5301
        %v5452 = vpack.c.b16 %v5306, %v5304
        %v5453 = vpack.c.b16 %v5307, %v5305
        %v5454 = vpack.c.b16 %v5310, %v5308
        %v5455 = vpack.c.b16 %v5311, %v5309
        %v5456 = vpack.c.b16 %v5314, %v5312
        %v5457 = vpack.c.b16 %v5315, %v5313
        %v5458 = vpack.c.b16 %v5318, %v5316
        %v5459 = vpack.c.b16 %v5319, %v5317
        %v5460 = vpack.c.b16 %v5322, %v5320
        %v5461 = vpack.c.b16 %v5323, %v5321
        %v5462 = vpack.c.b16 %v5326, %v5324
        %v5463 = vpack.c.b16 %v5327, %v5325
        %v5464 = vpack.c.b16 %v5330, %v5328
        %v5465 = vpack.c.b16 %v5331, %v5329
        %v5466 = vpack.c.b16 %v5334, %v5332
        %v5467 = vpack.c.b16 %v5335, %v5333
        %v5468 = vpack.c.b16 %v5338, %v5336
        %v5469 = vpack.c.b16 %v5339, %v5337
        %v5470 = vpack.c.b16 %v5342, %v5340
        %v5471 = vpack.c.b16 %v5343, %v5341
        %v5472 = vpack.c.b16 %v5346, %v5344
        %v5473 = vpack.c.b16 %v5347, %v5345
        %v5474 = vpack.c.b16 %v5350, %v5348
        %v5475 = vpack.c.b16 %v5351, %v5349
        %v5476 = vpack.c.b16 %v5354, %v5352
        %v5477 = vpack.c.b16 %v5355, %v5353
        %v5478 = vpack.c.b16 %v5358, %v5356
        %v5479 = vpack.c.b16 %v5359, %v5357
        %v5480 = vpack.c.b16 %v5362, %v5360
        %v5481 = vpack.c.b16 %v5363, %v5361
        %v5482 = vpack.c.b16 %v5366, %v5364
        %v5483 = vpack.c.b16 %v5367, %v5365
        %v5484 = vpack.c.b16 %v5370, %v5368
        %v5485 = vpack.c.b16 %v5371, %v5369
        %v5486 = vpack.c.b16 %v5374, %v5372
        %v5487 = vpack.c.b16 %v5375, %v5373
        %v5488 = vpack.c.b16 %v5378, %v5376
        %v5489 = vpack.c.b16 %v5379, %v5377
        %v5490 = vpack.c.b16 %v5382, %v5380
        %v5491 = vpack.c.b16 %v5383, %v5381
        %v5492 = vpack.c.b16 %v5386, %v5384
        %v5493 = vpack.c.b16 %v5387, %v5385
        %v5494 = vpack.c.b16 %v5390, %v5388
        %v5495 = vpack.c.b16 %v5391, %v5389
        %v5496 = vpack.c.b16 %v5394, %v5392
        %v5497 = vpack.c.b16 %v5395, %v5393
        %v5498 = vpack.c.b16 %v5398, %v5396
        %v5499 = vpack.c.b16 %v5399, %v5397
        %v5500 = vpack.c.b16 %v5402, %v5400
        %v5501 = vpack.c.b16 %v5403, %v5401
        %v5502 = vpack.c.b16 %v5406, %v5404
        %v5503 = vpack.c.b16 %v5407, %v5405
        %v5504 = vpack.c.b16 %v5410, %v5408
        %v5505 = vpack.c.b16 %v5411, %v5409
        %v5506 = vpack.c.b16 %v5414, %v5412
        %v5507 = vpack.c.b16 %v5415, %v5413
        %v5508 = vpack.c.b16 %v5418, %v5416
        %v5509 = vpack.c.b16 %v5419, %v5417
        %v5510 = vpack.c.b16 %v5422, %v5420
        %v5511 = vpack.c.b16 %v5423, %v5421
        %v5512 = vpack.c.b16 %v5426, %v5424
        %v5513 = vpack.c.b16 %v5427, %v5425
        %v5514 = vpack.c.b16 %v5430, %v5428
        %v5515 = vpack.c.b16 %v5431, %v5429
        %v5516 = vpack.c.b16 %v5434, %v5432
        %v5517 = vpack.c.b16 %v5435, %v5433
        %v5518 = vpack.c.b16 %v5438, %v5436
        %v5519 = vpack.c.b16 %v5439, %v5437
        %5600 = vmatprep.subr.bf16.mxu0 %v5441
        %5601 = vmatpush1.bf16.msra.mxu0 %v5440
        %5602 = vmatprep.subr.bf16.mxu0 %v5443
        %5603 = vmatpush1.bf16.msra.mxu0 %v5442
        %5604 = vmatprep.subr.bf16.mxu0 %v5445
        %5605 = vmatpush1.bf16.msra.mxu0 %v5444
        %5606 = vmatprep.subr.bf16.mxu0 %v5447
        %5607 = vmatpush1.bf16.msra.mxu0 %v5446
        %5608 = vmatprep.subr.bf16.mxu0 %v5449
        %5609 = vmatpush1.bf16.msra.mxu0 %v5448
        %5610 = vmatprep.subr.bf16.mxu0 %v5451
        %5611 = vmatpush1.bf16.msra.mxu0 %v5450
        %5612 = vmatprep.subr.bf16.mxu0 %v5453
        %5613 = vmatpush1.bf16.msra.mxu0 %v5452
        %5614 = vmatprep.subr.bf16.mxu0 %v5455
        %5615 = vmatpush1.bf16.msra.mxu0 %v5454
        %5616 = vmatprep.subr.bf16.mxu0 %v5457
        %5617 = vmatpush1.bf16.msra.mxu0 %v5456
        %5618 = vmatprep.subr.bf16.mxu0 %v5459
        %5619 = vmatpush1.bf16.msra.mxu0 %v5458
        %5620 = vmatprep.subr.bf16.mxu0 %v5461
        %5621 = vmatpush1.bf16.msra.mxu0 %v5460
        %5622 = vmatprep.subr.bf16.mxu0 %v5463
        %5623 = vmatpush1.bf16.msra.mxu0 %v5462
        %5624 = vmatprep.subr.bf16.mxu0 %v5465
        %5625 = vmatpush1.bf16.msra.mxu0 %v5464
        %5626 = vmatprep.subr.bf16.mxu0 %v5467
        %5627 = vmatpush1.bf16.msra.mxu0 %v5466
        %5628 = vmatprep.subr.bf16.mxu0 %v5469
        %5629 = vmatpush1.bf16.msra.mxu0 %v5468
        %5630 = vmatprep.subr.bf16.mxu0 %v5471
        %5631 = vmatpush1.bf16.msra.mxu0 %v5470
        %5632 = vmatprep.mubr.bf16.mxu0 %v5029
        %5633 = vmatmul.mubr.bf16.gmra.mrb[0].mxu0 %v5028
        %v5634 = vpop.f32.mrb[0].mxu0
        %v5635 = vadd.f32 %v5193, %v5634
        %v5636 = vpop.f32.mrb[0].mxu0
        %v5637 = vadd.f32 %v5197, %v5636
        %v5638 = vpop.f32.mrb[0].mxu0
        %v5639 = vadd.f32 %v5193, %v5638
        %v5640 = vpop.f32.mrb[0].mxu0
        %v5641 = vadd.f32 %v5197, %v5640
        %5642 = vmatprep.mubr.bf16.mxu0 %v5034
        %5643 = vmatmul.mubr.bf16.gmra.mrb[0].mxu0 %v5033
        %v5644 = vpop.f32.mrb[0].mxu0
        %v5645 = vadd.f32 %v5193, %v5644
        %v5646 = vpop.f32.mrb[0].mxu0
        %v5647 = vadd.f32 %v5197, %v5646
        %v5648 = vpop.f32.mrb[0].mxu0
        %v5649 = vadd.f32 %v5193, %v5648
        %v5650 = vpop.f32.mrb[0].mxu0
        %v5651 = vadd.f32 %v5197, %v5650
        %5652 = vmatprep.mubr.bf16.mxu0 %v5039
        %5653 = vmatmul.mubr.bf16.gmra.mrb[0].mxu0 %v5038
        %v5654 = vpop.f32.mrb[0].mxu0
        %v5655 = vadd.f32 %v5193, %v5654
        %v5656 = vpop.f32.mrb[0].mxu0
        %v5657 = vadd.f32 %v5197, %v5656
        %v5658 = vpop.f32.mrb[0].mxu0
        %v5659 = vadd.f32 %v5193, %v5658
        %v5660 = vpop.f32.mrb[0].mxu0
        %v5661 = vadd.f32 %v5197, %v5660
        %5662 = vmatprep.mubr.bf16.mxu0 %v5044
        %5663 = vmatmul.mubr.bf16.gmra.mrb[0].mxu0 %v5043
        %v5664 = vpop.f32.mrb[0].mxu0
        %v5665 = vadd.f32 %v5193, %v5664
        %v5666 = vpop.f32.mrb[0].mxu0
        %v5667 = vadd.f32 %v5197, %v5666
        %v5668 = vpop.f32.mrb[0].mxu0
        %v5669 = vadd.f32 %v5193, %v5668
        %v5670 = vpop.f32.mrb[0].mxu0
        %v5671 = vadd.f32 %v5197, %v5670
        %5672 = vmatprep.mubr.bf16.mxu0 %v5049
        %5673 = vmatmul.mubr.bf16.gmra.mrb[0].mxu0 %v5048
        %v5674 = vpop.f32.mrb[0].mxu0
        %v5675 = vadd.f32 %v5193, %v5674
        %v5676 = vpop.f32.mrb[0].mxu0
        %v5677 = vadd.f32 %v5197, %v5676
        %v5678 = vpop.f32.mrb[0].mxu0
        %v5679 = vadd.f32 %v5193, %v5678
        %v5680 = vpop.f32.mrb[0].mxu0
        %v5681 = vadd.f32 %v5197, %v5680
        %5682 = vmatprep.mubr.bf16.mxu0 %v5054
        %5683 = vmatmul.mubr.bf16.gmra.mrb[0].mxu0 %v5053
        %v5684 = vpop.f32.mrb[0].mxu0
        %v5685 = vadd.f32 %v5193, %v5684
        %v5686 = vpop.f32.mrb[0].mxu0
        %v5687 = vadd.f32 %v5197, %v5686
        %v5688 = vpop.f32.mrb[0].mxu0
        %v5689 = vadd.f32 %v5193, %v5688
        %v5690 = vpop.f32.mrb[0].mxu0
        %v5691 = vadd.f32 %v5197, %v5690
        %5692 = vmatprep.mubr.bf16.mxu0 %v5059
        %5693 = vmatmul.mubr.bf16.gmra.mrb[0].mxu0 %v5058
        %v5694 = vpop.f32.mrb[0].mxu0
        %v5695 = vadd.f32 %v5193, %v5694
        %v5696 = vpop.f32.mrb[0].mxu0
        %v5697 = vadd.f32 %v5197, %v5696
        %v5698 = vpop.f32.mrb[0].mxu0
        %v5699 = vadd.f32 %v5193, %v5698
        %v5700 = vpop.f32.mrb[0].mxu0
        %v5701 = vadd.f32 %v5197, %v5700
        %5702 = vmatprep.mubr.bf16.mxu0 %v5064
        %5703 = vmatmul.mubr.bf16.gmra.mrb[0].mxu0 %v5063
        %v5704 = vpop.f32.mrb[0].mxu0
        %v5705 = vadd.f32 %v5193, %v5704
        %v5706 = vpop.f32.mrb[0].mxu0
        %v5707 = vadd.f32 %v5197, %v5706
        %v5708 = vpop.f32.mrb[0].mxu0
        %v5709 = vadd.f32 %v5193, %v5708
        %v5710 = vpop.f32.mrb[0].mxu0
        %v5711 = vadd.f32 %v5197, %v5710
        %5712 = vmatprep.mubr.bf16.mxu0 %v5069
        %5713 = vmatmul.mubr.bf16.gmra.mrb[0].mxu0 %v5068
        %v5714 = vpop.f32.mrb[0].mxu0
        %v5715 = vadd.f32 %v5193, %v5714
        %v5716 = vpop.f32.mrb[0].mxu0
        %v5717 = vadd.f32 %v5197, %v5716
        %v5718 = vpop.f32.mrb[0].mxu0
        %v5719 = vadd.f32 %v5193, %v5718
        %v5720 = vpop.f32.mrb[0].mxu0
        %v5721 = vadd.f32 %v5197, %v5720
        %5722 = vmatprep.mubr.bf16.mxu0 %v5074
        %5723 = vmatmul.mubr.bf16.gmra.mrb[0].mxu0 %v5073
        %v5724 = vpop.f32.mrb[0].mxu0
        %v5725 = vadd.f32 %v5193, %v5724
        %v5726 = vpop.f32.mrb[0].mxu0
        %v5727 = vadd.f32 %v5197, %v5726
        %v5728 = vpop.f32.mrb[0].mxu0
        %v5729 = vadd.f32 %v5193, %v5728
        %v5730 = vpop.f32.mrb[0].mxu0
        %v5731 = vadd.f32 %v5197, %v5730
        %5732 = vmatprep.mubr.bf16.mxu0 %v5079
        %5733 = vmatmul.mubr.bf16.gmra.mrb[0].mxu0 %v5078
        %v5734 = vpop.f32.mrb[0].mxu0
        %v5735 = vadd.f32 %v5193, %v5734
        %v5736 = vpop.f32.mrb[0].mxu0
        %v5737 = vadd.f32 %v5197, %v5736
        %v5738 = vpop.f32.mrb[0].mxu0
        %v5739 = vadd.f32 %v5193, %v5738
        %v5740 = vpop.f32.mrb[0].mxu0
        %v5741 = vadd.f32 %v5197, %v5740
        %5742 = vmatprep.mubr.bf16.mxu0 %v5084
        %5743 = vmatmul.mubr.bf16.gmra.mrb[0].mxu0 %v5083
        %v5744 = vpop.f32.mrb[0].mxu0
        %v5745 = vadd.f32 %v5193, %v5744
        %v5746 = vpop.f32.mrb[0].mxu0
        %v5747 = vadd.f32 %v5197, %v5746
        %v5748 = vpop.f32.mrb[0].mxu0
        %v5749 = vadd.f32 %v5193, %v5748
        %v5750 = vpop.f32.mrb[0].mxu0
        %v5751 = vadd.f32 %v5197, %v5750
        %5752 = vmatprep.mubr.bf16.mxu0 %v5089
        %5753 = vmatmul.mubr.bf16.gmra.mrb[0].mxu0 %v5088
        %v5754 = vpop.f32.mrb[0].mxu0
        %v5755 = vadd.f32 %v5193, %v5754
        %v5756 = vpop.f32.mrb[0].mxu0
        %v5757 = vadd.f32 %v5197, %v5756
        %v5758 = vpop.f32.mrb[0].mxu0
        %v5759 = vadd.f32 %v5193, %v5758
        %v5760 = vpop.f32.mrb[0].mxu0
        %v5761 = vadd.f32 %v5197, %v5760
        %5762 = vmatprep.mubr.bf16.mxu0 %v5094
        %5763 = vmatmul.mubr.bf16.gmra.mrb[0].mxu0 %v5093
        %v5764 = vpop.f32.mrb[0].mxu0
        %v5765 = vadd.f32 %v5193, %v5764
        %v5766 = vpop.f32.mrb[0].mxu0
        %v5767 = vadd.f32 %v5197, %v5766
        %v5768 = vpop.f32.mrb[0].mxu0
        %v5769 = vadd.f32 %v5193, %v5768
        %v5770 = vpop.f32.mrb[0].mxu0
        %v5771 = vadd.f32 %v5197, %v5770
        %5772 = vmatprep.mubr.bf16.mxu0 %v5099
        %5773 = vmatmul.mubr.bf16.gmra.mrb[0].mxu0 %v5098
        %v5774 = vpop.f32.mrb[0].mxu0
        %v5775 = vadd.f32 %v5193, %v5774
        %v5776 = vpop.f32.mrb[0].mxu0
        %v5777 = vadd.f32 %v5197, %v5776
        %v5778 = vpop.f32.mrb[0].mxu0
        %v5779 = vadd.f32 %v5193, %v5778
        %v5780 = vpop.f32.mrb[0].mxu0
        %v5781 = vadd.f32 %v5197, %v5780
        %5782 = vmatprep.mubr.bf16.mxu0 %v5104
        %5783 = vmatmul.mubr.bf16.gmra.mrb[0].mxu0 %v5103
        %v5784 = vpop.f32.mrb[0].mxu0
        %v5785 = vadd.f32 %v5193, %v5784
        %v5786 = vpop.f32.mrb[0].mxu0
        %v5787 = vadd.f32 %v5197, %v5786
        %v5788 = vpop.f32.mrb[0].mxu0
        %v5789 = vadd.f32 %v5193, %v5788
        %v5790 = vpop.f32.mrb[0].mxu0
        %v5791 = vadd.f32 %v5197, %v5790
        %5792 = vdwg.mxu0
        %5793 = vmatprep.subr.bf16.mxu0 %v5473
        %5794 = vmatpush1.bf16.msra.mxu0 %v5472
        %5795 = vmatprep.subr.bf16.mxu0 %v5475
        %5796 = vmatpush1.bf16.msra.mxu0 %v5474
        %5797 = vmatprep.subr.bf16.mxu0 %v5477
        %5798 = vmatpush1.bf16.msra.mxu0 %v5476
        %5799 = vmatprep.subr.bf16.mxu0 %v5479
        %5800 = vmatpush1.bf16.msra.mxu0 %v5478
        %5801 = vmatprep.subr.bf16.mxu0 %v5481
        %5802 = vmatpush1.bf16.msra.mxu0 %v5480
        %5803 = vmatprep.subr.bf16.mxu0 %v5483
        %5804 = vmatpush1.bf16.msra.mxu0 %v5482
        %5805 = vmatprep.subr.bf16.mxu0 %v5485
        %5806 = vmatpush1.bf16.msra.mxu0 %v5484
        %5807 = vmatprep.subr.bf16.mxu0 %v5487
        %5808 = vmatpush1.bf16.msra.mxu0 %v5486
        %5809 = vmatprep.subr.bf16.mxu0 %v5489
        %5810 = vmatpush1.bf16.msra.mxu0 %v5488
        %5811 = vmatprep.subr.bf16.mxu0 %v5491
        %5812 = vmatpush1.bf16.msra.mxu0 %v5490
        %5813 = vmatprep.subr.bf16.mxu0 %v5493
        %5814 = vmatpush1.bf16.msra.mxu0 %v5492
        %5815 = vmatprep.subr.bf16.mxu0 %v5495
        %5816 = vmatpush1.bf16.msra.mxu0 %v5494
        %5817 = vmatprep.subr.bf16.mxu0 %v5497
        %5818 = vmatpush1.bf16.msra.mxu0 %v5496
        %5819 = vmatprep.subr.bf16.mxu0 %v5499
        %5820 = vmatpush1.bf16.msra.mxu0 %v5498
        %5821 = vmatprep.subr.bf16.mxu0 %v5501
        %5822 = vmatpush1.bf16.msra.mxu0 %v5500
        %5823 = vmatprep.subr.bf16.mxu0 %v5503
        %5824 = vmatpush1.bf16.msra.mxu0 %v5502
        %5825 = vmatprep.mubr.bf16.mxu0 %v5031
        %5826 = vmatmul.mubr.bf16.gmra.mrb[0].mxu0 %v5030
        %v5827 = vpop.f32.mrb[0].mxu0
        %v5828 = vadd.f32 %v5635, %v5827
        %v5829 = vpop.f32.mrb[0].mxu0
        %v5830 = vadd.f32 %v5637, %v5829
        %v5831 = vpop.f32.mrb[0].mxu0
        %v5832 = vadd.f32 %v5639, %v5831
        %v5833 = vpop.f32.mrb[0].mxu0
        %v5834 = vadd.f32 %v5641, %v5833
        %5835 = vmatprep.mubr.bf16.mxu0 %v5036
        %5836 = vmatmul.mubr.bf16.gmra.mrb[0].mxu0 %v5035
        %v5837 = vpop.f32.mrb[0].mxu0
        %v5838 = vadd.f32 %v5645, %v5837
        %v5839 = vpop.f32.mrb[0].mxu0
        %v5840 = vadd.f32 %v5647, %v5839
        %v5841 = vpop.f32.mrb[0].mxu0
        %v5842 = vadd.f32 %v5649, %v5841
        %v5843 = vpop.f32.mrb[0].mxu0
        %v5844 = vadd.f32 %v5651, %v5843
        %5845 = vmatprep.mubr.bf16.mxu0 %v5041
        %5846 = vmatmul.mubr.bf16.gmra.mrb[0].mxu0 %v5040
        %v5847 = vpop.f32.mrb[0].mxu0
        %v5848 = vadd.f32 %v5655, %v5847
        %v5849 = vpop.f32.mrb[0].mxu0
        %v5850 = vadd.f32 %v5657, %v5849
        %v5851 = vpop.f32.mrb[0].mxu0
        %v5852 = vadd.f32 %v5659, %v5851
        %v5853 = vpop.f32.mrb[0].mxu0
        %v5854 = vadd.f32 %v5661, %v5853
        %5855 = vmatprep.mubr.bf16.mxu0 %v5046
        %5856 = vmatmul.mubr.bf16.gmra.mrb[0].mxu0 %v5045
        %v5857 = vpop.f32.mrb[0].mxu0
        %v5858 = vadd.f32 %v5665, %v5857
        %v5859 = vpop.f32.mrb[0].mxu0
        %v5860 = vadd.f32 %v5667, %v5859
        %v5861 = vpop.f32.mrb[0].mxu0
        %v5862 = vadd.f32 %v5669, %v5861
        %v5863 = vpop.f32.mrb[0].mxu0
        %v5864 = vadd.f32 %v5671, %v5863
        %5865 = vmatprep.mubr.bf16.mxu0 %v5051
        %5866 = vmatmul.mubr.bf16.gmra.mrb[0].mxu0 %v5050
        %v5867 = vpop.f32.mrb[0].mxu0
        %v5868 = vadd.f32 %v5675, %v5867
        %v5869 = vpop.f32.mrb[0].mxu0
        %v5870 = vadd.f32 %v5677, %v5869
        %v5871 = vpop.f32.mrb[0].mxu0
        %v5872 = vadd.f32 %v5679, %v5871
        %v5873 = vpop.f32.mrb[0].mxu0
        %v5874 = vadd.f32 %v5681, %v5873
        %5875 = vmatprep.mubr.bf16.mxu0 %v5056
        %5876 = vmatmul.mubr.bf16.gmra.mrb[0].mxu0 %v5055
        %v5877 = vpop.f32.mrb[0].mxu0
        %v5878 = vadd.f32 %v5685, %v5877
        %v5879 = vpop.f32.mrb[0].mxu0
        %v5880 = vadd.f32 %v5687, %v5879
        %v5881 = vpop.f32.mrb[0].mxu0
        %v5882 = vadd.f32 %v5689, %v5881
        %v5883 = vpop.f32.mrb[0].mxu0
        %v5884 = vadd.f32 %v5691, %v5883
        %5885 = vmatprep.mubr.bf16.mxu0 %v5061
        %5886 = vmatmul.mubr.bf16.gmra.mrb[0].mxu0 %v5060
        %v5887 = vpop.f32.mrb[0].mxu0
        %v5888 = vadd.f32 %v5695, %v5887
        %v5889 = vpop.f32.mrb[0].mxu0
        %v5890 = vadd.f32 %v5697, %v5889
        %v5891 = vpop.f32.mrb[0].mxu0
        %v5892 = vadd.f32 %v5699, %v5891
        %v5893 = vpop.f32.mrb[0].mxu0
        %v5894 = vadd.f32 %v5701, %v5893
        %5895 = vmatprep.mubr.bf16.mxu0 %v5066
        %5896 = vmatmul.mubr.bf16.gmra.mrb[0].mxu0 %v5065
        %v5897 = vpop.f32.mrb[0].mxu0
        %v5898 = vadd.f32 %v5705, %v5897
        %v5899 = vpop.f32.mrb[0].mxu0
        %v5900 = vadd.f32 %v5707, %v5899
        %v5901 = vpop.f32.mrb[0].mxu0
        %v5902 = vadd.f32 %v5709, %v5901
        %v5903 = vpop.f32.mrb[0].mxu0
        %v5904 = vadd.f32 %v5711, %v5903
        %5905 = vmatprep.mubr.bf16.mxu0 %v5071
        %5906 = vmatmul.mubr.bf16.gmra.mrb[0].mxu0 %v5070
        %v5907 = vpop.f32.mrb[0].mxu0
        %v5908 = vadd.f32 %v5715, %v5907
        %v5909 = vpop.f32.mrb[0].mxu0
        %v5910 = vadd.f32 %v5717, %v5909
        %v5911 = vpop.f32.mrb[0].mxu0
        %v5912 = vadd.f32 %v5719, %v5911
        %v5913 = vpop.f32.mrb[0].mxu0
        %v5914 = vadd.f32 %v5721, %v5913
        %5915 = vmatprep.mubr.bf16.mxu0 %v5076
        %5916 = vmatmul.mubr.bf16.gmra.mrb[0].mxu0 %v5075
        %v5917 = vpop.f32.mrb[0].mxu0
        %v5918 = vadd.f32 %v5725, %v5917
        %v5919 = vpop.f32.mrb[0].mxu0
        %v5920 = vadd.f32 %v5727, %v5919
        %v5921 = vpop.f32.mrb[0].mxu0
        %v5922 = vadd.f32 %v5729, %v5921
        %v5923 = vpop.f32.mrb[0].mxu0
        %v5924 = vadd.f32 %v5731, %v5923
        %5925 = vmatprep.mubr.bf16.mxu0 %v5081
        %5926 = vmatmul.mubr.bf16.gmra.mrb[0].mxu0 %v5080
        %v5927 = vpop.f32.mrb[0].mxu0
        %v5928 = vadd.f32 %v5735, %v5927
        %v5929 = vpop.f32.mrb[0].mxu0
        %v5930 = vadd.f32 %v5737, %v5929
        %v5931 = vpop.f32.mrb[0].mxu0
        %v5932 = vadd.f32 %v5739, %v5931
        %v5933 = vpop.f32.mrb[0].mxu0
        %v5934 = vadd.f32 %v5741, %v5933
        %5935 = vmatprep.mubr.bf16.mxu0 %v5086
        %5936 = vmatmul.mubr.bf16.gmra.mrb[0].mxu0 %v5085
        %v5937 = vpop.f32.mrb[0].mxu0
        %v5938 = vadd.f32 %v5745, %v5937
        %v5939 = vpop.f32.mrb[0].mxu0
        %v5940 = vadd.f32 %v5747, %v5939
        %v5941 = vpop.f32.mrb[0].mxu0
        %v5942 = vadd.f32 %v5749, %v5941
        %v5943 = vpop.f32.mrb[0].mxu0
        %v5944 = vadd.f32 %v5751, %v5943
        %5945 = vmatprep.mubr.bf16.mxu0 %v5091
        %5946 = vmatmul.mubr.bf16.gmra.mrb[0].mxu0 %v5090
        %v5947 = vpop.f32.mrb[0].mxu0
        %v5948 = vadd.f32 %v5755, %v5947
        %v5949 = vpop.f32.mrb[0].mxu0
        %v5950 = vadd.f32 %v5757, %v5949
        %v5951 = vpop.f32.mrb[0].mxu0
        %v5952 = vadd.f32 %v5759, %v5951
        %v5953 = vpop.f32.mrb[0].mxu0
        %v5954 = vadd.f32 %v5761, %v5953
        %5955 = vmatprep.mubr.bf16.mxu0 %v5096
        %5956 = vmatmul.mubr.bf16.gmra.mrb[0].mxu0 %v5095
        %v5957 = vpop.f32.mrb[0].mxu0
        %v5958 = vadd.f32 %v5765, %v5957
        %v5959 = vpop.f32.mrb[0].mxu0
        %v5960 = vadd.f32 %v5767, %v5959
        %v5961 = vpop.f32.mrb[0].mxu0
        %v5962 = vadd.f32 %v5769, %v5961
        %v5963 = vpop.f32.mrb[0].mxu0
        %v5964 = vadd.f32 %v5771, %v5963
        %5965 = vmatprep.mubr.bf16.mxu0 %v5101
        %5966 = vmatmul.mubr.bf16.gmra.mrb[0].mxu0 %v5100
        %v5967 = vpop.f32.mrb[0].mxu0
        %v5968 = vadd.f32 %v5775, %v5967
        %v5969 = vpop.f32.mrb[0].mxu0
        %v5970 = vadd.f32 %v5777, %v5969
        %v5971 = vpop.f32.mrb[0].mxu0
        %v5972 = vadd.f32 %v5779, %v5971
        %v5973 = vpop.f32.mrb[0].mxu0
        %v5974 = vadd.f32 %v5781, %v5973
        %5975 = vmatprep.mubr.bf16.mxu0 %v5106
        %5976 = vmatmul.mubr.bf16.gmra.mrb[0].mxu0 %v5105
        %v5977 = vpop.f32.mrb[0].mxu0
        %v5978 = vadd.f32 %v5785, %v5977
        %v5979 = vpop.f32.mrb[0].mxu0
        %v5980 = vadd.f32 %v5787, %v5979
        %v5981 = vpop.f32.mrb[0].mxu0
        %v5982 = vadd.f32 %v5789, %v5981
        %v5983 = vpop.f32.mrb[0].mxu0
        %v5984 = vadd.f32 %v5791, %v5983
        %5985 = vdwg.mxu0
        %5986 = vmatprep.subr.bf16.mxu0 %v5505
        %5987 = vmatpush1.bf16.msra.mxu0 %v5504
        %5988 = vmatprep.subr.bf16.mxu0 %v5507
        %5989 = vmatpush1.bf16.msra.mxu0 %v5506
        %5990 = vmatprep.subr.bf16.mxu0 %v5509
        %5991 = vmatpush1.bf16.msra.mxu0 %v5508
        %5992 = vmatprep.subr.bf16.mxu0 %v5511
        %5993 = vmatpush1.bf16.msra.mxu0 %v5510
        %5994 = vmatprep.subr.bf16.mxu0 %v5513
        %5995 = vmatpush1.bf16.msra.mxu0 %v5512
        %5996 = vmatprep.subr.bf16.mxu0 %v5515
        %5997 = vmatpush1.bf16.msra.mxu0 %v5514
        %5998 = vmatprep.subr.bf16.mxu0 %v5517
        %5999 = vmatpush1.bf16.msra.mxu0 %v5516
        %6000 = vmatprep.subr.bf16.mxu0 %v5519
        %6001 = vmatpush1.bf16.msra.mxu0 %v5518
        %6002 = vmatprep.subr.bf16.mxu0 0
        %6003 = vmatpush1.bf16.msra.mxu0 0
        %6004 = vmatprep.subr.bf16.mxu0 0
        %6005 = vmatpush1.bf16.msra.mxu0 0
        %6006 = vmatprep.subr.bf16.mxu0 0
        %6007 = vmatpush1.bf16.msra.mxu0 0
        %6008 = vmatprep.subr.bf16.mxu0 0
        %6009 = vmatpush1.bf16.msra.mxu0 0
        %6010 = vmatprep.subr.bf16.mxu0 0
        %6011 = vmatpush1.bf16.msra.mxu0 0
        %6012 = vmatprep.subr.bf16.mxu0 0
        %6013 = vmatpush1.bf16.msra.mxu0 0
        %6014 = vmatprep.subr.bf16.mxu0 0
        %6015 = vmatpush1.bf16.msra.mxu0 0
        %6016 = vmatprep.subr.bf16.mxu0 0
        %6017 = vmatpush1.bf16.msra.mxu0 0
        %6018 = vmatprep.mubr.bf16.mxu0 0
        %6019 = vmatmul.mubr.bf16.gmra.mrb[0].mxu0 %v5032
        %v6020 = vpop.f32.mrb[0].mxu0
        %v6021 = vadd.f32 %v5828, %v6020
        %v6022 = vpop.f32.mrb[0].mxu0
        %v6023 = vadd.f32 %v5830, %v6022
        %v6024 = vpop.f32.mrb[0].mxu0
        %v6025 = vadd.f32 %v5832, %v6024
        %v6026 = vpop.f32.mrb[0].mxu0
        %v6027 = vadd.f32 %v5834, %v6026
        %6028 = vmatprep.mubr.bf16.mxu0 0
        %6029 = vmatmul.mubr.bf16.gmra.mrb[0].mxu0 %v5037
        %v6030 = vpop.f32.mrb[0].mxu0
        %v6031 = vadd.f32 %v5838, %v6030
        %v6032 = vpop.f32.mrb[0].mxu0
        %v6033 = vadd.f32 %v5840, %v6032
        %v6034 = vpop.f32.mrb[0].mxu0
        %v6035 = vadd.f32 %v5842, %v6034
        %v6036 = vpop.f32.mrb[0].mxu0
        %v6037 = vadd.f32 %v5844, %v6036
        %6038 = vmatprep.mubr.bf16.mxu0 0
        %6039 = vmatmul.mubr.bf16.gmra.mrb[0].mxu0 %v5042
        %v6040 = vpop.f32.mrb[0].mxu0
        %v6041 = vadd.f32 %v5848, %v6040
        %v6042 = vpop.f32.mrb[0].mxu0
        %v6043 = vadd.f32 %v5850, %v6042
        %v6044 = vpop.f32.mrb[0].mxu0
        %v6045 = vadd.f32 %v5852, %v6044
        %v6046 = vpop.f32.mrb[0].mxu0
        %v6047 = vadd.f32 %v5854, %v6046
        %6048 = vmatprep.mubr.bf16.mxu0 0
        %6049 = vmatmul.mubr.bf16.gmra.mrb[0].mxu0 %v5047
        %v6050 = vpop.f32.mrb[0].mxu0
        %v6051 = vadd.f32 %v5858, %v6050
        %v6052 = vpop.f32.mrb[0].mxu0
        %v6053 = vadd.f32 %v5860, %v6052
        %v6054 = vpop.f32.mrb[0].mxu0
        %v6055 = vadd.f32 %v5862, %v6054
        %v6056 = vpop.f32.mrb[0].mxu0
        %v6057 = vadd.f32 %v5864, %v6056
        %6058 = vmatprep.mubr.bf16.mxu0 0
        %6059 = vmatmul.mubr.bf16.gmra.mrb[0].mxu0 %v5052
        %v6060 = vpop.f32.mrb[0].mxu0
        %v6061 = vadd.f32 %v5868, %v6060
        %v6062 = vpop.f32.mrb[0].mxu0
        %v6063 = vadd.f32 %v5870, %v6062
        %v6064 = vpop.f32.mrb[0].mxu0
        %v6065 = vadd.f32 %v5872, %v6064
        %v6066 = vpop.f32.mrb[0].mxu0
        %v6067 = vadd.f32 %v5874, %v6066
        %6068 = vmatprep.mubr.bf16.mxu0 0
        %6069 = vmatmul.mubr.bf16.gmra.mrb[0].mxu0 %v5057
        %v6070 = vpop.f32.mrb[0].mxu0
        %v6071 = vadd.f32 %v5878, %v6070
        %v6072 = vpop.f32.mrb[0].mxu0
        %v6073 = vadd.f32 %v5880, %v6072
        %v6074 = vpop.f32.mrb[0].mxu0
        %v6075 = vadd.f32 %v5882, %v6074
        %v6076 = vpop.f32.mrb[0].mxu0
        %v6077 = vadd.f32 %v5884, %v6076
        %6078 = vmatprep.mubr.bf16.mxu0 0
        %6079 = vmatmul.mubr.bf16.gmra.mrb[0].mxu0 %v5062
        %v6080 = vpop.f32.mrb[0].mxu0
        %v6081 = vadd.f32 %v5888, %v6080
        %v6082 = vpop.f32.mrb[0].mxu0
        %v6083 = vadd.f32 %v5890, %v6082
        %v6084 = vpop.f32.mrb[0].mxu0
        %v6085 = vadd.f32 %v5892, %v6084
        %v6086 = vpop.f32.mrb[0].mxu0
        %v6087 = vadd.f32 %v5894, %v6086
        %6088 = vmatprep.mubr.bf16.mxu0 0
        %6089 = vmatmul.mubr.bf16.gmra.mrb[0].mxu0 %v5067
        %v6090 = vpop.f32.mrb[0].mxu0
        %v6091 = vadd.f32 %v5898, %v6090
        %v6092 = vpop.f32.mrb[0].mxu0
        %v6093 = vadd.f32 %v5900, %v6092
        %v6094 = vpop.f32.mrb[0].mxu0
        %v6095 = vadd.f32 %v5902, %v6094
        %v6096 = vpop.f32.mrb[0].mxu0
        %v6097 = vadd.f32 %v5904, %v6096
        %6098 = vmatprep.mubr.bf16.mxu0 0
        %6099 = vmatmul.mubr.bf16.gmra.mrb[0].mxu0 %v5072
        %v6100 = vpop.f32.mrb[0].mxu0
        %v6101 = vadd.f32 %v5908, %v6100
        %v6102 = vpop.f32.mrb[0].mxu0
        %v6103 = vadd.f32 %v5910, %v6102
        %v6104 = vpop.f32.mrb[0].mxu0
        %v6105 = vadd.f32 %v5912, %v6104
        %v6106 = vpop.f32.mrb[0].mxu0
        %v6107 = vadd.f32 %v5914, %v6106
        %6108 = vmatprep.mubr.bf16.mxu0 0
        %6109 = vmatmul.mubr.bf16.gmra.mrb[0].mxu0 %v5077
        %v6110 = vpop.f32.mrb[0].mxu0
        %v6111 = vadd.f32 %v5918, %v6110
        %v6112 = vpop.f32.mrb[0].mxu0
        %v6113 = vadd.f32 %v5920, %v6112
        %v6114 = vpop.f32.mrb[0].mxu0
        %v6115 = vadd.f32 %v5922, %v6114
        %v6116 = vpop.f32.mrb[0].mxu0
        %v6117 = vadd.f32 %v5924, %v6116
        %6118 = vmatprep.mubr.bf16.mxu0 0
        %6119 = vmatmul.mubr.bf16.gmra.mrb[0].mxu0 %v5082
        %v6120 = vpop.f32.mrb[0].mxu0
        %v6121 = vadd.f32 %v5928, %v6120
        %v6122 = vpop.f32.mrb[0].mxu0
        %v6123 = vadd.f32 %v5930, %v6122
        %v6124 = vpop.f32.mrb[0].mxu0
        %v6125 = vadd.f32 %v5932, %v6124
        %v6126 = vpop.f32.mrb[0].mxu0
        %v6127 = vadd.f32 %v5934, %v6126
        %6128 = vmatprep.mubr.bf16.mxu0 0
        %6129 = vmatmul.mubr.bf16.gmra.mrb[0].mxu0 %v5087
        %v6130 = vpop.f32.mrb[0].mxu0
        %v6131 = vadd.f32 %v5938, %v6130
        %v6132 = vpop.f32.mrb[0].mxu0
        %v6133 = vadd.f32 %v5940, %v6132
        %v6134 = vpop.f32.mrb[0].mxu0
        %v6135 = vadd.f32 %v5942, %v6134
        %v6136 = vpop.f32.mrb[0].mxu0
        %v6137 = vadd.f32 %v5944, %v6136
        %6138 = vmatprep.mubr.bf16.mxu0 0
        %6139 = vmatmul.mubr.bf16.gmra.mrb[0].mxu0 %v5092
        %v6140 = vpop.f32.mrb[0].mxu0
        %v6141 = vadd.f32 %v5948, %v6140
        %v6142 = vpop.f32.mrb[0].mxu0
        %v6143 = vadd.f32 %v5950, %v6142
        %v6144 = vpop.f32.mrb[0].mxu0
        %v6145 = vadd.f32 %v5952, %v6144
        %v6146 = vpop.f32.mrb[0].mxu0
        %v6147 = vadd.f32 %v5954, %v6146
        %6148 = vmatprep.mubr.bf16.mxu0 0
        %6149 = vmatmul.mubr.bf16.gmra.mrb[0].mxu0 %v5097
        %v6150 = vpop.f32.mrb[0].mxu0
        %v6151 = vadd.f32 %v5958, %v6150
        %v6152 = vpop.f32.mrb[0].mxu0
        %v6153 = vadd.f32 %v5960, %v6152
        %v6154 = vpop.f32.mrb[0].mxu0
        %v6155 = vadd.f32 %v5962, %v6154
        %v6156 = vpop.f32.mrb[0].mxu0
        %v6157 = vadd.f32 %v5964, %v6156
        %6158 = vmatprep.mubr.bf16.mxu0 0
        %6159 = vmatmul.mubr.bf16.gmra.mrb[0].mxu0 %v5102
        %v6160 = vpop.f32.mrb[0].mxu0
        %v6161 = vadd.f32 %v5968, %v6160
        %v6162 = vpop.f32.mrb[0].mxu0
        %v6163 = vadd.f32 %v5970, %v6162
        %v6164 = vpop.f32.mrb[0].mxu0
        %v6165 = vadd.f32 %v5972, %v6164
        %v6166 = vpop.f32.mrb[0].mxu0
        %v6167 = vadd.f32 %v5974, %v6166
        %6168 = vmatprep.mubr.bf16.mxu0 0
        %6169 = vmatmul.mubr.bf16.gmra.mrb[0].mxu0 %v5107
        %v6170 = vpop.f32.mrb[0].mxu0
        %v6171 = vadd.f32 %v5978, %v6170
        %v6172 = vpop.f32.mrb[0].mxu0
        %v6173 = vadd.f32 %v5980, %v6172
        %v6174 = vpop.f32.mrb[0].mxu0
        %v6175 = vadd.f32 %v5982, %v6174
        %v6176 = vpop.f32.mrb[0].mxu0
        %v6177 = vadd.f32 %v5984, %v6176
        %6178 = vdwg.mxu0
        %v6179 = vmax.f32 %v6021, 0.0
        %v6180 = vmax.f32 %v6023, 0.0
        %v6181 = vmax.f32 %v6025, 0.0
        %v6182 = vmax.f32 %v6027, 0.0
        %v6183 = vmax.f32 %v6031, 0.0
        %v6184 = vmax.f32 %v6033, 0.0
        %v6185 = vmax.f32 %v6035, 0.0
        %v6186 = vmax.f32 %v6037, 0.0
        %v6187 = vmax.f32 %v6041, 0.0
        %v6188 = vmax.f32 %v6043, 0.0
        %v6189 = vmax.f32 %v6045, 0.0
        %v6190 = vmax.f32 %v6047, 0.0
        %v6191 = vmax.f32 %v6051, 0.0
        %v6192 = vmax.f32 %v6053, 0.0
        %v6193 = vmax.f32 %v6055, 0.0
        %v6194 = vmax.f32 %v6057, 0.0
        %v6195 = vmax.f32 %v6061, 0.0
        %v6196 = vmax.f32 %v6063, 0.0
        %v6197 = vmax.f32 %v6065, 0.0
        %v6198 = vmax.f32 %v6067, 0.0
        %v6199 = vmax.f32 %v6071, 0.0
        %v6200 = vmax.f32 %v6073, 0.0
        %v6201 = vmax.f32 %v6075, 0.0
        %v6202 = vmax.f32 %v6077, 0.0
        %v6203 = vmax.f32 %v6081, 0.0
        %v6204 = vmax.f32 %v6083, 0.0
        %v6205 = vmax.f32 %v6085, 0.0
        %v6206 = vmax.f32 %v6087, 0.0
        %v6207 = vmax.f32 %v6091, 0.0
        %v6208 = vmax.f32 %v6093, 0.0
        %v6209 = vmax.f32 %v6095, 0.0
        %v6210 = vmax.f32 %v6097, 0.0
        %v6211 = vmax.f32 %v6101, 0.0
        %v6212 = vmax.f32 %v6103, 0.0
        %v6213 = vmax.f32 %v6105, 0.0
        %v6214 = vmax.f32 %v6107, 0.0
        %v6215 = vmax.f32 %v6111, 0.0
        %v6216 = vmax.f32 %v6113, 0.0
        %v6217 = vmax.f32 %v6115, 0.0
        %v6218 = vmax.f32 %v6117, 0.0
        %v6219 = vmax.f32 %v6121, 0.0
        %v6220 = vmax.f32 %v6123, 0.0
        %v6221 = vmax.f32 %v6125, 0.0
        %v6222 = vmax.f32 %v6127, 0.0
        %v6223 = vmax.f32 %v6131, 0.0
        %v6224 = vmax.f32 %v6133, 0.0
        %v6225 = vmax.f32 %v6135, 0.0
        %v6226 = vmax.f32 %v6137, 0.0
        %v6227 = vmax.f32 %v6141, 0.0
        %v6228 = vmax.f32 %v6143, 0.0
        %v6229 = vmax.f32 %v6145, 0.0
        %v6230 = vmax.f32 %v6147, 0.0
        %v6231 = vmax.f32 %v6151, 0.0
        %v6232 = vmax.f32 %v6153, 0.0
        %v6233 = vmax.f32 %v6155, 0.0
        %v6234 = vmax.f32 %v6157, 0.0
        %v6235 = vmax.f32 %v6161, 0.0
        %v6236 = vmax.f32 %v6163, 0.0
        %v6237 = vmax.f32 %v6165, 0.0
        %v6238 = vmax.f32 %v6167, 0.0
        %v6239 = vmax.f32 %v6171, 0.0
        %v6240 = vmax.f32 %v6173, 0.0
        %v6241 = vmax.f32 %v6175, 0.0
        %v6242 = vmax.f32 %v6177, 0.0
        %v6243 = vmax.f32 %v6179, %v6183
        %v6244 = vmax.f32 %v6181, %v6185
        %v6245 = vmax.f32 %v6243, %v6187
        %v6246 = vmax.f32 %v6244, %v6189
        %v6247 = vmax.f32 %v6245, %v6191
        %v6248 = vmax.f32 %v6246, %v6193
        %v6249 = vmax.f32 %v6247, %v6195
        %v6250 = vmax.f32 %v6248, %v6197
        %v6251 = vmax.f32 %v6249, %v6199
        %v6252 = vmax.f32 %v6250, %v6201
        %v6253 = vmax.f32 %v6251, %v6203
        %v6254 = vmax.f32 %v6252, %v6205
        %v6255 = vmax.f32 %v6253, %v6207
        %v6256 = vmax.f32 %v6254, %v6209
        %v6257 = vmax.f32 %v6255, %v6211
        %v6258 = vmax.f32 %v6256, %v6213
        %v6259 = vmax.f32 %v6257, %v6215
        %v6260 = vmax.f32 %v6258, %v6217
        %v6261 = vmax.f32 %v6259, %v6219
        %v6262 = vmax.f32 %v6260, %v6221
        %v6263 = vmax.f32 %v6261, %v6223
        %v6264 = vmax.f32 %v6262, %v6225
        %v6265 = vmax.f32 %v6263, %v6227
        %v6266 = vmax.f32 %v6264, %v6229
        %v6267 = vmax.f32 %v6265, %v6231
        %v6268 = vmax.f32 %v6266, %v6233
        %v6269 = vmax.f32 %v6267, %v6235
        %v6270 = vmax.f32 %v6268, %v6237
        %v6271 = vmax.f32 %v6269, %v6239
        %v6272 = vmax.f32 %v6270, %v6241
        %v6273 = vmax.f32 %v6271, %v6272
        %v6274 = vrot.slane %v6273, 4
        %v6275 = vmax.f32 %v6273, %v6274
        %v6276 = vrot.slane %v6275, 2
        %v6277 = vmax.f32 %v6275, %v6276
        %v6278 = vrot.slane %v6277, 1
        %v6279 = vmax.f32 %v6277, %v6278
        %v6280 = vmax.f32 %v6180, %v6184
        %v6281 = vmax.f32 %v6182, %v6186
        %v6282 = vmax.f32 %v6280, %v6188
        %v6283 = vmax.f32 %v6281, %v6190
        %v6284 = vmax.f32 %v6282, %v6192
        %v6285 = vmax.f32 %v6283, %v6194
        %v6286 = vmax.f32 %v6284, %v6196
        %v6287 = vmax.f32 %v6285, %v6198
        %v6288 = vmax.f32 %v6286, %v6200
        %v6289 = vmax.f32 %v6287, %v6202
        %v6290 = vmax.f32 %v6288, %v6204
        %v6291 = vmax.f32 %v6289, %v6206
        %v6292 = vmax.f32 %v6290, %v6208
        %v6293 = vmax.f32 %v6291, %v6210
        %v6294 = vmax.f32 %v6292, %v6212
        %v6295 = vmax.f32 %v6293, %v6214
        %v6296 = vmax.f32 %v6294, %v6216
        %v6297 = vmax.f32 %v6295, %v6218
        %v6298 = vmax.f32 %v6296, %v6220
        %v6299 = vmax.f32 %v6297, %v6222
        %v6300 = vmax.f32 %v6298, %v6224
        %v6301 = vmax.f32 %v6299, %v6226
        %v6302 = vmax.f32 %v6300, %v6228
        %v6303 = vmax.f32 %v6301, %v6230
        %v6304 = vmax.f32 %v6302, %v6232
        %v6305 = vmax.f32 %v6303, %v6234
        %v6306 = vmax.f32 %v6304, %v6236
        %v6307 = vmax.f32 %v6305, %v6238
        %v6308 = vmax.f32 %v6306, %v6240
        %v6309 = vmax.f32 %v6307, %v6242
        %v6310 = vmax.f32 %v6308, %v6309
        %v6311 = vrot.slane %v6310, 4
        %v6312 = vmax.f32 %v6310, %v6311
        %v6313 = vrot.slane %v6312, 2
        %v6314 = vmax.f32 %v6312, %v6313
        %v6315 = vrot.slane %v6314, 1
        %v6316 = vmax.f32 %v6314, %v6315
        %v6319 = vcombine.low %v6279, %v6316
        %v6321 = vunpack.c.l.s4 1966171168
        %v6322 = vunpack.c.0.s8 %v6321
        %v6323 = vlaneseq
        %v6324 = vshrl.u32 %v6323, 7
        %v6325 = vsub.s32 %v6322, %v6324
        %v6326 = vrot.slane %v6319, %v6325
        %v6328 = vunpack.c.l.s4 1966171168
        %v6329 = vunpack.c.0.s8 %v6328
        %v6330 = vlaneseq
        %v6331 = vshrl.u32 %v6330, 7
        %v6332 = vsub.s32 %v6329, %v6331
        %v6333 = vrot.slane %v6326, %v6332
        %v6335 = vlaneseq
        %vm6336 = vcmp.ge.s32.totalorder %v6335, 0
        %vm6337 = vcmp.lt.s32.totalorder %v6335, 256
        %vm6338 = vmand %vm6336, %vm6337
        %6339 = vst.msk [vmem:[%s382] sm:$0x3] %vm6338, %v6333
        %s6340 = sand.u32 %s249, 1
        %s6341 = scalar_lea.sflag [#allocation7], %s6340
        %s6342 = sand.u32 %s249, 1
        %s6343 = smul.addr %s6342, 2
        %s6344 = scalar_lea.vmem [#allocation10], %s6343
        // Predicated region
        $region69: #{tpu_custom_call.1} parent=59 // pred_check
          %p6345 = pneg %p259
        $region70: #{tpu_custom_call.1} parent=59 // pred_check_branch
          %6347 = sbr.rel (%p6345) target = $region72
        $region71: #{tpu_custom_call.1} parent=59 // pred_region
          %s6349 = ssub.s32 32, 32
          %6350 = vsyncadd %s6341, %s6349
          %s6351 = smul.addr %s26, 2
          %s6352 = smul.addr %s6351, 16
          %s6353 = scalar_lea.hbm %s10, %s6352
          %s6355 = sshll.u32 %s6344, 4
          %s6356 = int_to_ptr.vmem [resolvable:$true] %s6355
          %6358 = dma.vmem_to_hbm [thread:$0]  %s6356, 32, %s6353, %s6341
        $region72: #{tpu_custom_call.1} parent=59 // pred_fallthru
          _
      $region60: #{tpu_custom_call.1} parent=5 // pred_fallthru
        _
      %p6359 = scmp.le.s32.totalorder 2, %s21
      // Predicated region
      $region73: #{tpu_custom_call.1} parent=5 // pred_check
        %p6360 = pneg %p6359
      $region74: #{tpu_custom_call.1} parent=5 // pred_check_branch
        %6362 = sbr.rel (%p6360) target = $region76
      $region75: #{tpu_custom_call.1} parent=5 // pred_region
        %s6363 = ssub.s32 %s21, 2
        // Predicated region
        $region77: #{tpu_custom_call.1} parent=75 // pred_check
          %p6364 = pneg %p265
        $region78: #{tpu_custom_call.1} parent=75 // pred_check_branch
          %6366 = sbr.rel (%p6364) target = $region80
        $region79: #{tpu_custom_call.1} parent=75 // pred_region
          %s6367 = sand.u32 %s250, 1
          %s6368 = scalar_lea.sflag [#allocation7], %s6367
          %s6369 = sand.u32 %s250, 1
          %s6370 = smul.addr %s6369, 2
          %s6371 = scalar_lea.vmem [#allocation10], %s6370
          %6372 = dma.done %s6368, 32
        $region80: #{tpu_custom_call.1} parent=75 // pred_fallthru
          _
      $region76: #{tpu_custom_call.1} parent=5 // pred_fallthru
        _
    $region6: #{tpu_custom_call.1} parent=1 // loop_footer
      %s25 = sadd.s32 1, %s21
    $region7: #{tpu_custom_call.1} parent=1 // loop_footer_branch
      %20 = sbr.rel target = $region3
    $region8: #{tpu_custom_call.1} parent=1 // loop_exit
      _
    %6373 = vsyncpa [#allocation6], 1
    %s6374 = scalar_lea.sflag [#allocation6], 1
    %6375 = vsyncpa %s6374, 1
    %6376 = vsyncpa [#allocation9], 1
    %6377 = vsyncpa [#allocation7], 1
    %s6378 = scalar_lea.sflag [#allocation7], 1
    %6379 = vsyncpa %s6378, 1

</llo_original>
